<compile_context>
chip_gen: v7x
topology: tpu7x:2x2x1
jax: 0.10.0
libtpu: 0.0.40
codegen_flags: <defaults>
</compile_context>

<pallas_src>
import functools

import jax
import jax.numpy as jnp
from jax import lax
from jax.experimental import pallas as pl
from jax.experimental.pallas import tpu as pltpu


# ----------------------------- Pallas kernel ------------------------------ #
def _matmul_kernel(x_ref, w_ref, o_ref):
    # (tm, K) @ (K, N) -> (tm, N); bf16 inputs, f32 accumulation on the MXU,
    # bf16 store (kernel is store/writeback bound, not MXU bound).
    o_ref[...] = jnp.dot(
        x_ref[...], w_ref[...], preferred_element_type=jnp.float32
    ).astype(o_ref.dtype)


def _round_up(a, m):
    return (a + m - 1) // m * m


def patch_matmul(x, w, *, tm_cap=2048, min_pallas_rows=256):
    """bf16(x @ w) with f32 accumulation, row-tiled on the MXU.

    x: (M, K), w: (K, N). Inputs are bf16 (weights/activations are already
    bf16, so the casts here are no-ops); output is bf16. Rows are padded to a
    tile multiple so any M works; grid_m is kept >= 2 whenever M allows so the
    ("parallel",) axis gives both v7x TensorCores work (on v5e/v6e it just
    overlaps writeback with the next tile's matmul). Tiny problems fall back
    to an XLA dot (launch-dominated per the perf review).
    """
    M, K = x.shape
    K2, N = w.shape
    assert K == K2, (x.shape, w.shape)

    xb = x.astype(jnp.bfloat16)
    wb = w.astype(jnp.bfloat16)

    if M < min_pallas_rows:
        # Launch-dominated: let XLA fuse it with the surrounding reshapes.
        return jnp.dot(xb, wb, preferred_element_type=jnp.float32
                       ).astype(jnp.bfloat16)

    tm = min(tm_cap, _round_up(pl.cdiv(M, 2), 16))
    grid_m = pl.cdiv(M, tm)
    m_pad = grid_m * tm
    if m_pad != M:
        xb = jnp.pad(xb, ((0, m_pad - M), (0, 0)))

    cost = pl.CostEstimate(
        flops=2 * M * K * N,
        transcendentals=0,
        bytes_accessed=2 * (M * K + K * N + M * N),  # bf16 everywhere
    )

    out = pl.pallas_call(
        _matmul_kernel,
        out_shape=jax.ShapeDtypeStruct((m_pad, N), jnp.bfloat16),
        grid_spec=pltpu.PrefetchScalarGridSpec(
            num_scalar_prefetch=0,
            grid=(grid_m,),
            in_specs=[
                pl.BlockSpec((tm, K), lambda i: (i, 0)),   # K is the full dim
                pl.BlockSpec((K, N), lambda i: (0, 0)),    # weight resident
            ],
            out_specs=pl.BlockSpec((tm, N), lambda i: (i, 0)),  # lane-dense N
        ),
        compiler_params=pltpu.CompilerParams(
            dimension_semantics=("parallel",)),
        cost_estimate=cost,
    )(xb, wb)
    return out[:M] if m_pad != M else out


# ---------------------- overlap-add (plain-JAX glue) ----------------------- #
def _overlap_add_axis(p, s_axis, t_axis):
    """Collapse one 4-tap kernel axis into a doubled spatial axis.

    For ConvTranspose3d(k=4, s=2, p=1):
        out[2*d]   = p[d, k=1] + p[d-1, k=3]
        out[2*d+1] = p[d, k=2] + p[d+1, k=0]
    (out-of-range terms are zero). Requires s_axis < t_axis.
    """
    taps = [lax.index_in_dim(p, k, axis=t_axis, keepdims=False)
            for k in range(4)]
    s = taps[0].shape[s_axis]

    def shift(a, lo, hi, start):
        pad = [(0, 0)] * a.ndim
        pad[s_axis] = (lo, hi)
        return lax.slice_in_dim(jnp.pad(a, pad), start, start + s, axis=s_axis)

    even = taps[1] + shift(taps[3], 1, 0, 0)   # + p[d-1, k=3]
    odd = taps[2] + shift(taps[0], 0, 1, 1)    # + p[d+1, k=0]
    out = jnp.stack([even, odd], axis=s_axis + 1)
    new_shape = list(even.shape)
    new_shape[s_axis] = 2 * s
    return out.reshape(new_shape)


# --------------------------- ConvTranspose3d ------------------------------ #
def conv_transpose3d_cl(x_cl, w_mat, b, act, *, pair=False):
    """ConvTranspose3d(kernel=4, stride=2, padding=1) + activation.

    x_cl:  (B, D, H, W, Ci)  channels-last activations (bf16)
    w_mat: (Ci, Co*64) bf16, or blockdiag-paired (2*Ci, 2*Co*64) when pair=True
    b:     (Co,) f32
    returns (B, 2D, 2H, 2W, Co); bf16 for 'leaky', f32 for 'sigmoid'.
    """
    B, D, H, W, Ci = x_cl.shape
    Co = b.shape[0]
    M = B * D * H * W
    if pair:
        # Lane-density trick for Co*64 < 128: pair adjacent rows; weight was
        # pre-built as blockdiag(W, W) at init. Output memory layout is
        # identical to the unpaired case.
        assert M % 2 == 0
        x2d = x_cl.reshape(M // 2, 2 * Ci)
    else:
        x2d = x_cl.reshape(M, Ci)
    patches = patch_matmul(x2d, w_mat)                 # Pallas hot path (bf16)
    p = patches.reshape(B, D, H, W, Co, 4, 4, 4)
    # TODO(synk): the k_w recombination below could be fused into the Pallas
    # epilogue (tile-local since tm % W == 0) to halve kernel output bytes.
    p = _overlap_add_axis(p, 1, 5)                     # (B, 2D, H, W, Co, 4, 4)
    p = _overlap_add_axis(p, 2, 5)                     # (B, 2D, 2H, W, Co, 4)
    out = _overlap_add_axis(p, 3, 5)                   # (B, 2D, 2H, 2W, Co)
    if act == "leaky":
        out = out + b.reshape(1, 1, 1, 1, Co)          # promotes to f32
        out = jnp.where(out >= 0, out, 0.2 * out)
        out = out.astype(jnp.bfloat16)                 # bf16 activations out
    elif act == "sigmoid":
        out = out.astype(jnp.float32) + b.reshape(1, 1, 1, 1, Co)
        out = jax.nn.sigmoid(out)                      # final output in f32
    return out


# ------------------------------ Generator --------------------------------- #
def init_generator_params(key, z_dim, latent):
    """Deterministic synthetic parameters matching the PyTorch module shapes."""
    ks = jax.random.split(key, 8)

    def uni(k, shape, fan_in):
        bound = 1.0 / jnp.sqrt(jnp.float32(fan_in))
        return jax.random.uniform(k, shape, jnp.float32, -bound, bound)

    fc_in, fc_out = 2 * latent, 16 * z_dim ** 3

    def deconv(kw, kb, ci, co):
        # PyTorch ConvTranspose3d default init bound uses fan_in = Co * prod(k).
        fan_in = co * 64
        w = uni(kw, (ci, co, 4, 4, 4), fan_in)
        # (Ci, Co*64) patch-matmul layout, pre-cast to bf16 (hoisted out of the
        # per-forward path).
        w_mat = w.reshape(ci, co * 64)
        if co * 64 < 128:
            # Row-pairing layer: store blockdiag(W, W) -> (2*Ci, 2*Co*64) so
            # the Pallas output block is 128 lanes wide.
            z = jnp.zeros_like(w_mat)
            w_mat = jnp.concatenate(
                [jnp.concatenate([w_mat, z], axis=1),
                 jnp.concatenate([z, w_mat], axis=1)], axis=0)
        return w_mat.astype(jnp.bfloat16), uni(kb, (co,), fan_in)

    d1_w, d1_b = deconv(ks[2], ks[3], 16, 8)
    d2_w, d2_b = deconv(ks[4], ks[5], 8, 4)
    d3_w, d3_b = deconv(ks[6], ks[7], 4, 1)
    return {
        # Linear(latent+latent, 16*z_dim^3); stored (in, out) for x @ W
        "fc_w": uni(ks[0], (fc_in, fc_out), fc_in),
        "fc_b": uni(ks[1], (fc_out,), fc_in),
        "d1_w": d1_w, "d1_b": d1_b,
        "d2_w": d2_w, "d2_b": d2_b,
        "d3_w": d3_w, "d3_b": d3_b,
    }


def generator_forward(params, z, c, *, z_dim, batch_size, latent):
    # c: (B,) -> (B, latent); concat with z -> (B, 2*latent)
    c2 = jnp.tile(c.reshape(batch_size, 1), (1, latent))
    zc = jnp.concatenate([z, c2], axis=1)
    # decoder_fc: Linear + LeakyReLU(0.2). Left to XLA — M = batch_size rows is
    # far below one MXU tile; a pallas_call here would be pure launch overhead.
    h = zc @ params["fc_w"] + params["fc_b"]
    h = jnp.where(h >= 0, h, 0.2 * h)
    # Emit bf16 activations once here so the in-kernel cast is a no-op.
    # (B, 16, z, z, z) NCDHW -> channels-last; stay channels-last throughout.
    x = h.astype(jnp.bfloat16).reshape(batch_size, 16, z_dim, z_dim, z_dim)
    x = x.transpose(0, 2, 3, 4, 1)
    x = conv_transpose3d_cl(x, params["d1_w"], params["d1_b"], "leaky")
    x = conv_transpose3d_cl(x, params["d2_w"], params["d2_b"], "leaky")
    x = conv_transpose3d_cl(x, params["d3_w"], params["d3_b"], "sigmoid",
                            pair=True)
    # back to PyTorch NCDHW only at the very end
    return x.transpose(0, 4, 1, 2, 3)   # (B, 1, 8*z, 8*z, 8*z)


# --------------------------------- main ------------------------------------ #
if __name__ == "__main__":
    Z_DIM = 4       # z_dim
    LATENT = 8      # latent
    BATCH = 2       # batch_size

    key = jax.random.PRNGKey(0)
    kp, kz, kc = jax.random.split(key, 3)
    params = init_generator_params(kp, Z_DIM, LATENT)

    z = jax.random.normal(kz, (BATCH, LATENT), jnp.float32)
    c = jax.random.normal(kc, (BATCH,), jnp.float32)

    fwd = jax.jit(functools.partial(
        generator_forward, z_dim=Z_DIM, batch_size=BATCH, latent=LATENT))
    out = jax.block_until_ready(fwd(params, z, c))

    expected = (BATCH, 1, 8 * Z_DIM, 8 * Z_DIM, 8 * Z_DIM)
    assert out.shape == expected, (out.shape, expected)
    assert out.dtype == jnp.float32, out.dtype
    assert bool(jnp.all(jnp.isfinite(out)))
    # sigmoid output range check
    assert bool(jnp.all((out >= 0.0) & (out <= 1.0)))
    print("KERNEL_OK")
</pallas_src>

<mosaic_0001>
module attributes {stable_mosaic.version = 11 : i64} {
  func.func @_matmul_kernel(%arg0: i32, %arg1: memref<512x8xbf16, #tpu.memory_space<vmem>>, %arg2: memref<8x256xbf16, #tpu.memory_space<vmem>>, %arg3: memref<512x256xbf16, #tpu.memory_space<vmem>>) attributes {dimension_semantics = [#tpu.dimension_semantics<parallel>], iteration_bounds = array<i64: 2>, scalar_prefetch = 0 : i64, scratch_operands = 0 : i64, tpu.core_type = #tpu.core_type<tc>, window_params = [{transform_indices = @transform_0, window_bounds = array<i64: 512, 8>}, {pipeline_mode = #tpu.pipeline_mode<synchronous>, transform_indices = @transform_1, window_bounds = array<i64: 8, 256>}, {transform_indices = @transform_2, window_bounds = array<i64: 512, 256>}]} {
    %c0 = arith.constant 0 : index
    %c0_0 = arith.constant 0 : index
    %0 = vector.load %arg1[%c0, %c0_0] : memref<512x8xbf16, #tpu.memory_space<vmem>>, vector<512x8xbf16>
    %c0_1 = arith.constant 0 : index
    %c0_2 = arith.constant 0 : index
    %1 = vector.load %arg2[%c0_1, %c0_2] : memref<8x256xbf16, #tpu.memory_space<vmem>>, vector<8x256xbf16>
    %cst = arith.constant dense<0.000000e+00> : vector<512x256xf32>
    %2 = tpu.matmul %0, %1, %cst {dimension_numbers = #tpu.dot_dimension_numbers<[1], [0], [0], [1], [0, 0, 1, 1], [], []>} : vector<512x8xbf16>, vector<8x256xbf16>, vector<512x256xf32> -> vector<512x256xf32>
    %3 = arith.truncf %2 : vector<512x256xf32> to vector<512x256xbf16>
    %c0_3 = arith.constant 0 : index
    %c0_4 = arith.constant 0 : index
    %4 = vector.load %arg3[%c0_3, %c0_4] : memref<512x256xbf16, #tpu.memory_space<vmem>>, vector<512x256xbf16>
    tpu.vector_store %arg3[%c0_3, %c0_4], %3 {strides = array<i32>} : memref<512x256xbf16, #tpu.memory_space<vmem>>, vector<512x256xbf16>,
    return
  }
  func.func @transform_0(%arg0: i32) -> (i32, i32) {
    %c0_i32 = arith.constant 0 : i32
    %c0_i32_0 = arith.constant 0 : i32
    return %arg0, %c0_i32 : i32, i32
  }
  func.func @transform_1(%arg0: i32) -> (i32, i32) {
    %c0_i32 = arith.constant 0 : i32
    %c0_i32_0 = arith.constant 0 : i32
    %c0_i32_1 = arith.constant 0 : i32
    return %c0_i32, %c0_i32_0 : i32, i32
  }
  func.func @transform_2(%arg0: i32) -> (i32, i32) {
    %c0_i32 = arith.constant 0 : i32
    %c0_i32_0 = arith.constant 0 : i32
    return %arg0, %c0_i32 : i32, i32
  }
}

module attributes {stable_mosaic.version = 11 : i64} {
  func.func @_matmul_kernel(%arg0: i32, %arg1: memref<2048x8xbf16, #tpu.memory_space<vmem>>, %arg2: memref<8x128xbf16, #tpu.memory_space<vmem>>, %arg3: memref<2048x128xbf16, #tpu.memory_space<vmem>>) attributes {dimension_semantics = [#tpu.dimension_semantics<parallel>], iteration_bounds = array<i64: 2>, scalar_prefetch = 0 : i64, scratch_operands = 0 : i64, tpu.core_type = #tpu.core_type<tc>, window_params = [{transform_indices = @transform_0, window_bounds = array<i64: 2048, 8>}, {pipeline_mode = #tpu.pipeline_mode<synchronous>, transform_indices = @transform_1, window_bounds = array<i64: 8, 128>}, {transform_indices = @transform_2, window_bounds = array<i64: 2048, 128>}]} {
    %c0 = arith.constant 0 : index
    %c0_0 = arith.constant 0 : index
    %0 = vector.load %arg1[%c0, %c0_0] : memref<2048x8xbf16, #tpu.memory_space<vmem>>, vector<2048x8xbf16>
    %c0_1 = arith.constant 0 : index
    %c0_2 = arith.constant 0 : index
    %1 = vector.load %arg2[%c0_1, %c0_2] : memref<8x128xbf16, #tpu.memory_space<vmem>>, vector<8x128xbf16>
    %cst = arith.constant dense<0.000000e+00> : vector<2048x128xf32>
    %2 = tpu.matmul %0, %1, %cst {dimension_numbers = #tpu.dot_dimension_numbers<[1], [0], [0], [1], [0, 0, 1, 1], [], []>} : vector<2048x8xbf16>, vector<8x128xbf16>, vector<2048x128xf32> -> vector<2048x128xf32>
    %3 = arith.truncf %2 : vector<2048x128xf32> to vector<2048x128xbf16>
    %c0_3 = arith.constant 0 : index
    %c0_4 = arith.constant 0 : index
    %4 = vector.load %arg3[%c0_3, %c0_4] : memref<2048x128xbf16, #tpu.memory_space<vmem>>, vector<2048x128xbf16>
    tpu.vector_store %arg3[%c0_3, %c0_4], %3 {strides = array<i32>} : memref<2048x128xbf16, #tpu.memory_space<vmem>>, vector<2048x128xbf16>,
    return
  }
  func.func @transform_0(%arg0: i32) -> (i32, i32) {
    %c0_i32 = arith.constant 0 : i32
    %c0_i32_0 = arith.constant 0 : i32
    return %arg0, %c0_i32 : i32, i32
  }
  func.func @transform_1(%arg0: i32) -> (i32, i32) {
    %c0_i32 = arith.constant 0 : i32
    %c0_i32_0 = arith.constant 0 : i32
    %c0_i32_1 = arith.constant 0 : i32
    return %c0_i32, %c0_i32_0 : i32, i32
  }
  func.func @transform_2(%arg0: i32) -> (i32, i32) {
    %c0_i32 = arith.constant 0 : i32
    %c0_i32_0 = arith.constant 0 : i32
    return %arg0, %c0_i32 : i32, i32
  }
}

</mosaic_0001>

<llo_original>
// kernel: generator_forward.2
$region0: #{generator_forward.2}
  #allocation0 [shape = 'u32[]', space=smem, size = 0x4, offset = 0x4, fixed_abs, tag = 'smem constant byte address 0x4 - core index']
  #allocation1 [shape = 'u32[144,128]{1,0:T(1,128)}', space=vmem, size = 0x12000, scoped, tag = 'internal scratch']
  %s0 = inlined_call_operand.vmem [shape: bf16[1024,8], index: 0, kind: input, shape index: {}]
  %s1 = inlined_call_operand.vmem [shape: bf16[8,256], index: 1, kind: input, shape index: {}]
  %s2 = inlined_call_operand.vmem [shape: bf16[1024,256], index: 2, kind: output, shape index: {}]
  %s3 = sld [smem:[#allocation0]]
  $region41: #{generator_forward.2} parent=0
    _
  %s5 = ssub.s32 1, %s3
  %s6 = scalar_select 0, %s5, %s3
  loop: start=0, step=1, limit=4
  $region2: #{generator_forward.2} parent=0 // loop_pre_header
    _
  $region3: #{generator_forward.2} parent=0 // loop_header
    %s8 = sphi 0, %s12
    %p9 = scmp.ge.s32.totalorder %s8, 4
    %s18 = sphi 0, %s20
    %s21 = sphi 0, %s18
    %s22 = sphi 0, %s21
    %s38 = sphi 0, %s22
    %s42 = sphi 0, %s42
    %s44 = sphi 0, %s42
    %s45 = sphi 0, %s44
    %s59 = sphi 0, %s45
    %s65 = sphi 0, %s67
    %s68 = sphi 0, %s65
    %s69 = sphi 0, %s68
    %s85 = sphi 0, %s69
  $region4: #{generator_forward.2} parent=0 // loop_header_branch
    %11 = sbr.rel (%p9) target = $region8
  $region5: #{generator_forward.2} parent=0 // loop_body
    %s13 = ssub.s32 %s8, 1
    %s14 = ssub.s32 %s8, 2
    %s15 = sadd.s32 %s8, 1
    %s16 = ssub.s32 %s8, %s15
    %p17 = scmp.eq.s32.totalorder %s16, 0
    %s19 = sadd.s32 %s18, 1
    %s20 = scalar_select %p17, %s18, %s19
    %p23 = pneg %p17
    %p24 = scmp.eq.s32.totalorder %s8, 1
    %p25 = por %p23, %p24
    %p26 = scmp.ne.s32.totalorder %s18, %s21
    %p27 = scmp.eq.s32.totalorder %s8, 0
    %p28 = por %p26, %p27
    %p29 = scmp.ne.s32.totalorder %s18, %s21
    %p30 = scmp.eq.s32.totalorder %s13, 1
    %p31 = por %p29, %p30
    %p32 = scmp.ne.s32.totalorder %s21, %s22
    %p33 = scmp.eq.s32.totalorder %s13, 0
    %p34 = por %p32, %p33
    %p35 = scmp.ne.s32.totalorder %s21, %s22
    %p36 = scmp.eq.s32.totalorder %s14, 1
    %p37 = por %p35, %p36
    %p39 = scmp.ne.s32.totalorder %s22, %s38
    %p40 = scmp.eq.s32.totalorder %s14, 0
    %p41 = por %p39, %p40
    %s43 = sadd.s32 %s42, 1
    %p46 = scmp.eq.s32.totalorder %s8, 1
    %p47 = scmp.ne.s32.totalorder %s42, %s44
    %p48 = scmp.eq.s32.totalorder %s8, 0
    %p49 = por %p47, %p48
    %p50 = scmp.ne.s32.totalorder %s42, %s44
    %p51 = scmp.eq.s32.totalorder %s13, 1
    %p52 = por %p50, %p51
    %p53 = scmp.ne.s32.totalorder %s44, %s45
    %p54 = scmp.eq.s32.totalorder %s13, 0
    %p55 = por %p53, %p54
    %p56 = scmp.ne.s32.totalorder %s44, %s45
    %p57 = scmp.eq.s32.totalorder %s14, 1
    %p58 = por %p56, %p57
    %p60 = scmp.ne.s32.totalorder %s45, %s59
    %p61 = scmp.eq.s32.totalorder %s14, 0
    %p62 = por %p60, %p61
    %s63 = ssub.s32 %s8, %s15
    %p64 = scmp.eq.s32.totalorder %s63, 0
    %s66 = sadd.s32 %s65, 1
    %s67 = scalar_select %p64, %s65, %s66
    %p70 = pneg %p64
    %p71 = scmp.eq.s32.totalorder %s8, 1
    %p72 = por %p70, %p71
    %p73 = scmp.ne.s32.totalorder %s65, %s68
    %p74 = scmp.eq.s32.totalorder %s8, 0
    %p75 = por %p73, %p74
    %p76 = scmp.ne.s32.totalorder %s65, %s68
    %p77 = scmp.eq.s32.totalorder %s13, 1
    %p78 = por %p76, %p77
    %p79 = scmp.ne.s32.totalorder %s68, %s69
    %p80 = scmp.eq.s32.totalorder %s13, 0
    %p81 = por %p79, %p80
    %p82 = scmp.ne.s32.totalorder %s68, %s69
    %p83 = scmp.eq.s32.totalorder %s14, 1
    %p84 = por %p82, %p83
    %p86 = scmp.ne.s32.totalorder %s69, %s85
    %p87 = scmp.eq.s32.totalorder %s14, 0
    %p88 = por %p86, %p87
    %p89 = scmp.le.s32.totalorder 1, %s8
    %p90 = scmp.lt.s32.totalorder %s8, 3
    %p91 = pnand %p89, %p90
    %p92 = pneg %p91
    // Predicated region
    $region9: #{generator_forward.2} parent=5 // pred_check
      _
    $region10: #{generator_forward.2} parent=5 // pred_check_branch
      %94 = sbr.rel (%p91) target = $region12
    $region11: #{generator_forward.2} parent=5 // pred_region
      %s95 = ssub.s32 %s8, 1
      // Predicated region
      $region13: #{generator_forward.2} parent=11 // pred_check
        %p96 = pneg %p55
      $region14: #{generator_forward.2} parent=11 // pred_check_branch
        %98 = sbr.rel (%p96) target = $region16
      $region15: #{generator_forward.2} parent=11 // pred_region
        _
      $region16: #{generator_forward.2} parent=11 // pred_fallthru
        _
    $region12: #{generator_forward.2} parent=5 // pred_fallthru
      _
    %p99 = scmp.lt.s32.totalorder %s8, 2
    // Predicated region
    $region17: #{generator_forward.2} parent=5 // pred_check
      %p100 = pneg %p99
    $region18: #{generator_forward.2} parent=5 // pred_check_branch
      %102 = sbr.rel (%p100) target = $region20
    $region19: #{generator_forward.2} parent=5 // pred_region
      // Predicated region
      $region21: #{generator_forward.2} parent=19 // pred_check
        %p103 = pneg %p28
      $region22: #{generator_forward.2} parent=19 // pred_check_branch
        %105 = sbr.rel (%p103) target = $region24
      $region23: #{generator_forward.2} parent=19 // pred_region
        %s106 = smul.u32 64, %s8
        %p107 = scmp.lt.s32.totalorder %s106, 127
        %s108 = scalar_select %p107, %s106, 127
        %s109 = smul.addr %s108, 4
        %s110 = scalar_lea.vmem %s0, %s109
        %s111 = smul.u32 64, %s8
      $region24: #{generator_forward.2} parent=19 // pred_fallthru
        _
    $region20: #{generator_forward.2} parent=5 // pred_fallthru
      _
    %p112 = scmp.le.s32.totalorder 1, %s8
    %p113 = scmp.lt.s32.totalorder %s8, 3
    %p114 = pnand %p112, %p113
    %p115 = pneg %p114
    // Predicated region
    $region25: #{generator_forward.2} parent=5 // pred_check
      _
    $region26: #{generator_forward.2} parent=5 // pred_check_branch
      %117 = sbr.rel (%p114) target = $region28
    $region27: #{generator_forward.2} parent=5 // pred_region
      %s118 = ssub.s32 %s8, 1
      %s119 = smul.u32 64, %s13
      %p120 = scmp.lt.s32.totalorder %s119, 127
      %s121 = scalar_select %p120, %s119, 127
      %s122 = smul.addr %s121, 4
      %s123 = scalar_lea.vmem %s0, %s122
      %p124 = pneg %p34
      %p125 = pneg %p31
      %p126 = pneg %p55
      %p127 = pneg %p52
      %p128 = pneg %p81
      %p129 = pneg %p78
      %s130 = smul.u32 64, %s13
      %p131 = scmp.lt.s32.totalorder %s130, 127
      %s132 = scalar_select %p131, %s130, 127
      %s133 = smul.addr %s132, 2
      %s134 = smul.addr %s133, 4
      %s135 = scalar_lea.vmem %s2, %s134
      %s136 = smul.u32 64, %s13
      %p137 = scmp.lt.s32.totalorder %s136, 127
      %s138 = scalar_select %p137, %s136, 127
      %s139 = smul.addr %s138, 4
      %s140 = scalar_lea.vmem %s0, %s139
      %s141 = smul.u32 64, %s13
      %s142 = smul.u32 64, %s13
      %p143 = scmp.lt.s32.totalorder %s142, 127
      %s144 = scalar_select %p143, %s142, 127
      %s145 = smul.addr %s144, 2
      %s146 = smul.addr %s145, 4
      %s147 = scalar_lea.vmem %s2, %s146
      %s148 = smul.u32 64, %s13
      %v150 = vld [vmem:[%s140] sm:$0xf]
      %v151 = vld [vmem:[%s140 + $0x4] sm:$0xf]
      %v152 = vld [vmem:[%s140 + $0x8] sm:$0xf]
      %v153 = vld [vmem:[%s140 + $0xc] sm:$0xf]
      %v154 = vld [vmem:[%s140 + $0x10] sm:$0xf]
      %v155 = vld [vmem:[%s140 + $0x14] sm:$0xf]
      %v156 = vld [vmem:[%s140 + $0x18] sm:$0xf]
      %v157 = vld [vmem:[%s140 + $0x1c] sm:$0xf]
      %v158 = vld [vmem:[%s140 + $0x20] sm:$0xf]
      %v159 = vld [vmem:[%s140 + $0x24] sm:$0xf]
      %v160 = vld [vmem:[%s140 + $0x28] sm:$0xf]
      %v161 = vld [vmem:[%s140 + $0x2c] sm:$0xf]
      %v162 = vld [vmem:[%s140 + $0x30] sm:$0xf]
      %v163 = vld [vmem:[%s140 + $0x34] sm:$0xf]
      %v164 = vld [vmem:[%s140 + $0x38] sm:$0xf]
      %v165 = vld [vmem:[%s140 + $0x3c] sm:$0xf]
      %v166 = vld [vmem:[%s140 + $0x40] sm:$0xf]
      %v167 = vld [vmem:[%s140 + $0x44] sm:$0xf]
      %v168 = vld [vmem:[%s140 + $0x48] sm:$0xf]
      %v169 = vld [vmem:[%s140 + $0x4c] sm:$0xf]
      %v170 = vld [vmem:[%s140 + $0x50] sm:$0xf]
      %v171 = vld [vmem:[%s140 + $0x54] sm:$0xf]
      %v172 = vld [vmem:[%s140 + $0x58] sm:$0xf]
      %v173 = vld [vmem:[%s140 + $0x5c] sm:$0xf]
      %v174 = vld [vmem:[%s140 + $0x60] sm:$0xf]
      %v175 = vld [vmem:[%s140 + $0x64] sm:$0xf]
      %v176 = vld [vmem:[%s140 + $0x68] sm:$0xf]
      %v177 = vld [vmem:[%s140 + $0x6c] sm:$0xf]
      %v178 = vld [vmem:[%s140 + $0x70] sm:$0xf]
      %v179 = vld [vmem:[%s140 + $0x74] sm:$0xf]
      %v180 = vld [vmem:[%s140 + $0x78] sm:$0xf]
      %v181 = vld [vmem:[%s140 + $0x7c] sm:$0xf]
      %v182 = vld [vmem:[%s140 + $0x80] sm:$0xf]
      %v183 = vld [vmem:[%s140 + $0x84] sm:$0xf]
      %v184 = vld [vmem:[%s140 + $0x88] sm:$0xf]
      %v185 = vld [vmem:[%s140 + $0x8c] sm:$0xf]
      %v186 = vld [vmem:[%s140 + $0x90] sm:$0xf]
      %v187 = vld [vmem:[%s140 + $0x94] sm:$0xf]
      %v188 = vld [vmem:[%s140 + $0x98] sm:$0xf]
      %v189 = vld [vmem:[%s140 + $0x9c] sm:$0xf]
      %v190 = vld [vmem:[%s140 + $0xa0] sm:$0xf]
      %v191 = vld [vmem:[%s140 + $0xa4] sm:$0xf]
      %v192 = vld [vmem:[%s140 + $0xa8] sm:$0xf]
      %v193 = vld [vmem:[%s140 + $0xac] sm:$0xf]
      %v194 = vld [vmem:[%s140 + $0xb0] sm:$0xf]
      %v195 = vld [vmem:[%s140 + $0xb4] sm:$0xf]
      %v196 = vld [vmem:[%s140 + $0xb8] sm:$0xf]
      %v197 = vld [vmem:[%s140 + $0xbc] sm:$0xf]
      %v198 = vld [vmem:[%s140 + $0xc0] sm:$0xf]
      %v199 = vld [vmem:[%s140 + $0xc4] sm:$0xf]
      %v200 = vld [vmem:[%s140 + $0xc8] sm:$0xf]
      %v201 = vld [vmem:[%s140 + $0xcc] sm:$0xf]
      %v202 = vld [vmem:[%s140 + $0xd0] sm:$0xf]
      %v203 = vld [vmem:[%s140 + $0xd4] sm:$0xf]
      %v204 = vld [vmem:[%s140 + $0xd8] sm:$0xf]
      %v205 = vld [vmem:[%s140 + $0xdc] sm:$0xf]
      %v206 = vld [vmem:[%s140 + $0xe0] sm:$0xf]
      %v207 = vld [vmem:[%s140 + $0xe4] sm:$0xf]
      %v208 = vld [vmem:[%s140 + $0xe8] sm:$0xf]
      %v209 = vld [vmem:[%s140 + $0xec] sm:$0xf]
      %v210 = vld [vmem:[%s140 + $0xf0] sm:$0xf]
      %v211 = vld [vmem:[%s140 + $0xf4] sm:$0xf]
      %v212 = vld [vmem:[%s140 + $0xf8] sm:$0xf]
      %v213 = vld [vmem:[%s140 + $0xfc] sm:$0xf]
      %v214 = vld [vmem:[%s1] sm:$0xff]
      %v279 = vunpack.c.l.b16 %v150
      %v280 = vunpack.c.l.b16 %v151
      %v281 = vunpack.c.l.b16 %v152
      %v282 = vunpack.c.l.b16 %v153
      %v283 = vunpack.c.l.b16 %v154
      %v284 = vunpack.c.l.b16 %v155
      %v285 = vunpack.c.l.b16 %v156
      %v286 = vunpack.c.l.b16 %v157
      %v287 = vunpack.c.l.b16 %v158
      %v288 = vunpack.c.l.b16 %v159
      %v289 = vunpack.c.l.b16 %v160
      %v290 = vunpack.c.l.b16 %v161
      %v291 = vunpack.c.l.b16 %v162
      %v292 = vunpack.c.l.b16 %v163
      %v293 = vunpack.c.l.b16 %v164
      %v294 = vunpack.c.l.b16 %v165
      %v295 = vunpack.c.l.b16 %v166
      %v296 = vunpack.c.l.b16 %v167
      %v297 = vunpack.c.l.b16 %v168
      %v298 = vunpack.c.l.b16 %v169
      %v299 = vunpack.c.l.b16 %v170
      %v300 = vunpack.c.l.b16 %v171
      %v301 = vunpack.c.l.b16 %v172
      %v302 = vunpack.c.l.b16 %v173
      %v303 = vunpack.c.l.b16 %v174
      %v304 = vunpack.c.l.b16 %v175
      %v305 = vunpack.c.l.b16 %v176
      %v306 = vunpack.c.l.b16 %v177
      %v307 = vunpack.c.l.b16 %v178
      %v308 = vunpack.c.l.b16 %v179
      %v309 = vunpack.c.l.b16 %v180
      %v310 = vunpack.c.l.b16 %v181
      %v311 = vunpack.c.l.b16 %v182
      %v312 = vunpack.c.l.b16 %v183
      %v313 = vunpack.c.l.b16 %v184
      %v314 = vunpack.c.l.b16 %v185
      %v315 = vunpack.c.l.b16 %v186
      %v316 = vunpack.c.l.b16 %v187
      %v317 = vunpack.c.l.b16 %v188
      %v318 = vunpack.c.l.b16 %v189
      %v319 = vunpack.c.l.b16 %v190
      %v320 = vunpack.c.l.b16 %v191
      %v321 = vunpack.c.l.b16 %v192
      %v322 = vunpack.c.l.b16 %v193
      %v323 = vunpack.c.l.b16 %v194
      %v324 = vunpack.c.l.b16 %v195
      %v325 = vunpack.c.l.b16 %v196
      %v326 = vunpack.c.l.b16 %v197
      %v327 = vunpack.c.l.b16 %v198
      %v328 = vunpack.c.l.b16 %v199
      %v329 = vunpack.c.l.b16 %v200
      %v330 = vunpack.c.l.b16 %v201
      %v331 = vunpack.c.l.b16 %v202
      %v332 = vunpack.c.l.b16 %v203
      %v333 = vunpack.c.l.b16 %v204
      %v334 = vunpack.c.l.b16 %v205
      %v335 = vunpack.c.l.b16 %v206
      %v336 = vunpack.c.l.b16 %v207
      %v337 = vunpack.c.l.b16 %v208
      %v338 = vunpack.c.l.b16 %v209
      %v339 = vunpack.c.l.b16 %v210
      %v340 = vunpack.c.l.b16 %v211
      %v341 = vunpack.c.l.b16 %v212
      %v342 = vunpack.c.l.b16 %v213
      %v343 = vpack.c.b16 %v280, %v279
      %v344 = vpack.c.b16 %v282, %v281
      %v345 = vpack.c.b16 %v284, %v283
      %v346 = vpack.c.b16 %v286, %v285
      %v347 = vpack.c.b16 %v288, %v287
      %v348 = vpack.c.b16 %v290, %v289
      %v349 = vpack.c.b16 %v292, %v291
      %v350 = vpack.c.b16 %v294, %v293
      %v351 = vpack.c.b16 %v296, %v295
      %v352 = vpack.c.b16 %v298, %v297
      %v353 = vpack.c.b16 %v300, %v299
      %v354 = vpack.c.b16 %v302, %v301
      %v355 = vpack.c.b16 %v304, %v303
      %v356 = vpack.c.b16 %v306, %v305
      %v357 = vpack.c.b16 %v308, %v307
      %v358 = vpack.c.b16 %v310, %v309
      %v359 = vpack.c.b16 %v312, %v311
      %v360 = vpack.c.b16 %v314, %v313
      %v361 = vpack.c.b16 %v316, %v315
      %v362 = vpack.c.b16 %v318, %v317
      %v363 = vpack.c.b16 %v320, %v319
      %v364 = vpack.c.b16 %v322, %v321
      %v365 = vpack.c.b16 %v324, %v323
      %v366 = vpack.c.b16 %v326, %v325
      %v367 = vpack.c.b16 %v328, %v327
      %v368 = vpack.c.b16 %v330, %v329
      %v369 = vpack.c.b16 %v332, %v331
      %v370 = vpack.c.b16 %v334, %v333
      %v371 = vpack.c.b16 %v336, %v335
      %v372 = vpack.c.b16 %v338, %v337
      %v373 = vpack.c.b16 %v340, %v339
      %v374 = vpack.c.b16 %v342, %v341
      %v376 = vunpack.c.l.b16 %v214
      %v377 = vunpack.c.h.b16 %v214
      %v378 = vpack.c.b16 %v376, %v376
      %v379 = vpack.c.b16 %v377, %v377
      %vm380 = vcmask 64512
      %v382 = vsel %vm380, %v343, 0
      %v385 = vsel %vm380, %v344, 0
      %v388 = vsel %vm380, %v345, 0
      %v391 = vsel %vm380, %v346, 0
      %v394 = vsel %vm380, %v347, 0
      %v397 = vsel %vm380, %v348, 0
      %v400 = vsel %vm380, %v349, 0
      %v403 = vsel %vm380, %v350, 0
      %v406 = vsel %vm380, %v351, 0
      %v409 = vsel %vm380, %v352, 0
      %v412 = vsel %vm380, %v353, 0
      %v415 = vsel %vm380, %v354, 0
      %v418 = vsel %vm380, %v355, 0
      %v421 = vsel %vm380, %v356, 0
      %v424 = vsel %vm380, %v357, 0
      %v427 = vsel %vm380, %v358, 0
      %v430 = vsel %vm380, %v359, 0
      %v433 = vsel %vm380, %v360, 0
      %v436 = vsel %vm380, %v361, 0
      %v439 = vsel %vm380, %v362, 0
      %v442 = vsel %vm380, %v363, 0
      %v445 = vsel %vm380, %v364, 0
      %v448 = vsel %vm380, %v365, 0
      %v451 = vsel %vm380, %v366, 0
      %v454 = vsel %vm380, %v367, 0
      %v457 = vsel %vm380, %v368, 0
      %v460 = vsel %vm380, %v369, 0
      %v463 = vsel %vm380, %v370, 0
      %v466 = vsel %vm380, %v371, 0
      %v469 = vsel %vm380, %v372, 0
      %v472 = vsel %vm380, %v373, 0
      %v475 = vsel %vm380, %v374, 0
      %vm477 = vcmask 1043456
      %v479 = vsel %vm477, %v378, 0
      %v482 = vsel %vm477, %v379, 0
      %484 = vmatprep.subr.bf16.mxu0 %v482
      %485 = vmatpush1.bf16.msra.mxu0 %v479
      %486 = vmatprep.subr.bf16.mxu0 0
      %487 = vmatpush1.bf16.msra.mxu0 0
      %488 = vmatprep.subr.bf16.mxu0 0
      %489 = vmatpush1.bf16.msra.mxu0 0
      %490 = vmatprep.subr.bf16.mxu0 0
      %491 = vmatpush1.bf16.msra.mxu0 0
      %492 = vmatprep.subr.bf16.mxu0 0
      %493 = vmatpush1.bf16.msra.mxu0 0
      %494 = vmatprep.subr.bf16.mxu0 0
      %495 = vmatpush1.bf16.msra.mxu0 0
      %496 = vmatprep.subr.bf16.mxu0 0
      %497 = vmatpush1.bf16.msra.mxu0 0
      %498 = vmatprep.subr.bf16.mxu0 0
      %499 = vmatpush1.bf16.msra.mxu0 0
      %500 = vmatprep.subr.bf16.mxu0 0
      %501 = vmatpush1.bf16.msra.mxu0 0
      %502 = vmatprep.subr.bf16.mxu0 0
      %503 = vmatpush1.bf16.msra.mxu0 0
      %504 = vmatprep.subr.bf16.mxu0 0
      %505 = vmatpush1.bf16.msra.mxu0 0
      %506 = vmatprep.subr.bf16.mxu0 0
      %507 = vmatpush1.bf16.msra.mxu0 0
      %508 = vmatprep.subr.bf16.mxu0 0
      %509 = vmatpush1.bf16.msra.mxu0 0
      %510 = vmatprep.subr.bf16.mxu0 0
      %511 = vmatpush1.bf16.msra.mxu0 0
      %512 = vmatprep.subr.bf16.mxu0 0
      %513 = vmatpush1.bf16.msra.mxu0 0
      %514 = vmatprep.subr.bf16.mxu0 0
      %515 = vmatpush1.bf16.msra.mxu0 0
      %516 = vmatprep.mubr.bf16.mxu0 0
      %517 = vmatmul.mubr.bf16.gmra.mrb[0].mxu0 %v382
      %v518 = vpop.f32.mrb[0].mxu0
      %v519 = vadd.f32 0.0, %v518
      %v520 = vpop.f32.mrb[0].mxu0
      %v521 = vadd.f32 0.0, %v520
      %v522 = vpop.f32.mrb[0].mxu0
      %v523 = vadd.f32 0.0, %v522
      %v524 = vpop.f32.mrb[0].mxu0
      %v525 = vadd.f32 0.0, %v524
      %526 = vmatprep.mubr.bf16.mxu0 0
      %527 = vmatmul.mubr.bf16.gmra.mrb[0].mxu0 %v385
      %v528 = vpop.f32.mrb[0].mxu0
      %v529 = vadd.f32 0.0, %v528
      %v530 = vpop.f32.mrb[0].mxu0
      %v531 = vadd.f32 0.0, %v530
      %v532 = vpop.f32.mrb[0].mxu0
      %v533 = vadd.f32 0.0, %v532
      %v534 = vpop.f32.mrb[0].mxu0
      %v535 = vadd.f32 0.0, %v534
      %536 = vmatprep.mubr.bf16.mxu0 0
      %537 = vmatmul.mubr.bf16.gmra.mrb[0].mxu0 %v388
      %v538 = vpop.f32.mrb[0].mxu0
      %v539 = vadd.f32 0.0, %v538
      %v540 = vpop.f32.mrb[0].mxu0
      %v541 = vadd.f32 0.0, %v540
      %v542 = vpop.f32.mrb[0].mxu0
      %v543 = vadd.f32 0.0, %v542
      %v544 = vpop.f32.mrb[0].mxu0
      %v545 = vadd.f32 0.0, %v544
      %546 = vmatprep.mubr.bf16.mxu0 0
      %547 = vmatmul.mubr.bf16.gmra.mrb[0].mxu0 %v391
      %v548 = vpop.f32.mrb[0].mxu0
      %v549 = vadd.f32 0.0, %v548
      %v550 = vpop.f32.mrb[0].mxu0
      %v551 = vadd.f32 0.0, %v550
      %v552 = vpop.f32.mrb[0].mxu0
      %v553 = vadd.f32 0.0, %v552
      %v554 = vpop.f32.mrb[0].mxu0
      %v555 = vadd.f32 0.0, %v554
      %556 = vmatprep.mubr.bf16.mxu0 0
      %557 = vmatmul.mubr.bf16.gmra.mrb[0].mxu0 %v394
      %v558 = vpop.f32.mrb[0].mxu0
      %v559 = vadd.f32 0.0, %v558
      %v560 = vpop.f32.mrb[0].mxu0
      %v561 = vadd.f32 0.0, %v560
      %v562 = vpop.f32.mrb[0].mxu0
      %v563 = vadd.f32 0.0, %v562
      %v564 = vpop.f32.mrb[0].mxu0
      %v565 = vadd.f32 0.0, %v564
      %566 = vmatprep.mubr.bf16.mxu0 0
      %567 = vmatmul.mubr.bf16.gmra.mrb[0].mxu0 %v397
      %v568 = vpop.f32.mrb[0].mxu0
      %v569 = vadd.f32 0.0, %v568
      %v570 = vpop.f32.mrb[0].mxu0
      %v571 = vadd.f32 0.0, %v570
      %v572 = vpop.f32.mrb[0].mxu0
      %v573 = vadd.f32 0.0, %v572
      %v574 = vpop.f32.mrb[0].mxu0
      %v575 = vadd.f32 0.0, %v574
      %576 = vmatprep.mubr.bf16.mxu0 0
      %577 = vmatmul.mubr.bf16.gmra.mrb[0].mxu0 %v400
      %v578 = vpop.f32.mrb[0].mxu0
      %v579 = vadd.f32 0.0, %v578
      %v580 = vpop.f32.mrb[0].mxu0
      %v581 = vadd.f32 0.0, %v580
      %v582 = vpop.f32.mrb[0].mxu0
      %v583 = vadd.f32 0.0, %v582
      %v584 = vpop.f32.mrb[0].mxu0
      %v585 = vadd.f32 0.0, %v584
      %586 = vmatprep.mubr.bf16.mxu0 0
      %587 = vmatmul.mubr.bf16.gmra.mrb[0].mxu0 %v403
      %v588 = vpop.f32.mrb[0].mxu0
      %v589 = vadd.f32 0.0, %v588
      %v590 = vpop.f32.mrb[0].mxu0
      %v591 = vadd.f32 0.0, %v590
      %v592 = vpop.f32.mrb[0].mxu0
      %v593 = vadd.f32 0.0, %v592
      %v594 = vpop.f32.mrb[0].mxu0
      %v595 = vadd.f32 0.0, %v594
      %596 = vmatprep.mubr.bf16.mxu0 0
      %597 = vmatmul.mubr.bf16.gmra.mrb[0].mxu0 %v406
      %v598 = vpop.f32.mrb[0].mxu0
      %v599 = vadd.f32 0.0, %v598
      %v600 = vpop.f32.mrb[0].mxu0
      %v601 = vadd.f32 0.0, %v600
      %v602 = vpop.f32.mrb[0].mxu0
      %v603 = vadd.f32 0.0, %v602
      %v604 = vpop.f32.mrb[0].mxu0
      %v605 = vadd.f32 0.0, %v604
      %606 = vmatprep.mubr.bf16.mxu0 0
      %607 = vmatmul.mubr.bf16.gmra.mrb[0].mxu0 %v409
      %v608 = vpop.f32.mrb[0].mxu0
      %v609 = vadd.f32 0.0, %v608
      %v610 = vpop.f32.mrb[0].mxu0
      %v611 = vadd.f32 0.0, %v610
      %v612 = vpop.f32.mrb[0].mxu0
      %v613 = vadd.f32 0.0, %v612
      %v614 = vpop.f32.mrb[0].mxu0
      %v615 = vadd.f32 0.0, %v614
      %616 = vmatprep.mubr.bf16.mxu0 0
      %617 = vmatmul.mubr.bf16.gmra.mrb[0].mxu0 %v412
      %v618 = vpop.f32.mrb[0].mxu0
      %v619 = vadd.f32 0.0, %v618
      %v620 = vpop.f32.mrb[0].mxu0
      %v621 = vadd.f32 0.0, %v620
      %v622 = vpop.f32.mrb[0].mxu0
      %v623 = vadd.f32 0.0, %v622
      %v624 = vpop.f32.mrb[0].mxu0
      %v625 = vadd.f32 0.0, %v624
      %626 = vmatprep.mubr.bf16.mxu0 0
      %627 = vmatmul.mubr.bf16.gmra.mrb[0].mxu0 %v415
      %v628 = vpop.f32.mrb[0].mxu0
      %v629 = vadd.f32 0.0, %v628
      %v630 = vpop.f32.mrb[0].mxu0
      %v631 = vadd.f32 0.0, %v630
      %v632 = vpop.f32.mrb[0].mxu0
      %v633 = vadd.f32 0.0, %v632
      %v634 = vpop.f32.mrb[0].mxu0
      %v635 = vadd.f32 0.0, %v634
      %636 = vmatprep.mubr.bf16.mxu0 0
      %637 = vmatmul.mubr.bf16.gmra.mrb[0].mxu0 %v418
      %v638 = vpop.f32.mrb[0].mxu0
      %v639 = vadd.f32 0.0, %v638
      %v640 = vpop.f32.mrb[0].mxu0
      %v641 = vadd.f32 0.0, %v640
      %v642 = vpop.f32.mrb[0].mxu0
      %v643 = vadd.f32 0.0, %v642
      %v644 = vpop.f32.mrb[0].mxu0
      %v645 = vadd.f32 0.0, %v644
      %646 = vmatprep.mubr.bf16.mxu0 0
      %647 = vmatmul.mubr.bf16.gmra.mrb[0].mxu0 %v421
      %v648 = vpop.f32.mrb[0].mxu0
      %v649 = vadd.f32 0.0, %v648
      %v650 = vpop.f32.mrb[0].mxu0
      %v651 = vadd.f32 0.0, %v650
      %v652 = vpop.f32.mrb[0].mxu0
      %v653 = vadd.f32 0.0, %v652
      %v654 = vpop.f32.mrb[0].mxu0
      %v655 = vadd.f32 0.0, %v654
      %656 = vmatprep.mubr.bf16.mxu0 0
      %657 = vmatmul.mubr.bf16.gmra.mrb[0].mxu0 %v424
      %v658 = vpop.f32.mrb[0].mxu0
      %v659 = vadd.f32 0.0, %v658
      %v660 = vpop.f32.mrb[0].mxu0
      %v661 = vadd.f32 0.0, %v660
      %v662 = vpop.f32.mrb[0].mxu0
      %v663 = vadd.f32 0.0, %v662
      %v664 = vpop.f32.mrb[0].mxu0
      %v665 = vadd.f32 0.0, %v664
      %666 = vmatprep.mubr.bf16.mxu0 0
      %667 = vmatmul.mubr.bf16.gmra.mrb[0].mxu0 %v427
      %v668 = vpop.f32.mrb[0].mxu0
      %v669 = vadd.f32 0.0, %v668
      %v670 = vpop.f32.mrb[0].mxu0
      %v671 = vadd.f32 0.0, %v670
      %v672 = vpop.f32.mrb[0].mxu0
      %v673 = vadd.f32 0.0, %v672
      %v674 = vpop.f32.mrb[0].mxu0
      %v675 = vadd.f32 0.0, %v674
      %676 = vmatprep.mubr.bf16.mxu0 0
      %677 = vmatmul.mubr.bf16.gmra.mrb[0].mxu0 %v430
      %v678 = vpop.f32.mrb[0].mxu0
      %v679 = vadd.f32 0.0, %v678
      %v680 = vpop.f32.mrb[0].mxu0
      %v681 = vadd.f32 0.0, %v680
      %v682 = vpop.f32.mrb[0].mxu0
      %v683 = vadd.f32 0.0, %v682
      %v684 = vpop.f32.mrb[0].mxu0
      %v685 = vadd.f32 0.0, %v684
      %686 = vmatprep.mubr.bf16.mxu0 0
      %687 = vmatmul.mubr.bf16.gmra.mrb[0].mxu0 %v433
      %v688 = vpop.f32.mrb[0].mxu0
      %v689 = vadd.f32 0.0, %v688
      %v690 = vpop.f32.mrb[0].mxu0
      %v691 = vadd.f32 0.0, %v690
      %v692 = vpop.f32.mrb[0].mxu0
      %v693 = vadd.f32 0.0, %v692
      %v694 = vpop.f32.mrb[0].mxu0
      %v695 = vadd.f32 0.0, %v694
      %696 = vmatprep.mubr.bf16.mxu0 0
      %697 = vmatmul.mubr.bf16.gmra.mrb[0].mxu0 %v436
      %v698 = vpop.f32.mrb[0].mxu0
      %v699 = vadd.f32 0.0, %v698
      %v700 = vpop.f32.mrb[0].mxu0
      %v701 = vadd.f32 0.0, %v700
      %v702 = vpop.f32.mrb[0].mxu0
      %v703 = vadd.f32 0.0, %v702
      %v704 = vpop.f32.mrb[0].mxu0
      %v705 = vadd.f32 0.0, %v704
      %706 = vmatprep.mubr.bf16.mxu0 0
      %707 = vmatmul.mubr.bf16.gmra.mrb[0].mxu0 %v439
      %v708 = vpop.f32.mrb[0].mxu0
      %v709 = vadd.f32 0.0, %v708
      %v710 = vpop.f32.mrb[0].mxu0
      %v711 = vadd.f32 0.0, %v710
      %v712 = vpop.f32.mrb[0].mxu0
      %v713 = vadd.f32 0.0, %v712
      %v714 = vpop.f32.mrb[0].mxu0
      %v715 = vadd.f32 0.0, %v714
      %716 = vmatprep.mubr.bf16.mxu0 0
      %717 = vmatmul.mubr.bf16.gmra.mrb[0].mxu0 %v442
      %v718 = vpop.f32.mrb[0].mxu0
      %v719 = vadd.f32 0.0, %v718
      %v720 = vpop.f32.mrb[0].mxu0
      %v721 = vadd.f32 0.0, %v720
      %v722 = vpop.f32.mrb[0].mxu0
      %v723 = vadd.f32 0.0, %v722
      %v724 = vpop.f32.mrb[0].mxu0
      %v725 = vadd.f32 0.0, %v724
      %726 = vmatprep.mubr.bf16.mxu0 0
      %727 = vmatmul.mubr.bf16.gmra.mrb[0].mxu0 %v445
      %v728 = vpop.f32.mrb[0].mxu0
      %v729 = vadd.f32 0.0, %v728
      %v730 = vpop.f32.mrb[0].mxu0
      %v731 = vadd.f32 0.0, %v730
      %v732 = vpop.f32.mrb[0].mxu0
      %v733 = vadd.f32 0.0, %v732
      %v734 = vpop.f32.mrb[0].mxu0
      %v735 = vadd.f32 0.0, %v734
      %736 = vmatprep.mubr.bf16.mxu0 0
      %737 = vmatmul.mubr.bf16.gmra.mrb[0].mxu0 %v448
      %v738 = vpop.f32.mrb[0].mxu0
      %v739 = vadd.f32 0.0, %v738
      %v740 = vpop.f32.mrb[0].mxu0
      %v741 = vadd.f32 0.0, %v740
      %v742 = vpop.f32.mrb[0].mxu0
      %v743 = vadd.f32 0.0, %v742
      %v744 = vpop.f32.mrb[0].mxu0
      %v745 = vadd.f32 0.0, %v744
      %746 = vmatprep.mubr.bf16.mxu0 0
      %747 = vmatmul.mubr.bf16.gmra.mrb[0].mxu0 %v451
      %v748 = vpop.f32.mrb[0].mxu0
      %v749 = vadd.f32 0.0, %v748
      %v750 = vpop.f32.mrb[0].mxu0
      %v751 = vadd.f32 0.0, %v750
      %v752 = vpop.f32.mrb[0].mxu0
      %v753 = vadd.f32 0.0, %v752
      %v754 = vpop.f32.mrb[0].mxu0
      %v755 = vadd.f32 0.0, %v754
      %756 = vmatprep.mubr.bf16.mxu0 0
      %757 = vmatmul.mubr.bf16.gmra.mrb[0].mxu0 %v454
      %v758 = vpop.f32.mrb[0].mxu0
      %v759 = vadd.f32 0.0, %v758
      %v760 = vpop.f32.mrb[0].mxu0
      %v761 = vadd.f32 0.0, %v760
      %v762 = vpop.f32.mrb[0].mxu0
      %v763 = vadd.f32 0.0, %v762
      %v764 = vpop.f32.mrb[0].mxu0
      %v765 = vadd.f32 0.0, %v764
      %766 = vmatprep.mubr.bf16.mxu0 0
      %767 = vmatmul.mubr.bf16.gmra.mrb[0].mxu0 %v457
      %v768 = vpop.f32.mrb[0].mxu0
      %v769 = vadd.f32 0.0, %v768
      %v770 = vpop.f32.mrb[0].mxu0
      %v771 = vadd.f32 0.0, %v770
      %v772 = vpop.f32.mrb[0].mxu0
      %v773 = vadd.f32 0.0, %v772
      %v774 = vpop.f32.mrb[0].mxu0
      %v775 = vadd.f32 0.0, %v774
      %776 = vmatprep.mubr.bf16.mxu0 0
      %777 = vmatmul.mubr.bf16.gmra.mrb[0].mxu0 %v460
      %v778 = vpop.f32.mrb[0].mxu0
      %v779 = vadd.f32 0.0, %v778
      %v780 = vpop.f32.mrb[0].mxu0
      %v781 = vadd.f32 0.0, %v780
      %v782 = vpop.f32.mrb[0].mxu0
      %v783 = vadd.f32 0.0, %v782
      %v784 = vpop.f32.mrb[0].mxu0
      %v785 = vadd.f32 0.0, %v784
      %786 = vmatprep.mubr.bf16.mxu0 0
      %787 = vmatmul.mubr.bf16.gmra.mrb[0].mxu0 %v463
      %v788 = vpop.f32.mrb[0].mxu0
      %v789 = vadd.f32 0.0, %v788
      %v790 = vpop.f32.mrb[0].mxu0
      %v791 = vadd.f32 0.0, %v790
      %v792 = vpop.f32.mrb[0].mxu0
      %v793 = vadd.f32 0.0, %v792
      %v794 = vpop.f32.mrb[0].mxu0
      %v795 = vadd.f32 0.0, %v794
      %796 = vmatprep.mubr.bf16.mxu0 0
      %797 = vmatmul.mubr.bf16.gmra.mrb[0].mxu0 %v466
      %v798 = vpop.f32.mrb[0].mxu0
      %v799 = vadd.f32 0.0, %v798
      %v800 = vpop.f32.mrb[0].mxu0
      %v801 = vadd.f32 0.0, %v800
      %v802 = vpop.f32.mrb[0].mxu0
      %v803 = vadd.f32 0.0, %v802
      %v804 = vpop.f32.mrb[0].mxu0
      %v805 = vadd.f32 0.0, %v804
      %806 = vmatprep.mubr.bf16.mxu0 0
      %807 = vmatmul.mubr.bf16.gmra.mrb[0].mxu0 %v469
      %v808 = vpop.f32.mrb[0].mxu0
      %v809 = vadd.f32 0.0, %v808
      %v810 = vpop.f32.mrb[0].mxu0
      %v811 = vadd.f32 0.0, %v810
      %v812 = vpop.f32.mrb[0].mxu0
      %v813 = vadd.f32 0.0, %v812
      %v814 = vpop.f32.mrb[0].mxu0
      %v815 = vadd.f32 0.0, %v814
      %816 = vmatprep.mubr.bf16.mxu0 0
      %817 = vmatmul.mubr.bf16.gmra.mrb[0].mxu0 %v472
      %v818 = vpop.f32.mrb[0].mxu0
      %v819 = vadd.f32 0.0, %v818
      %v820 = vpop.f32.mrb[0].mxu0
      %v821 = vadd.f32 0.0, %v820
      %v822 = vpop.f32.mrb[0].mxu0
      %v823 = vadd.f32 0.0, %v822
      %v824 = vpop.f32.mrb[0].mxu0
      %v825 = vadd.f32 0.0, %v824
      %826 = vmatprep.mubr.bf16.mxu0 0
      %827 = vmatmul.mubr.bf16.gmra.mrb[0].mxu0 %v475
      %v828 = vpop.f32.mrb[0].mxu0
      %v829 = vadd.f32 0.0, %v828
      %v830 = vpop.f32.mrb[0].mxu0
      %v831 = vadd.f32 0.0, %v830
      %v832 = vpop.f32.mrb[0].mxu0
      %v833 = vadd.f32 0.0, %v832
      %v834 = vpop.f32.mrb[0].mxu0
      %v835 = vadd.f32 0.0, %v834
      %836 = vdwg.mxu0
      %v837 = vpack.c.bf16 %v523, %v519
      %v838 = vpack.c.bf16 %v525, %v521
      %v839 = vpack.c.bf16 %v533, %v529
      %v840 = vpack.c.bf16 %v535, %v531
      %v841 = vpack.c.bf16 %v543, %v539
      %v842 = vpack.c.bf16 %v545, %v541
      %v843 = vpack.c.bf16 %v553, %v549
      %v844 = vpack.c.bf16 %v555, %v551
      %v845 = vpack.c.bf16 %v563, %v559
      %v846 = vpack.c.bf16 %v565, %v561
      %v847 = vpack.c.bf16 %v573, %v569
      %v848 = vpack.c.bf16 %v575, %v571
      %v849 = vpack.c.bf16 %v583, %v579
      %v850 = vpack.c.bf16 %v585, %v581
      %v851 = vpack.c.bf16 %v593, %v589
      %v852 = vpack.c.bf16 %v595, %v591
      %v853 = vpack.c.bf16 %v603, %v599
      %v854 = vpack.c.bf16 %v605, %v601
      %v855 = vpack.c.bf16 %v613, %v609
      %v856 = vpack.c.bf16 %v615, %v611
      %v857 = vpack.c.bf16 %v623, %v619
      %v858 = vpack.c.bf16 %v625, %v621
      %v859 = vpack.c.bf16 %v633, %v629
      %v860 = vpack.c.bf16 %v635, %v631
      %v861 = vpack.c.bf16 %v643, %v639
      %v862 = vpack.c.bf16 %v645, %v641
      %v863 = vpack.c.bf16 %v653, %v649
      %v864 = vpack.c.bf16 %v655, %v651
      %v865 = vpack.c.bf16 %v663, %v659
      %v866 = vpack.c.bf16 %v665, %v661
      %v867 = vpack.c.bf16 %v673, %v669
      %v868 = vpack.c.bf16 %v675, %v671
      %v869 = vpack.c.bf16 %v683, %v679
      %v870 = vpack.c.bf16 %v685, %v681
      %v871 = vpack.c.bf16 %v693, %v689
      %v872 = vpack.c.bf16 %v695, %v691
      %v873 = vpack.c.bf16 %v703, %v699
      %v874 = vpack.c.bf16 %v705, %v701
      %v875 = vpack.c.bf16 %v713, %v709
      %v876 = vpack.c.bf16 %v715, %v711
      %v877 = vpack.c.bf16 %v723, %v719
      %v878 = vpack.c.bf16 %v725, %v721
      %v879 = vpack.c.bf16 %v733, %v729
      %v880 = vpack.c.bf16 %v735, %v731
      %v881 = vpack.c.bf16 %v743, %v739
      %v882 = vpack.c.bf16 %v745, %v741
      %v883 = vpack.c.bf16 %v753, %v749
      %v884 = vpack.c.bf16 %v755, %v751
      %v885 = vpack.c.bf16 %v763, %v759
      %v886 = vpack.c.bf16 %v765, %v761
      %v887 = vpack.c.bf16 %v773, %v769
      %v888 = vpack.c.bf16 %v775, %v771
      %v889 = vpack.c.bf16 %v783, %v779
      %v890 = vpack.c.bf16 %v785, %v781
      %v891 = vpack.c.bf16 %v793, %v789
      %v892 = vpack.c.bf16 %v795, %v791
      %v893 = vpack.c.bf16 %v803, %v799
      %v894 = vpack.c.bf16 %v805, %v801
      %v895 = vpack.c.bf16 %v813, %v809
      %v896 = vpack.c.bf16 %v815, %v811
      %v897 = vpack.c.bf16 %v823, %v819
      %v898 = vpack.c.bf16 %v825, %v821
      %v899 = vpack.c.bf16 %v833, %v829
      %v900 = vpack.c.bf16 %v835, %v831
      %v965 = vunpack.c.l.b16 %v837
      %v966 = vunpack.c.l.b16 %v838
      %v967 = vunpack.c.h.b16 %v837
      %v968 = vunpack.c.h.b16 %v838
      %v969 = vunpack.c.l.b16 %v839
      %v970 = vunpack.c.l.b16 %v840
      %v971 = vunpack.c.h.b16 %v839
      %v972 = vunpack.c.h.b16 %v840
      %v973 = vunpack.c.l.b16 %v841
      %v974 = vunpack.c.l.b16 %v842
      %v975 = vunpack.c.h.b16 %v841
      %v976 = vunpack.c.h.b16 %v842
      %v977 = vunpack.c.l.b16 %v843
      %v978 = vunpack.c.l.b16 %v844
      %v979 = vunpack.c.h.b16 %v843
      %v980 = vunpack.c.h.b16 %v844
      %v981 = vunpack.c.l.b16 %v845
      %v982 = vunpack.c.l.b16 %v846
      %v983 = vunpack.c.h.b16 %v845
      %v984 = vunpack.c.h.b16 %v846
      %v985 = vunpack.c.l.b16 %v847
      %v986 = vunpack.c.l.b16 %v848
      %v987 = vunpack.c.h.b16 %v847
      %v988 = vunpack.c.h.b16 %v848
      %v989 = vunpack.c.l.b16 %v849
      %v990 = vunpack.c.l.b16 %v850
      %v991 = vunpack.c.h.b16 %v849
      %v992 = vunpack.c.h.b16 %v850
      %v993 = vunpack.c.l.b16 %v851
      %v994 = vunpack.c.l.b16 %v852
      %v995 = vunpack.c.h.b16 %v851
      %v996 = vunpack.c.h.b16 %v852
      %v997 = vunpack.c.l.b16 %v853
      %v998 = vunpack.c.l.b16 %v854
      %v999 = vunpack.c.h.b16 %v853
      %v1000 = vunpack.c.h.b16 %v854
      %v1001 = vunpack.c.l.b16 %v855
      %v1002 = vunpack.c.l.b16 %v856
      %v1003 = vunpack.c.h.b16 %v855
      %v1004 = vunpack.c.h.b16 %v856
      %v1005 = vunpack.c.l.b16 %v857
      %v1006 = vunpack.c.l.b16 %v858
      %v1007 = vunpack.c.h.b16 %v857
      %v1008 = vunpack.c.h.b16 %v858
      %v1009 = vunpack.c.l.b16 %v859
      %v1010 = vunpack.c.l.b16 %v860
      %v1011 = vunpack.c.h.b16 %v859
      %v1012 = vunpack.c.h.b16 %v860
      %v1013 = vunpack.c.l.b16 %v861
      %v1014 = vunpack.c.l.b16 %v862
      %v1015 = vunpack.c.h.b16 %v861
      %v1016 = vunpack.c.h.b16 %v862
      %v1017 = vunpack.c.l.b16 %v863
      %v1018 = vunpack.c.l.b16 %v864
      %v1019 = vunpack.c.h.b16 %v863
      %v1020 = vunpack.c.h.b16 %v864
      %v1021 = vunpack.c.l.b16 %v865
      %v1022 = vunpack.c.l.b16 %v866
      %v1023 = vunpack.c.h.b16 %v865
      %v1024 = vunpack.c.h.b16 %v866
      %v1025 = vunpack.c.l.b16 %v867
      %v1026 = vunpack.c.l.b16 %v868
      %v1027 = vunpack.c.h.b16 %v867
      %v1028 = vunpack.c.h.b16 %v868
      %v1029 = vunpack.c.l.b16 %v869
      %v1030 = vunpack.c.l.b16 %v870
      %v1031 = vunpack.c.h.b16 %v869
      %v1032 = vunpack.c.h.b16 %v870
      %v1033 = vunpack.c.l.b16 %v871
      %v1034 = vunpack.c.l.b16 %v872
      %v1035 = vunpack.c.h.b16 %v871
      %v1036 = vunpack.c.h.b16 %v872
      %v1037 = vunpack.c.l.b16 %v873
      %v1038 = vunpack.c.l.b16 %v874
      %v1039 = vunpack.c.h.b16 %v873
      %v1040 = vunpack.c.h.b16 %v874
      %v1041 = vunpack.c.l.b16 %v875
      %v1042 = vunpack.c.l.b16 %v876
      %v1043 = vunpack.c.h.b16 %v875
      %v1044 = vunpack.c.h.b16 %v876
      %v1045 = vunpack.c.l.b16 %v877
      %v1046 = vunpack.c.l.b16 %v878
      %v1047 = vunpack.c.h.b16 %v877
      %v1048 = vunpack.c.h.b16 %v878
      %v1049 = vunpack.c.l.b16 %v879
      %v1050 = vunpack.c.l.b16 %v880
      %v1051 = vunpack.c.h.b16 %v879
      %v1052 = vunpack.c.h.b16 %v880
      %v1053 = vunpack.c.l.b16 %v881
      %v1054 = vunpack.c.l.b16 %v882
      %v1055 = vunpack.c.h.b16 %v881
      %v1056 = vunpack.c.h.b16 %v882
      %v1057 = vunpack.c.l.b16 %v883
      %v1058 = vunpack.c.l.b16 %v884
      %v1059 = vunpack.c.h.b16 %v883
      %v1060 = vunpack.c.h.b16 %v884
      %v1061 = vunpack.c.l.b16 %v885
      %v1062 = vunpack.c.l.b16 %v886
      %v1063 = vunpack.c.h.b16 %v885
      %v1064 = vunpack.c.h.b16 %v886
      %v1065 = vunpack.c.l.b16 %v887
      %v1066 = vunpack.c.l.b16 %v888
      %v1067 = vunpack.c.h.b16 %v887
      %v1068 = vunpack.c.h.b16 %v888
      %v1069 = vunpack.c.l.b16 %v889
      %v1070 = vunpack.c.l.b16 %v890
      %v1071 = vunpack.c.h.b16 %v889
      %v1072 = vunpack.c.h.b16 %v890
      %v1073 = vunpack.c.l.b16 %v891
      %v1074 = vunpack.c.l.b16 %v892
      %v1075 = vunpack.c.h.b16 %v891
      %v1076 = vunpack.c.h.b16 %v892
      %v1077 = vunpack.c.l.b16 %v893
      %v1078 = vunpack.c.l.b16 %v894
      %v1079 = vunpack.c.h.b16 %v893
      %v1080 = vunpack.c.h.b16 %v894
      %v1081 = vunpack.c.l.b16 %v895
      %v1082 = vunpack.c.l.b16 %v896
      %v1083 = vunpack.c.h.b16 %v895
      %v1084 = vunpack.c.h.b16 %v896
      %v1085 = vunpack.c.l.b16 %v897
      %v1086 = vunpack.c.l.b16 %v898
      %v1087 = vunpack.c.h.b16 %v897
      %v1088 = vunpack.c.h.b16 %v898
      %v1089 = vunpack.c.l.b16 %v899
      %v1090 = vunpack.c.l.b16 %v900
      %v1091 = vunpack.c.h.b16 %v899
      %v1092 = vunpack.c.h.b16 %v900
      %v1093 = vpack.c.b16 %v966, %v965
      %v1094 = vpack.c.b16 %v968, %v967
      %v1095 = vpack.c.b16 %v970, %v969
      %v1096 = vpack.c.b16 %v972, %v971
      %v1097 = vpack.c.b16 %v974, %v973
      %v1098 = vpack.c.b16 %v976, %v975
      %v1099 = vpack.c.b16 %v978, %v977
      %v1100 = vpack.c.b16 %v980, %v979
      %v1101 = vpack.c.b16 %v982, %v981
      %v1102 = vpack.c.b16 %v984, %v983
      %v1103 = vpack.c.b16 %v986, %v985
      %v1104 = vpack.c.b16 %v988, %v987
      %v1105 = vpack.c.b16 %v990, %v989
      %v1106 = vpack.c.b16 %v992, %v991
      %v1107 = vpack.c.b16 %v994, %v993
      %v1108 = vpack.c.b16 %v996, %v995
      %v1109 = vpack.c.b16 %v998, %v997
      %v1110 = vpack.c.b16 %v1000, %v999
      %v1111 = vpack.c.b16 %v1002, %v1001
      %v1112 = vpack.c.b16 %v1004, %v1003
      %v1113 = vpack.c.b16 %v1006, %v1005
      %v1114 = vpack.c.b16 %v1008, %v1007
      %v1115 = vpack.c.b16 %v1010, %v1009
      %v1116 = vpack.c.b16 %v1012, %v1011
      %v1117 = vpack.c.b16 %v1014, %v1013
      %v1118 = vpack.c.b16 %v1016, %v1015
      %v1119 = vpack.c.b16 %v1018, %v1017
      %v1120 = vpack.c.b16 %v1020, %v1019
      %v1121 = vpack.c.b16 %v1022, %v1021
      %v1122 = vpack.c.b16 %v1024, %v1023
      %v1123 = vpack.c.b16 %v1026, %v1025
      %v1124 = vpack.c.b16 %v1028, %v1027
      %v1125 = vpack.c.b16 %v1030, %v1029
      %v1126 = vpack.c.b16 %v1032, %v1031
      %v1127 = vpack.c.b16 %v1034, %v1033
      %v1128 = vpack.c.b16 %v1036, %v1035
      %v1129 = vpack.c.b16 %v1038, %v1037
      %v1130 = vpack.c.b16 %v1040, %v1039
      %v1131 = vpack.c.b16 %v1042, %v1041
      %v1132 = vpack.c.b16 %v1044, %v1043
      %v1133 = vpack.c.b16 %v1046, %v1045
      %v1134 = vpack.c.b16 %v1048, %v1047
      %v1135 = vpack.c.b16 %v1050, %v1049
      %v1136 = vpack.c.b16 %v1052, %v1051
      %v1137 = vpack.c.b16 %v1054, %v1053
      %v1138 = vpack.c.b16 %v1056, %v1055
      %v1139 = vpack.c.b16 %v1058, %v1057
      %v1140 = vpack.c.b16 %v1060, %v1059
      %v1141 = vpack.c.b16 %v1062, %v1061
      %v1142 = vpack.c.b16 %v1064, %v1063
      %v1143 = vpack.c.b16 %v1066, %v1065
      %v1144 = vpack.c.b16 %v1068, %v1067
      %v1145 = vpack.c.b16 %v1070, %v1069
      %v1146 = vpack.c.b16 %v1072, %v1071
      %v1147 = vpack.c.b16 %v1074, %v1073
      %v1148 = vpack.c.b16 %v1076, %v1075
      %v1149 = vpack.c.b16 %v1078, %v1077
      %v1150 = vpack.c.b16 %v1080, %v1079
      %v1151 = vpack.c.b16 %v1082, %v1081
      %v1152 = vpack.c.b16 %v1084, %v1083
      %v1153 = vpack.c.b16 %v1086, %v1085
      %v1154 = vpack.c.b16 %v1088, %v1087
      %v1155 = vpack.c.b16 %v1090, %v1089
      %v1156 = vpack.c.b16 %v1092, %v1091
      %1221 = vst [vmem:[%s147] sm:$0xff] %v1093
      %1222 = vst [vmem:[%s147 + $0x8] sm:$0xff] %v1094
      %1223 = vst [vmem:[%s147 + $0x10] sm:$0xff] %v1095
      %1224 = vst [vmem:[%s147 + $0x18] sm:$0xff] %v1096
      %1225 = vst [vmem:[%s147 + $0x20] sm:$0xff] %v1097
      %1226 = vst [vmem:[%s147 + $0x28] sm:$0xff] %v1098
      %1227 = vst [vmem:[%s147 + $0x30] sm:$0xff] %v1099
      %1228 = vst [vmem:[%s147 + $0x38] sm:$0xff] %v1100
      %1229 = vst [vmem:[%s147 + $0x40] sm:$0xff] %v1101
      %1230 = vst [vmem:[%s147 + $0x48] sm:$0xff] %v1102
      %1231 = vst [vmem:[%s147 + $0x50] sm:$0xff] %v1103
      %1232 = vst [vmem:[%s147 + $0x58] sm:$0xff] %v1104
      %1233 = vst [vmem:[%s147 + $0x60] sm:$0xff] %v1105
      %1234 = vst [vmem:[%s147 + $0x68] sm:$0xff] %v1106
      %1235 = vst [vmem:[%s147 + $0x70] sm:$0xff] %v1107
      %1236 = vst [vmem:[%s147 + $0x78] sm:$0xff] %v1108
      %1237 = vst [vmem:[%s147 + $0x80] sm:$0xff] %v1109
      %1238 = vst [vmem:[%s147 + $0x88] sm:$0xff] %v1110
      %1239 = vst [vmem:[%s147 + $0x90] sm:$0xff] %v1111
      %1240 = vst [vmem:[%s147 + $0x98] sm:$0xff] %v1112
      %1241 = vst [vmem:[%s147 + $0xa0] sm:$0xff] %v1113
      %1242 = vst [vmem:[%s147 + $0xa8] sm:$0xff] %v1114
      %1243 = vst [vmem:[%s147 + $0xb0] sm:$0xff] %v1115
      %1244 = vst [vmem:[%s147 + $0xb8] sm:$0xff] %v1116
      %1245 = vst [vmem:[%s147 + $0xc0] sm:$0xff] %v1117
      %1246 = vst [vmem:[%s147 + $0xc8] sm:$0xff] %v1118
      %1247 = vst [vmem:[%s147 + $0xd0] sm:$0xff] %v1119
      %1248 = vst [vmem:[%s147 + $0xd8] sm:$0xff] %v1120
      %1249 = vst [vmem:[%s147 + $0xe0] sm:$0xff] %v1121
      %1250 = vst [vmem:[%s147 + $0xe8] sm:$0xff] %v1122
      %1251 = vst [vmem:[%s147 + $0xf0] sm:$0xff] %v1123
      %1252 = vst [vmem:[%s147 + $0xf8] sm:$0xff] %v1124
      %1253 = vst [vmem:[%s147 + $0x100] sm:$0xff] %v1125
      %1254 = vst [vmem:[%s147 + $0x108] sm:$0xff] %v1126
      %1255 = vst [vmem:[%s147 + $0x110] sm:$0xff] %v1127
      %1256 = vst [vmem:[%s147 + $0x118] sm:$0xff] %v1128
      %1257 = vst [vmem:[%s147 + $0x120] sm:$0xff] %v1129
      %1258 = vst [vmem:[%s147 + $0x128] sm:$0xff] %v1130
      %1259 = vst [vmem:[%s147 + $0x130] sm:$0xff] %v1131
      %1260 = vst [vmem:[%s147 + $0x138] sm:$0xff] %v1132
      %1261 = vst [vmem:[%s147 + $0x140] sm:$0xff] %v1133
      %1262 = vst [vmem:[%s147 + $0x148] sm:$0xff] %v1134
      %1263 = vst [vmem:[%s147 + $0x150] sm:$0xff] %v1135
      %1264 = vst [vmem:[%s147 + $0x158] sm:$0xff] %v1136
      %1265 = vst [vmem:[%s147 + $0x160] sm:$0xff] %v1137
      %1266 = vst [vmem:[%s147 + $0x168] sm:$0xff] %v1138
      %1267 = vst [vmem:[%s147 + $0x170] sm:$0xff] %v1139
      %1268 = vst [vmem:[%s147 + $0x178] sm:$0xff] %v1140
      %1269 = vst [vmem:[%s147 + $0x180] sm:$0xff] %v1141
      %1270 = vst [vmem:[%s147 + $0x188] sm:$0xff] %v1142
      %1271 = vst [vmem:[%s147 + $0x190] sm:$0xff] %v1143
      %1272 = vst [vmem:[%s147 + $0x198] sm:$0xff] %v1144
      %1273 = vst [vmem:[%s147 + $0x1a0] sm:$0xff] %v1145
      %1274 = vst [vmem:[%s147 + $0x1a8] sm:$0xff] %v1146
      %1275 = vst [vmem:[%s147 + $0x1b0] sm:$0xff] %v1147
      %1276 = vst [vmem:[%s147 + $0x1b8] sm:$0xff] %v1148
      %1277 = vst [vmem:[%s147 + $0x1c0] sm:$0xff] %v1149
      %1278 = vst [vmem:[%s147 + $0x1c8] sm:$0xff] %v1150
      %1279 = vst [vmem:[%s147 + $0x1d0] sm:$0xff] %v1151
      %1280 = vst [vmem:[%s147 + $0x1d8] sm:$0xff] %v1152
      %1281 = vst [vmem:[%s147 + $0x1e0] sm:$0xff] %v1153
      %1282 = vst [vmem:[%s147 + $0x1e8] sm:$0xff] %v1154
      %1283 = vst [vmem:[%s147 + $0x1f0] sm:$0xff] %v1155
      %1284 = vst [vmem:[%s147 + $0x1f8] sm:$0xff] %v1156
      %s1285 = smul.u32 64, %s13
      %p1286 = scmp.lt.s32.totalorder %s1285, 127
      %s1287 = scalar_select %p1286, %s1285, 127
      %s1288 = smul.addr %s1287, 2
      %s1289 = smul.addr %s1288, 4
      %s1290 = scalar_lea.vmem %s2, %s1289
      // Predicated region
      $region29: #{generator_forward.2} parent=27 // pred_check
        %p1291 = pneg %p78
      $region30: #{generator_forward.2} parent=27 // pred_check_branch
        %1293 = sbr.rel (%p1291) target = $region32
      $region31: #{generator_forward.2} parent=27 // pred_region
        %s1294 = smul.u32 64, %s13
      $region32: #{generator_forward.2} parent=27 // pred_fallthru
        _
    $region28: #{generator_forward.2} parent=5 // pred_fallthru
      _
    %p1295 = scmp.le.s32.totalorder 2, %s8
    // Predicated region
    $region33: #{generator_forward.2} parent=5 // pred_check
      %p1296 = pneg %p1295
    $region34: #{generator_forward.2} parent=5 // pred_check_branch
      %1298 = sbr.rel (%p1296) target = $region36
    $region35: #{generator_forward.2} parent=5 // pred_region
      %s1299 = ssub.s32 %s8, 2
      // Predicated region
      $region37: #{generator_forward.2} parent=35 // pred_check
        %p1300 = pneg %p84
      $region38: #{generator_forward.2} parent=35 // pred_check_branch
        %1302 = sbr.rel (%p1300) target = $region40
      $region39: #{generator_forward.2} parent=35 // pred_region
        %s1303 = smul.u32 64, %s14
        %p1304 = scmp.lt.s32.totalorder %s1303, 127
        %s1305 = scalar_select %p1304, %s1303, 127
        %s1306 = smul.addr %s1305, 2
        %s1307 = smul.addr %s1306, 4
        %s1308 = scalar_lea.vmem %s2, %s1307
      $region40: #{generator_forward.2} parent=35 // pred_fallthru
        _
    $region36: #{generator_forward.2} parent=5 // pred_fallthru
      _
  $region6: #{generator_forward.2} parent=0 // loop_footer
    %s12 = sadd.s32 1, %s8
  $region7: #{generator_forward.2} parent=0 // loop_footer_branch
    %7 = sbr.rel target = $region3
  $region8: #{generator_forward.2} parent=0 // loop_exit
    _

// kernel: generator_forward.3
$region0: #{generator_forward.3}
  #allocation0 [shape = 'u32[]', space=smem, size = 0x4, offset = 0x4, fixed_abs, tag = 'smem constant byte address 0x4 - core index']
  #allocation1 [shape = 'u32[144,128]{1,0:T(1,128)}', space=vmem, size = 0x12000, scoped, tag = 'internal scratch']
  %s0 = inlined_call_operand.vmem [shape: bf16[4096,8], index: 0, kind: input, shape index: {}]
  %s1 = inlined_call_operand.vmem [shape: bf16[8,128], index: 1, kind: input, shape index: {}]
  %s2 = inlined_call_operand.hbm [shape: bf16[4096,128], index: 2, kind: output, shape index: {}]
  %s3 = sld [smem:[#allocation0]]
  $region41: #{generator_forward.3} parent=0
    _
  %s5 = ssub.s32 1, %s3
  %s6 = scalar_select 0, %s5, %s3
  $region1: #{generator_forward.3} parent=0
    #allocation2 [shape = 'u8[1048576]{0}', space=vmem, size = 0x100000, scoped, tag = 'output window, operand 0']
    #allocation3 [shape = 's32[2]{0}', space=sflag, size = 0x8, scoped, tag = 'scoped memory for generator_forward.3']
    %7 = vsyncpa [#allocation3], 0
    %s8 = scalar_lea.sflag [#allocation3], 1
    %9 = vsyncpa %s8, 0
    loop: start=0, step=1, limit=4
    $region2: #{generator_forward.3} parent=1 // loop_pre_header
      _
    $region3: #{generator_forward.3} parent=1 // loop_header
      %s11 = sphi 0, %s15
      %p12 = scmp.ge.s32.totalorder %s11, 4
      %s21 = sphi 0, %s23
      %s24 = sphi 0, %s21
      %s25 = sphi 0, %s24
      %s41 = sphi 0, %s25
      %s45 = sphi 0, %s45
      %s47 = sphi 0, %s45
      %s48 = sphi 0, %s47
      %s62 = sphi 0, %s48
      %s68 = sphi 0, %s70
      %s71 = sphi 0, %s68
      %s72 = sphi 0, %s71
      %s88 = sphi 0, %s72
    $region4: #{generator_forward.3} parent=1 // loop_header_branch
      %14 = sbr.rel (%p12) target = $region8
    $region5: #{generator_forward.3} parent=1 // loop_body
      %s16 = ssub.s32 %s11, 1
      %s17 = ssub.s32 %s11, 2
      %s18 = sadd.s32 %s11, 1
      %s19 = ssub.s32 %s11, %s18
      %p20 = scmp.eq.s32.totalorder %s19, 0
      %s22 = sadd.s32 %s21, 1
      %s23 = scalar_select %p20, %s21, %s22
      %p26 = pneg %p20
      %p27 = scmp.eq.s32.totalorder %s11, 1
      %p28 = por %p26, %p27
      %p29 = scmp.ne.s32.totalorder %s21, %s24
      %p30 = scmp.eq.s32.totalorder %s11, 0
      %p31 = por %p29, %p30
      %p32 = scmp.ne.s32.totalorder %s21, %s24
      %p33 = scmp.eq.s32.totalorder %s16, 1
      %p34 = por %p32, %p33
      %p35 = scmp.ne.s32.totalorder %s24, %s25
      %p36 = scmp.eq.s32.totalorder %s16, 0
      %p37 = por %p35, %p36
      %p38 = scmp.ne.s32.totalorder %s24, %s25
      %p39 = scmp.eq.s32.totalorder %s17, 1
      %p40 = por %p38, %p39
      %p42 = scmp.ne.s32.totalorder %s25, %s41
      %p43 = scmp.eq.s32.totalorder %s17, 0
      %p44 = por %p42, %p43
      %s46 = sadd.s32 %s45, 1
      %p49 = scmp.eq.s32.totalorder %s11, 1
      %p50 = scmp.ne.s32.totalorder %s45, %s47
      %p51 = scmp.eq.s32.totalorder %s11, 0
      %p52 = por %p50, %p51
      %p53 = scmp.ne.s32.totalorder %s45, %s47
      %p54 = scmp.eq.s32.totalorder %s16, 1
      %p55 = por %p53, %p54
      %p56 = scmp.ne.s32.totalorder %s47, %s48
      %p57 = scmp.eq.s32.totalorder %s16, 0
      %p58 = por %p56, %p57
      %p59 = scmp.ne.s32.totalorder %s47, %s48
      %p60 = scmp.eq.s32.totalorder %s17, 1
      %p61 = por %p59, %p60
      %p63 = scmp.ne.s32.totalorder %s48, %s62
      %p64 = scmp.eq.s32.totalorder %s17, 0
      %p65 = por %p63, %p64
      %s66 = ssub.s32 %s11, %s18
      %p67 = scmp.eq.s32.totalorder %s66, 0
      %s69 = sadd.s32 %s68, 1
      %s70 = scalar_select %p67, %s68, %s69
      %p73 = pneg %p67
      %p74 = scmp.eq.s32.totalorder %s11, 1
      %p75 = por %p73, %p74
      %p76 = scmp.ne.s32.totalorder %s68, %s71
      %p77 = scmp.eq.s32.totalorder %s11, 0
      %p78 = por %p76, %p77
      %p79 = scmp.ne.s32.totalorder %s68, %s71
      %p80 = scmp.eq.s32.totalorder %s16, 1
      %p81 = por %p79, %p80
      %p82 = scmp.ne.s32.totalorder %s71, %s72
      %p83 = scmp.eq.s32.totalorder %s16, 0
      %p84 = por %p82, %p83
      %p85 = scmp.ne.s32.totalorder %s71, %s72
      %p86 = scmp.eq.s32.totalorder %s17, 1
      %p87 = por %p85, %p86
      %p89 = scmp.ne.s32.totalorder %s72, %s88
      %p90 = scmp.eq.s32.totalorder %s17, 0
      %p91 = por %p89, %p90
      %p92 = scmp.le.s32.totalorder 1, %s11
      %p93 = scmp.lt.s32.totalorder %s11, 3
      %p94 = pnand %p92, %p93
      %p95 = pneg %p94
      // Predicated region
      $region9: #{generator_forward.3} parent=5 // pred_check
        _
      $region10: #{generator_forward.3} parent=5 // pred_check_branch
        %97 = sbr.rel (%p94) target = $region12
      $region11: #{generator_forward.3} parent=5 // pred_region
        %s98 = ssub.s32 %s11, 1
        // Predicated region
        $region13: #{generator_forward.3} parent=11 // pred_check
          %p99 = pneg %p58
        $region14: #{generator_forward.3} parent=11 // pred_check_branch
          %101 = sbr.rel (%p99) target = $region16
        $region15: #{generator_forward.3} parent=11 // pred_region
          _
        $region16: #{generator_forward.3} parent=11 // pred_fallthru
          _
      $region12: #{generator_forward.3} parent=5 // pred_fallthru
        _
      %p102 = scmp.lt.s32.totalorder %s11, 2
      // Predicated region
      $region17: #{generator_forward.3} parent=5 // pred_check
        %p103 = pneg %p102
      $region18: #{generator_forward.3} parent=5 // pred_check_branch
        %105 = sbr.rel (%p103) target = $region20
      $region19: #{generator_forward.3} parent=5 // pred_region
        // Predicated region
        $region21: #{generator_forward.3} parent=19 // pred_check
          %p106 = pneg %p31
        $region22: #{generator_forward.3} parent=19 // pred_check_branch
          %108 = sbr.rel (%p106) target = $region24
        $region23: #{generator_forward.3} parent=19 // pred_region
          %s109 = smul.u32 256, %s11
          %p110 = scmp.lt.s32.totalorder %s109, 511
          %s111 = scalar_select %p110, %s109, 511
          %s112 = smul.addr %s111, 4
          %s113 = scalar_lea.vmem %s0, %s112
          %s114 = smul.u32 256, %s11
        $region24: #{generator_forward.3} parent=19 // pred_fallthru
          _
      $region20: #{generator_forward.3} parent=5 // pred_fallthru
        _
      %p115 = scmp.le.s32.totalorder 1, %s11
      %p116 = scmp.lt.s32.totalorder %s11, 3
      %p117 = pnand %p115, %p116
      %p118 = pneg %p117
      // Predicated region
      $region25: #{generator_forward.3} parent=5 // pred_check
        _
      $region26: #{generator_forward.3} parent=5 // pred_check_branch
        %120 = sbr.rel (%p117) target = $region28
      $region27: #{generator_forward.3} parent=5 // pred_region
        %s121 = ssub.s32 %s11, 1
        %s122 = smul.u32 256, %s16
        %p123 = scmp.lt.s32.totalorder %s122, 511
        %s124 = scalar_select %p123, %s122, 511
        %s125 = smul.addr %s124, 4
        %s126 = scalar_lea.vmem %s0, %s125
        %p127 = pneg %p37
        %p128 = pneg %p34
        %p129 = pneg %p58
        %p130 = pneg %p55
        %p131 = pneg %p84
        %p132 = pneg %p81
        %s133 = sand.u32 %s71, 1
        %s134 = scalar_lea.sflag [#allocation3], %s133
        %s135 = sand.u32 %s71, 1
        %s136 = smul.addr %s135, 1024
        %s137 = scalar_lea.vmem [#allocation2], %s136
        %s138 = smul.u32 256, %s16
        %p139 = scmp.lt.s32.totalorder %s138, 511
        %s140 = scalar_select %p139, %s138, 511
        %s141 = smul.addr %s140, 4
        %s142 = scalar_lea.vmem %s0, %s141
        %s143 = smul.u32 256, %s16
        %s144 = smul.u32 256, %s16
        %v146 = vld [vmem:[%s142] sm:$0xf]
        %v147 = vld [vmem:[%s142 + $0x4] sm:$0xf]
        %v148 = vld [vmem:[%s142 + $0x8] sm:$0xf]
        %v149 = vld [vmem:[%s142 + $0xc] sm:$0xf]
        %v150 = vld [vmem:[%s142 + $0x10] sm:$0xf]
        %v151 = vld [vmem:[%s142 + $0x14] sm:$0xf]
        %v152 = vld [vmem:[%s142 + $0x18] sm:$0xf]
        %v153 = vld [vmem:[%s142 + $0x1c] sm:$0xf]
        %v154 = vld [vmem:[%s142 + $0x20] sm:$0xf]
        %v155 = vld [vmem:[%s142 + $0x24] sm:$0xf]
        %v156 = vld [vmem:[%s142 + $0x28] sm:$0xf]
        %v157 = vld [vmem:[%s142 + $0x2c] sm:$0xf]
        %v158 = vld [vmem:[%s142 + $0x30] sm:$0xf]
        %v159 = vld [vmem:[%s142 + $0x34] sm:$0xf]
        %v160 = vld [vmem:[%s142 + $0x38] sm:$0xf]
        %v161 = vld [vmem:[%s142 + $0x3c] sm:$0xf]
        %v162 = vld [vmem:[%s142 + $0x40] sm:$0xf]
        %v163 = vld [vmem:[%s142 + $0x44] sm:$0xf]
        %v164 = vld [vmem:[%s142 + $0x48] sm:$0xf]
        %v165 = vld [vmem:[%s142 + $0x4c] sm:$0xf]
        %v166 = vld [vmem:[%s142 + $0x50] sm:$0xf]
        %v167 = vld [vmem:[%s142 + $0x54] sm:$0xf]
        %v168 = vld [vmem:[%s142 + $0x58] sm:$0xf]
        %v169 = vld [vmem:[%s142 + $0x5c] sm:$0xf]
        %v170 = vld [vmem:[%s142 + $0x60] sm:$0xf]
        %v171 = vld [vmem:[%s142 + $0x64] sm:$0xf]
        %v172 = vld [vmem:[%s142 + $0x68] sm:$0xf]
        %v173 = vld [vmem:[%s142 + $0x6c] sm:$0xf]
        %v174 = vld [vmem:[%s142 + $0x70] sm:$0xf]
        %v175 = vld [vmem:[%s142 + $0x74] sm:$0xf]
        %v176 = vld [vmem:[%s142 + $0x78] sm:$0xf]
        %v177 = vld [vmem:[%s142 + $0x7c] sm:$0xf]
        %v178 = vld [vmem:[%s142 + $0x80] sm:$0xf]
        %v179 = vld [vmem:[%s142 + $0x84] sm:$0xf]
        %v180 = vld [vmem:[%s142 + $0x88] sm:$0xf]
        %v181 = vld [vmem:[%s142 + $0x8c] sm:$0xf]
        %v182 = vld [vmem:[%s142 + $0x90] sm:$0xf]
        %v183 = vld [vmem:[%s142 + $0x94] sm:$0xf]
        %v184 = vld [vmem:[%s142 + $0x98] sm:$0xf]
        %v185 = vld [vmem:[%s142 + $0x9c] sm:$0xf]
        %v186 = vld [vmem:[%s142 + $0xa0] sm:$0xf]
        %v187 = vld [vmem:[%s142 + $0xa4] sm:$0xf]
        %v188 = vld [vmem:[%s142 + $0xa8] sm:$0xf]
        %v189 = vld [vmem:[%s142 + $0xac] sm:$0xf]
        %v190 = vld [vmem:[%s142 + $0xb0] sm:$0xf]
        %v191 = vld [vmem:[%s142 + $0xb4] sm:$0xf]
        %v192 = vld [vmem:[%s142 + $0xb8] sm:$0xf]
        %v193 = vld [vmem:[%s142 + $0xbc] sm:$0xf]
        %v194 = vld [vmem:[%s142 + $0xc0] sm:$0xf]
        %v195 = vld [vmem:[%s142 + $0xc4] sm:$0xf]
        %v196 = vld [vmem:[%s142 + $0xc8] sm:$0xf]
        %v197 = vld [vmem:[%s142 + $0xcc] sm:$0xf]
        %v198 = vld [vmem:[%s142 + $0xd0] sm:$0xf]
        %v199 = vld [vmem:[%s142 + $0xd4] sm:$0xf]
        %v200 = vld [vmem:[%s142 + $0xd8] sm:$0xf]
        %v201 = vld [vmem:[%s142 + $0xdc] sm:$0xf]
        %v202 = vld [vmem:[%s142 + $0xe0] sm:$0xf]
        %v203 = vld [vmem:[%s142 + $0xe4] sm:$0xf]
        %v204 = vld [vmem:[%s142 + $0xe8] sm:$0xf]
        %v205 = vld [vmem:[%s142 + $0xec] sm:$0xf]
        %v206 = vld [vmem:[%s142 + $0xf0] sm:$0xf]
        %v207 = vld [vmem:[%s142 + $0xf4] sm:$0xf]
        %v208 = vld [vmem:[%s142 + $0xf8] sm:$0xf]
        %v209 = vld [vmem:[%s142 + $0xfc] sm:$0xf]
        %v210 = vld [vmem:[%s142 + $0x100] sm:$0xf]
        %v211 = vld [vmem:[%s142 + $0x104] sm:$0xf]
        %v212 = vld [vmem:[%s142 + $0x108] sm:$0xf]
        %v213 = vld [vmem:[%s142 + $0x10c] sm:$0xf]
        %v214 = vld [vmem:[%s142 + $0x110] sm:$0xf]
        %v215 = vld [vmem:[%s142 + $0x114] sm:$0xf]
        %v216 = vld [vmem:[%s142 + $0x118] sm:$0xf]
        %v217 = vld [vmem:[%s142 + $0x11c] sm:$0xf]
        %v218 = vld [vmem:[%s142 + $0x120] sm:$0xf]
        %v219 = vld [vmem:[%s142 + $0x124] sm:$0xf]
        %v220 = vld [vmem:[%s142 + $0x128] sm:$0xf]
        %v221 = vld [vmem:[%s142 + $0x12c] sm:$0xf]
        %v222 = vld [vmem:[%s142 + $0x130] sm:$0xf]
        %v223 = vld [vmem:[%s142 + $0x134] sm:$0xf]
        %v224 = vld [vmem:[%s142 + $0x138] sm:$0xf]
        %v225 = vld [vmem:[%s142 + $0x13c] sm:$0xf]
        %v226 = vld [vmem:[%s142 + $0x140] sm:$0xf]
        %v227 = vld [vmem:[%s142 + $0x144] sm:$0xf]
        %v228 = vld [vmem:[%s142 + $0x148] sm:$0xf]
        %v229 = vld [vmem:[%s142 + $0x14c] sm:$0xf]
        %v230 = vld [vmem:[%s142 + $0x150] sm:$0xf]
        %v231 = vld [vmem:[%s142 + $0x154] sm:$0xf]
        %v232 = vld [vmem:[%s142 + $0x158] sm:$0xf]
        %v233 = vld [vmem:[%s142 + $0x15c] sm:$0xf]
        %v234 = vld [vmem:[%s142 + $0x160] sm:$0xf]
        %v235 = vld [vmem:[%s142 + $0x164] sm:$0xf]
        %v236 = vld [vmem:[%s142 + $0x168] sm:$0xf]
        %v237 = vld [vmem:[%s142 + $0x16c] sm:$0xf]
        %v238 = vld [vmem:[%s142 + $0x170] sm:$0xf]
        %v239 = vld [vmem:[%s142 + $0x174] sm:$0xf]
        %v240 = vld [vmem:[%s142 + $0x178] sm:$0xf]
        %v241 = vld [vmem:[%s142 + $0x17c] sm:$0xf]
        %v242 = vld [vmem:[%s142 + $0x180] sm:$0xf]
        %v243 = vld [vmem:[%s142 + $0x184] sm:$0xf]
        %v244 = vld [vmem:[%s142 + $0x188] sm:$0xf]
        %v245 = vld [vmem:[%s142 + $0x18c] sm:$0xf]
        %v246 = vld [vmem:[%s142 + $0x190] sm:$0xf]
        %v247 = vld [vmem:[%s142 + $0x194] sm:$0xf]
        %v248 = vld [vmem:[%s142 + $0x198] sm:$0xf]
        %v249 = vld [vmem:[%s142 + $0x19c] sm:$0xf]
        %v250 = vld [vmem:[%s142 + $0x1a0] sm:$0xf]
        %v251 = vld [vmem:[%s142 + $0x1a4] sm:$0xf]
        %v252 = vld [vmem:[%s142 + $0x1a8] sm:$0xf]
        %v253 = vld [vmem:[%s142 + $0x1ac] sm:$0xf]
        %v254 = vld [vmem:[%s142 + $0x1b0] sm:$0xf]
        %v255 = vld [vmem:[%s142 + $0x1b4] sm:$0xf]
        %v256 = vld [vmem:[%s142 + $0x1b8] sm:$0xf]
        %v257 = vld [vmem:[%s142 + $0x1bc] sm:$0xf]
        %v258 = vld [vmem:[%s142 + $0x1c0] sm:$0xf]
        %v259 = vld [vmem:[%s142 + $0x1c4] sm:$0xf]
        %v260 = vld [vmem:[%s142 + $0x1c8] sm:$0xf]
        %v261 = vld [vmem:[%s142 + $0x1cc] sm:$0xf]
        %v262 = vld [vmem:[%s142 + $0x1d0] sm:$0xf]
        %v263 = vld [vmem:[%s142 + $0x1d4] sm:$0xf]
        %v264 = vld [vmem:[%s142 + $0x1d8] sm:$0xf]
        %v265 = vld [vmem:[%s142 + $0x1dc] sm:$0xf]
        %v266 = vld [vmem:[%s142 + $0x1e0] sm:$0xf]
        %v267 = vld [vmem:[%s142 + $0x1e4] sm:$0xf]
        %v268 = vld [vmem:[%s142 + $0x1e8] sm:$0xf]
        %v269 = vld [vmem:[%s142 + $0x1ec] sm:$0xf]
        %v270 = vld [vmem:[%s142 + $0x1f0] sm:$0xf]
        %v271 = vld [vmem:[%s142 + $0x1f4] sm:$0xf]
        %v272 = vld [vmem:[%s142 + $0x1f8] sm:$0xf]
        %v273 = vld [vmem:[%s142 + $0x1fc] sm:$0xf]
        %v274 = vld [vmem:[%s142 + $0x200] sm:$0xf]
        %v275 = vld [vmem:[%s142 + $0x204] sm:$0xf]
        %v276 = vld [vmem:[%s142 + $0x208] sm:$0xf]
        %v277 = vld [vmem:[%s142 + $0x20c] sm:$0xf]
        %v278 = vld [vmem:[%s142 + $0x210] sm:$0xf]
        %v279 = vld [vmem:[%s142 + $0x214] sm:$0xf]
        %v280 = vld [vmem:[%s142 + $0x218] sm:$0xf]
        %v281 = vld [vmem:[%s142 + $0x21c] sm:$0xf]
        %v282 = vld [vmem:[%s142 + $0x220] sm:$0xf]
        %v283 = vld [vmem:[%s142 + $0x224] sm:$0xf]
        %v284 = vld [vmem:[%s142 + $0x228] sm:$0xf]
        %v285 = vld [vmem:[%s142 + $0x22c] sm:$0xf]
        %v286 = vld [vmem:[%s142 + $0x230] sm:$0xf]
        %v287 = vld [vmem:[%s142 + $0x234] sm:$0xf]
        %v288 = vld [vmem:[%s142 + $0x238] sm:$0xf]
        %v289 = vld [vmem:[%s142 + $0x23c] sm:$0xf]
        %v290 = vld [vmem:[%s142 + $0x240] sm:$0xf]
        %v291 = vld [vmem:[%s142 + $0x244] sm:$0xf]
        %v292 = vld [vmem:[%s142 + $0x248] sm:$0xf]
        %v293 = vld [vmem:[%s142 + $0x24c] sm:$0xf]
        %v294 = vld [vmem:[%s142 + $0x250] sm:$0xf]
        %v295 = vld [vmem:[%s142 + $0x254] sm:$0xf]
        %v296 = vld [vmem:[%s142 + $0x258] sm:$0xf]
        %v297 = vld [vmem:[%s142 + $0x25c] sm:$0xf]
        %v298 = vld [vmem:[%s142 + $0x260] sm:$0xf]
        %v299 = vld [vmem:[%s142 + $0x264] sm:$0xf]
        %v300 = vld [vmem:[%s142 + $0x268] sm:$0xf]
        %v301 = vld [vmem:[%s142 + $0x26c] sm:$0xf]
        %v302 = vld [vmem:[%s142 + $0x270] sm:$0xf]
        %v303 = vld [vmem:[%s142 + $0x274] sm:$0xf]
        %v304 = vld [vmem:[%s142 + $0x278] sm:$0xf]
        %v305 = vld [vmem:[%s142 + $0x27c] sm:$0xf]
        %v306 = vld [vmem:[%s142 + $0x280] sm:$0xf]
        %v307 = vld [vmem:[%s142 + $0x284] sm:$0xf]
        %v308 = vld [vmem:[%s142 + $0x288] sm:$0xf]
        %v309 = vld [vmem:[%s142 + $0x28c] sm:$0xf]
        %v310 = vld [vmem:[%s142 + $0x290] sm:$0xf]
        %v311 = vld [vmem:[%s142 + $0x294] sm:$0xf]
        %v312 = vld [vmem:[%s142 + $0x298] sm:$0xf]
        %v313 = vld [vmem:[%s142 + $0x29c] sm:$0xf]
        %v314 = vld [vmem:[%s142 + $0x2a0] sm:$0xf]
        %v315 = vld [vmem:[%s142 + $0x2a4] sm:$0xf]
        %v316 = vld [vmem:[%s142 + $0x2a8] sm:$0xf]
        %v317 = vld [vmem:[%s142 + $0x2ac] sm:$0xf]
        %v318 = vld [vmem:[%s142 + $0x2b0] sm:$0xf]
        %v319 = vld [vmem:[%s142 + $0x2b4] sm:$0xf]
        %v320 = vld [vmem:[%s142 + $0x2b8] sm:$0xf]
        %v321 = vld [vmem:[%s142 + $0x2bc] sm:$0xf]
        %v322 = vld [vmem:[%s142 + $0x2c0] sm:$0xf]
        %v323 = vld [vmem:[%s142 + $0x2c4] sm:$0xf]
        %v324 = vld [vmem:[%s142 + $0x2c8] sm:$0xf]
        %v325 = vld [vmem:[%s142 + $0x2cc] sm:$0xf]
        %v326 = vld [vmem:[%s142 + $0x2d0] sm:$0xf]
        %v327 = vld [vmem:[%s142 + $0x2d4] sm:$0xf]
        %v328 = vld [vmem:[%s142 + $0x2d8] sm:$0xf]
        %v329 = vld [vmem:[%s142 + $0x2dc] sm:$0xf]
        %v330 = vld [vmem:[%s142 + $0x2e0] sm:$0xf]
        %v331 = vld [vmem:[%s142 + $0x2e4] sm:$0xf]
        %v332 = vld [vmem:[%s142 + $0x2e8] sm:$0xf]
        %v333 = vld [vmem:[%s142 + $0x2ec] sm:$0xf]
        %v334 = vld [vmem:[%s142 + $0x2f0] sm:$0xf]
        %v335 = vld [vmem:[%s142 + $0x2f4] sm:$0xf]
        %v336 = vld [vmem:[%s142 + $0x2f8] sm:$0xf]
        %v337 = vld [vmem:[%s142 + $0x2fc] sm:$0xf]
        %v338 = vld [vmem:[%s142 + $0x300] sm:$0xf]
        %v339 = vld [vmem:[%s142 + $0x304] sm:$0xf]
        %v340 = vld [vmem:[%s142 + $0x308] sm:$0xf]
        %v341 = vld [vmem:[%s142 + $0x30c] sm:$0xf]
        %v342 = vld [vmem:[%s142 + $0x310] sm:$0xf]
        %v343 = vld [vmem:[%s142 + $0x314] sm:$0xf]
        %v344 = vld [vmem:[%s142 + $0x318] sm:$0xf]
        %v345 = vld [vmem:[%s142 + $0x31c] sm:$0xf]
        %v346 = vld [vmem:[%s142 + $0x320] sm:$0xf]
        %v347 = vld [vmem:[%s142 + $0x324] sm:$0xf]
        %v348 = vld [vmem:[%s142 + $0x328] sm:$0xf]
        %v349 = vld [vmem:[%s142 + $0x32c] sm:$0xf]
        %v350 = vld [vmem:[%s142 + $0x330] sm:$0xf]
        %v351 = vld [vmem:[%s142 + $0x334] sm:$0xf]
        %v352 = vld [vmem:[%s142 + $0x338] sm:$0xf]
        %v353 = vld [vmem:[%s142 + $0x33c] sm:$0xf]
        %v354 = vld [vmem:[%s142 + $0x340] sm:$0xf]
        %v355 = vld [vmem:[%s142 + $0x344] sm:$0xf]
        %v356 = vld [vmem:[%s142 + $0x348] sm:$0xf]
        %v357 = vld [vmem:[%s142 + $0x34c] sm:$0xf]
        %v358 = vld [vmem:[%s142 + $0x350] sm:$0xf]
        %v359 = vld [vmem:[%s142 + $0x354] sm:$0xf]
        %v360 = vld [vmem:[%s142 + $0x358] sm:$0xf]
        %v361 = vld [vmem:[%s142 + $0x35c] sm:$0xf]
        %v362 = vld [vmem:[%s142 + $0x360] sm:$0xf]
        %v363 = vld [vmem:[%s142 + $0x364] sm:$0xf]
        %v364 = vld [vmem:[%s142 + $0x368] sm:$0xf]
        %v365 = vld [vmem:[%s142 + $0x36c] sm:$0xf]
        %v366 = vld [vmem:[%s142 + $0x370] sm:$0xf]
        %v367 = vld [vmem:[%s142 + $0x374] sm:$0xf]
        %v368 = vld [vmem:[%s142 + $0x378] sm:$0xf]
        %v369 = vld [vmem:[%s142 + $0x37c] sm:$0xf]
        %v370 = vld [vmem:[%s142 + $0x380] sm:$0xf]
        %v371 = vld [vmem:[%s142 + $0x384] sm:$0xf]
        %v372 = vld [vmem:[%s142 + $0x388] sm:$0xf]
        %v373 = vld [vmem:[%s142 + $0x38c] sm:$0xf]
        %v374 = vld [vmem:[%s142 + $0x390] sm:$0xf]
        %v375 = vld [vmem:[%s142 + $0x394] sm:$0xf]
        %v376 = vld [vmem:[%s142 + $0x398] sm:$0xf]
        %v377 = vld [vmem:[%s142 + $0x39c] sm:$0xf]
        %v378 = vld [vmem:[%s142 + $0x3a0] sm:$0xf]
        %v379 = vld [vmem:[%s142 + $0x3a4] sm:$0xf]
        %v380 = vld [vmem:[%s142 + $0x3a8] sm:$0xf]
        %v381 = vld [vmem:[%s142 + $0x3ac] sm:$0xf]
        %v382 = vld [vmem:[%s142 + $0x3b0] sm:$0xf]
        %v383 = vld [vmem:[%s142 + $0x3b4] sm:$0xf]
        %v384 = vld [vmem:[%s142 + $0x3b8] sm:$0xf]
        %v385 = vld [vmem:[%s142 + $0x3bc] sm:$0xf]
        %v386 = vld [vmem:[%s142 + $0x3c0] sm:$0xf]
        %v387 = vld [vmem:[%s142 + $0x3c4] sm:$0xf]
        %v388 = vld [vmem:[%s142 + $0x3c8] sm:$0xf]
        %v389 = vld [vmem:[%s142 + $0x3cc] sm:$0xf]
        %v390 = vld [vmem:[%s142 + $0x3d0] sm:$0xf]
        %v391 = vld [vmem:[%s142 + $0x3d4] sm:$0xf]
        %v392 = vld [vmem:[%s142 + $0x3d8] sm:$0xf]
        %v393 = vld [vmem:[%s142 + $0x3dc] sm:$0xf]
        %v394 = vld [vmem:[%s142 + $0x3e0] sm:$0xf]
        %v395 = vld [vmem:[%s142 + $0x3e4] sm:$0xf]
        %v396 = vld [vmem:[%s142 + $0x3e8] sm:$0xf]
        %v397 = vld [vmem:[%s142 + $0x3ec] sm:$0xf]
        %v398 = vld [vmem:[%s142 + $0x3f0] sm:$0xf]
        %v399 = vld [vmem:[%s142 + $0x3f4] sm:$0xf]
        %v400 = vld [vmem:[%s142 + $0x3f8] sm:$0xf]
        %v401 = vld [vmem:[%s142 + $0x3fc] sm:$0xf]
        %v402 = vld [vmem:[%s1] sm:$0xf]
        %v659 = vunpack.c.l.b16 %v146
        %v660 = vunpack.c.l.b16 %v147
        %v661 = vunpack.c.l.b16 %v148
        %v662 = vunpack.c.l.b16 %v149
        %v663 = vunpack.c.l.b16 %v150
        %v664 = vunpack.c.l.b16 %v151
        %v665 = vunpack.c.l.b16 %v152
        %v666 = vunpack.c.l.b16 %v153
        %v667 = vunpack.c.l.b16 %v154
        %v668 = vunpack.c.l.b16 %v155
        %v669 = vunpack.c.l.b16 %v156
        %v670 = vunpack.c.l.b16 %v157
        %v671 = vunpack.c.l.b16 %v158
        %v672 = vunpack.c.l.b16 %v159
        %v673 = vunpack.c.l.b16 %v160
        %v674 = vunpack.c.l.b16 %v161
        %v675 = vunpack.c.l.b16 %v162
        %v676 = vunpack.c.l.b16 %v163
        %v677 = vunpack.c.l.b16 %v164
        %v678 = vunpack.c.l.b16 %v165
        %v679 = vunpack.c.l.b16 %v166
        %v680 = vunpack.c.l.b16 %v167
        %v681 = vunpack.c.l.b16 %v168
        %v682 = vunpack.c.l.b16 %v169
        %v683 = vunpack.c.l.b16 %v170
        %v684 = vunpack.c.l.b16 %v171
        %v685 = vunpack.c.l.b16 %v172
        %v686 = vunpack.c.l.b16 %v173
        %v687 = vunpack.c.l.b16 %v174
        %v688 = vunpack.c.l.b16 %v175
        %v689 = vunpack.c.l.b16 %v176
        %v690 = vunpack.c.l.b16 %v177
        %v691 = vunpack.c.l.b16 %v178
        %v692 = vunpack.c.l.b16 %v179
        %v693 = vunpack.c.l.b16 %v180
        %v694 = vunpack.c.l.b16 %v181
        %v695 = vunpack.c.l.b16 %v182
        %v696 = vunpack.c.l.b16 %v183
        %v697 = vunpack.c.l.b16 %v184
        %v698 = vunpack.c.l.b16 %v185
        %v699 = vunpack.c.l.b16 %v186
        %v700 = vunpack.c.l.b16 %v187
        %v701 = vunpack.c.l.b16 %v188
        %v702 = vunpack.c.l.b16 %v189
        %v703 = vunpack.c.l.b16 %v190
        %v704 = vunpack.c.l.b16 %v191
        %v705 = vunpack.c.l.b16 %v192
        %v706 = vunpack.c.l.b16 %v193
        %v707 = vunpack.c.l.b16 %v194
        %v708 = vunpack.c.l.b16 %v195
        %v709 = vunpack.c.l.b16 %v196
        %v710 = vunpack.c.l.b16 %v197
        %v711 = vunpack.c.l.b16 %v198
        %v712 = vunpack.c.l.b16 %v199
        %v713 = vunpack.c.l.b16 %v200
        %v714 = vunpack.c.l.b16 %v201
        %v715 = vunpack.c.l.b16 %v202
        %v716 = vunpack.c.l.b16 %v203
        %v717 = vunpack.c.l.b16 %v204
        %v718 = vunpack.c.l.b16 %v205
        %v719 = vunpack.c.l.b16 %v206
        %v720 = vunpack.c.l.b16 %v207
        %v721 = vunpack.c.l.b16 %v208
        %v722 = vunpack.c.l.b16 %v209
        %v723 = vunpack.c.l.b16 %v210
        %v724 = vunpack.c.l.b16 %v211
        %v725 = vunpack.c.l.b16 %v212
        %v726 = vunpack.c.l.b16 %v213
        %v727 = vunpack.c.l.b16 %v214
        %v728 = vunpack.c.l.b16 %v215
        %v729 = vunpack.c.l.b16 %v216
        %v730 = vunpack.c.l.b16 %v217
        %v731 = vunpack.c.l.b16 %v218
        %v732 = vunpack.c.l.b16 %v219
        %v733 = vunpack.c.l.b16 %v220
        %v734 = vunpack.c.l.b16 %v221
        %v735 = vunpack.c.l.b16 %v222
        %v736 = vunpack.c.l.b16 %v223
        %v737 = vunpack.c.l.b16 %v224
        %v738 = vunpack.c.l.b16 %v225
        %v739 = vunpack.c.l.b16 %v226
        %v740 = vunpack.c.l.b16 %v227
        %v741 = vunpack.c.l.b16 %v228
        %v742 = vunpack.c.l.b16 %v229
        %v743 = vunpack.c.l.b16 %v230
        %v744 = vunpack.c.l.b16 %v231
        %v745 = vunpack.c.l.b16 %v232
        %v746 = vunpack.c.l.b16 %v233
        %v747 = vunpack.c.l.b16 %v234
        %v748 = vunpack.c.l.b16 %v235
        %v749 = vunpack.c.l.b16 %v236
        %v750 = vunpack.c.l.b16 %v237
        %v751 = vunpack.c.l.b16 %v238
        %v752 = vunpack.c.l.b16 %v239
        %v753 = vunpack.c.l.b16 %v240
        %v754 = vunpack.c.l.b16 %v241
        %v755 = vunpack.c.l.b16 %v242
        %v756 = vunpack.c.l.b16 %v243
        %v757 = vunpack.c.l.b16 %v244
        %v758 = vunpack.c.l.b16 %v245
        %v759 = vunpack.c.l.b16 %v246
        %v760 = vunpack.c.l.b16 %v247
        %v761 = vunpack.c.l.b16 %v248
        %v762 = vunpack.c.l.b16 %v249
        %v763 = vunpack.c.l.b16 %v250
        %v764 = vunpack.c.l.b16 %v251
        %v765 = vunpack.c.l.b16 %v252
        %v766 = vunpack.c.l.b16 %v253
        %v767 = vunpack.c.l.b16 %v254
        %v768 = vunpack.c.l.b16 %v255
        %v769 = vunpack.c.l.b16 %v256
        %v770 = vunpack.c.l.b16 %v257
        %v771 = vunpack.c.l.b16 %v258
        %v772 = vunpack.c.l.b16 %v259
        %v773 = vunpack.c.l.b16 %v260
        %v774 = vunpack.c.l.b16 %v261
        %v775 = vunpack.c.l.b16 %v262
        %v776 = vunpack.c.l.b16 %v263
        %v777 = vunpack.c.l.b16 %v264
        %v778 = vunpack.c.l.b16 %v265
        %v779 = vunpack.c.l.b16 %v266
        %v780 = vunpack.c.l.b16 %v267
        %v781 = vunpack.c.l.b16 %v268
        %v782 = vunpack.c.l.b16 %v269
        %v783 = vunpack.c.l.b16 %v270
        %v784 = vunpack.c.l.b16 %v271
        %v785 = vunpack.c.l.b16 %v272
        %v786 = vunpack.c.l.b16 %v273
        %v787 = vunpack.c.l.b16 %v274
        %v788 = vunpack.c.l.b16 %v275
        %v789 = vunpack.c.l.b16 %v276
        %v790 = vunpack.c.l.b16 %v277
        %v791 = vunpack.c.l.b16 %v278
        %v792 = vunpack.c.l.b16 %v279
        %v793 = vunpack.c.l.b16 %v280
        %v794 = vunpack.c.l.b16 %v281
        %v795 = vunpack.c.l.b16 %v282
        %v796 = vunpack.c.l.b16 %v283
        %v797 = vunpack.c.l.b16 %v284
        %v798 = vunpack.c.l.b16 %v285
        %v799 = vunpack.c.l.b16 %v286
        %v800 = vunpack.c.l.b16 %v287
        %v801 = vunpack.c.l.b16 %v288
        %v802 = vunpack.c.l.b16 %v289
        %v803 = vunpack.c.l.b16 %v290
        %v804 = vunpack.c.l.b16 %v291
        %v805 = vunpack.c.l.b16 %v292
        %v806 = vunpack.c.l.b16 %v293
        %v807 = vunpack.c.l.b16 %v294
        %v808 = vunpack.c.l.b16 %v295
        %v809 = vunpack.c.l.b16 %v296
        %v810 = vunpack.c.l.b16 %v297
        %v811 = vunpack.c.l.b16 %v298
        %v812 = vunpack.c.l.b16 %v299
        %v813 = vunpack.c.l.b16 %v300
        %v814 = vunpack.c.l.b16 %v301
        %v815 = vunpack.c.l.b16 %v302
        %v816 = vunpack.c.l.b16 %v303
        %v817 = vunpack.c.l.b16 %v304
        %v818 = vunpack.c.l.b16 %v305
        %v819 = vunpack.c.l.b16 %v306
        %v820 = vunpack.c.l.b16 %v307
        %v821 = vunpack.c.l.b16 %v308
        %v822 = vunpack.c.l.b16 %v309
        %v823 = vunpack.c.l.b16 %v310
        %v824 = vunpack.c.l.b16 %v311
        %v825 = vunpack.c.l.b16 %v312
        %v826 = vunpack.c.l.b16 %v313
        %v827 = vunpack.c.l.b16 %v314
        %v828 = vunpack.c.l.b16 %v315
        %v829 = vunpack.c.l.b16 %v316
        %v830 = vunpack.c.l.b16 %v317
        %v831 = vunpack.c.l.b16 %v318
        %v832 = vunpack.c.l.b16 %v319
        %v833 = vunpack.c.l.b16 %v320
        %v834 = vunpack.c.l.b16 %v321
        %v835 = vunpack.c.l.b16 %v322
        %v836 = vunpack.c.l.b16 %v323
        %v837 = vunpack.c.l.b16 %v324
        %v838 = vunpack.c.l.b16 %v325
        %v839 = vunpack.c.l.b16 %v326
        %v840 = vunpack.c.l.b16 %v327
        %v841 = vunpack.c.l.b16 %v328
        %v842 = vunpack.c.l.b16 %v329
        %v843 = vunpack.c.l.b16 %v330
        %v844 = vunpack.c.l.b16 %v331
        %v845 = vunpack.c.l.b16 %v332
        %v846 = vunpack.c.l.b16 %v333
        %v847 = vunpack.c.l.b16 %v334
        %v848 = vunpack.c.l.b16 %v335
        %v849 = vunpack.c.l.b16 %v336
        %v850 = vunpack.c.l.b16 %v337
        %v851 = vunpack.c.l.b16 %v338
        %v852 = vunpack.c.l.b16 %v339
        %v853 = vunpack.c.l.b16 %v340
        %v854 = vunpack.c.l.b16 %v341
        %v855 = vunpack.c.l.b16 %v342
        %v856 = vunpack.c.l.b16 %v343
        %v857 = vunpack.c.l.b16 %v344
        %v858 = vunpack.c.l.b16 %v345
        %v859 = vunpack.c.l.b16 %v346
        %v860 = vunpack.c.l.b16 %v347
        %v861 = vunpack.c.l.b16 %v348
        %v862 = vunpack.c.l.b16 %v349
        %v863 = vunpack.c.l.b16 %v350
        %v864 = vunpack.c.l.b16 %v351
        %v865 = vunpack.c.l.b16 %v352
        %v866 = vunpack.c.l.b16 %v353
        %v867 = vunpack.c.l.b16 %v354
        %v868 = vunpack.c.l.b16 %v355
        %v869 = vunpack.c.l.b16 %v356
        %v870 = vunpack.c.l.b16 %v357
        %v871 = vunpack.c.l.b16 %v358
        %v872 = vunpack.c.l.b16 %v359
        %v873 = vunpack.c.l.b16 %v360
        %v874 = vunpack.c.l.b16 %v361
        %v875 = vunpack.c.l.b16 %v362
        %v876 = vunpack.c.l.b16 %v363
        %v877 = vunpack.c.l.b16 %v364
        %v878 = vunpack.c.l.b16 %v365
        %v879 = vunpack.c.l.b16 %v366
        %v880 = vunpack.c.l.b16 %v367
        %v881 = vunpack.c.l.b16 %v368
        %v882 = vunpack.c.l.b16 %v369
        %v883 = vunpack.c.l.b16 %v370
        %v884 = vunpack.c.l.b16 %v371
        %v885 = vunpack.c.l.b16 %v372
        %v886 = vunpack.c.l.b16 %v373
        %v887 = vunpack.c.l.b16 %v374
        %v888 = vunpack.c.l.b16 %v375
        %v889 = vunpack.c.l.b16 %v376
        %v890 = vunpack.c.l.b16 %v377
        %v891 = vunpack.c.l.b16 %v378
        %v892 = vunpack.c.l.b16 %v379
        %v893 = vunpack.c.l.b16 %v380
        %v894 = vunpack.c.l.b16 %v381
        %v895 = vunpack.c.l.b16 %v382
        %v896 = vunpack.c.l.b16 %v383
        %v897 = vunpack.c.l.b16 %v384
        %v898 = vunpack.c.l.b16 %v385
        %v899 = vunpack.c.l.b16 %v386
        %v900 = vunpack.c.l.b16 %v387
        %v901 = vunpack.c.l.b16 %v388
        %v902 = vunpack.c.l.b16 %v389
        %v903 = vunpack.c.l.b16 %v390
        %v904 = vunpack.c.l.b16 %v391
        %v905 = vunpack.c.l.b16 %v392
        %v906 = vunpack.c.l.b16 %v393
        %v907 = vunpack.c.l.b16 %v394
        %v908 = vunpack.c.l.b16 %v395
        %v909 = vunpack.c.l.b16 %v396
        %v910 = vunpack.c.l.b16 %v397
        %v911 = vunpack.c.l.b16 %v398
        %v912 = vunpack.c.l.b16 %v399
        %v913 = vunpack.c.l.b16 %v400
        %v914 = vunpack.c.l.b16 %v401
        %v915 = vpack.c.b16 %v660, %v659
        %v916 = vpack.c.b16 %v662, %v661
        %v917 = vpack.c.b16 %v664, %v663
        %v918 = vpack.c.b16 %v666, %v665
        %v919 = vpack.c.b16 %v668, %v667
        %v920 = vpack.c.b16 %v670, %v669
        %v921 = vpack.c.b16 %v672, %v671
        %v922 = vpack.c.b16 %v674, %v673
        %v923 = vpack.c.b16 %v676, %v675
        %v924 = vpack.c.b16 %v678, %v677
        %v925 = vpack.c.b16 %v680, %v679
        %v926 = vpack.c.b16 %v682, %v681
        %v927 = vpack.c.b16 %v684, %v683
        %v928 = vpack.c.b16 %v686, %v685
        %v929 = vpack.c.b16 %v688, %v687
        %v930 = vpack.c.b16 %v690, %v689
        %v931 = vpack.c.b16 %v692, %v691
        %v932 = vpack.c.b16 %v694, %v693
        %v933 = vpack.c.b16 %v696, %v695
        %v934 = vpack.c.b16 %v698, %v697
        %v935 = vpack.c.b16 %v700, %v699
        %v936 = vpack.c.b16 %v702, %v701
        %v937 = vpack.c.b16 %v704, %v703
        %v938 = vpack.c.b16 %v706, %v705
        %v939 = vpack.c.b16 %v708, %v707
        %v940 = vpack.c.b16 %v710, %v709
        %v941 = vpack.c.b16 %v712, %v711
        %v942 = vpack.c.b16 %v714, %v713
        %v943 = vpack.c.b16 %v716, %v715
        %v944 = vpack.c.b16 %v718, %v717
        %v945 = vpack.c.b16 %v720, %v719
        %v946 = vpack.c.b16 %v722, %v721
        %v947 = vpack.c.b16 %v724, %v723
        %v948 = vpack.c.b16 %v726, %v725
        %v949 = vpack.c.b16 %v728, %v727
        %v950 = vpack.c.b16 %v730, %v729
        %v951 = vpack.c.b16 %v732, %v731
        %v952 = vpack.c.b16 %v734, %v733
        %v953 = vpack.c.b16 %v736, %v735
        %v954 = vpack.c.b16 %v738, %v737
        %v955 = vpack.c.b16 %v740, %v739
        %v956 = vpack.c.b16 %v742, %v741
        %v957 = vpack.c.b16 %v744, %v743
        %v958 = vpack.c.b16 %v746, %v745
        %v959 = vpack.c.b16 %v748, %v747
        %v960 = vpack.c.b16 %v750, %v749
        %v961 = vpack.c.b16 %v752, %v751
        %v962 = vpack.c.b16 %v754, %v753
        %v963 = vpack.c.b16 %v756, %v755
        %v964 = vpack.c.b16 %v758, %v757
        %v965 = vpack.c.b16 %v760, %v759
        %v966 = vpack.c.b16 %v762, %v761
        %v967 = vpack.c.b16 %v764, %v763
        %v968 = vpack.c.b16 %v766, %v765
        %v969 = vpack.c.b16 %v768, %v767
        %v970 = vpack.c.b16 %v770, %v769
        %v971 = vpack.c.b16 %v772, %v771
        %v972 = vpack.c.b16 %v774, %v773
        %v973 = vpack.c.b16 %v776, %v775
        %v974 = vpack.c.b16 %v778, %v777
        %v975 = vpack.c.b16 %v780, %v779
        %v976 = vpack.c.b16 %v782, %v781
        %v977 = vpack.c.b16 %v784, %v783
        %v978 = vpack.c.b16 %v786, %v785
        %v979 = vpack.c.b16 %v788, %v787
        %v980 = vpack.c.b16 %v790, %v789
        %v981 = vpack.c.b16 %v792, %v791
        %v982 = vpack.c.b16 %v794, %v793
        %v983 = vpack.c.b16 %v796, %v795
        %v984 = vpack.c.b16 %v798, %v797
        %v985 = vpack.c.b16 %v800, %v799
        %v986 = vpack.c.b16 %v802, %v801
        %v987 = vpack.c.b16 %v804, %v803
        %v988 = vpack.c.b16 %v806, %v805
        %v989 = vpack.c.b16 %v808, %v807
        %v990 = vpack.c.b16 %v810, %v809
        %v991 = vpack.c.b16 %v812, %v811
        %v992 = vpack.c.b16 %v814, %v813
        %v993 = vpack.c.b16 %v816, %v815
        %v994 = vpack.c.b16 %v818, %v817
        %v995 = vpack.c.b16 %v820, %v819
        %v996 = vpack.c.b16 %v822, %v821
        %v997 = vpack.c.b16 %v824, %v823
        %v998 = vpack.c.b16 %v826, %v825
        %v999 = vpack.c.b16 %v828, %v827
        %v1000 = vpack.c.b16 %v830, %v829
        %v1001 = vpack.c.b16 %v832, %v831
        %v1002 = vpack.c.b16 %v834, %v833
        %v1003 = vpack.c.b16 %v836, %v835
        %v1004 = vpack.c.b16 %v838, %v837
        %v1005 = vpack.c.b16 %v840, %v839
        %v1006 = vpack.c.b16 %v842, %v841
        %v1007 = vpack.c.b16 %v844, %v843
        %v1008 = vpack.c.b16 %v846, %v845
        %v1009 = vpack.c.b16 %v848, %v847
        %v1010 = vpack.c.b16 %v850, %v849
        %v1011 = vpack.c.b16 %v852, %v851
        %v1012 = vpack.c.b16 %v854, %v853
        %v1013 = vpack.c.b16 %v856, %v855
        %v1014 = vpack.c.b16 %v858, %v857
        %v1015 = vpack.c.b16 %v860, %v859
        %v1016 = vpack.c.b16 %v862, %v861
        %v1017 = vpack.c.b16 %v864, %v863
        %v1018 = vpack.c.b16 %v866, %v865
        %v1019 = vpack.c.b16 %v868, %v867
        %v1020 = vpack.c.b16 %v870, %v869
        %v1021 = vpack.c.b16 %v872, %v871
        %v1022 = vpack.c.b16 %v874, %v873
        %v1023 = vpack.c.b16 %v876, %v875
        %v1024 = vpack.c.b16 %v878, %v877
        %v1025 = vpack.c.b16 %v880, %v879
        %v1026 = vpack.c.b16 %v882, %v881
        %v1027 = vpack.c.b16 %v884, %v883
        %v1028 = vpack.c.b16 %v886, %v885
        %v1029 = vpack.c.b16 %v888, %v887
        %v1030 = vpack.c.b16 %v890, %v889
        %v1031 = vpack.c.b16 %v892, %v891
        %v1032 = vpack.c.b16 %v894, %v893
        %v1033 = vpack.c.b16 %v896, %v895
        %v1034 = vpack.c.b16 %v898, %v897
        %v1035 = vpack.c.b16 %v900, %v899
        %v1036 = vpack.c.b16 %v902, %v901
        %v1037 = vpack.c.b16 %v904, %v903
        %v1038 = vpack.c.b16 %v906, %v905
        %v1039 = vpack.c.b16 %v908, %v907
        %v1040 = vpack.c.b16 %v910, %v909
        %v1041 = vpack.c.b16 %v912, %v911
        %v1042 = vpack.c.b16 %v914, %v913
        %vm1043 = vcmask 64512
        %v1045 = vsel %vm1043, %v915, 0
        %v1048 = vsel %vm1043, %v916, 0
        %v1051 = vsel %vm1043, %v917, 0
        %v1054 = vsel %vm1043, %v918, 0
        %v1057 = vsel %vm1043, %v919, 0
        %v1060 = vsel %vm1043, %v920, 0
        %v1063 = vsel %vm1043, %v921, 0
        %v1066 = vsel %vm1043, %v922, 0
        %v1069 = vsel %vm1043, %v923, 0
        %v1072 = vsel %vm1043, %v924, 0
        %v1075 = vsel %vm1043, %v925, 0
        %v1078 = vsel %vm1043, %v926, 0
        %v1081 = vsel %vm1043, %v927, 0
        %v1084 = vsel %vm1043, %v928, 0
        %v1087 = vsel %vm1043, %v929, 0
        %v1090 = vsel %vm1043, %v930, 0
        %v1093 = vsel %vm1043, %v931, 0
        %v1096 = vsel %vm1043, %v932, 0
        %v1099 = vsel %vm1043, %v933, 0
        %v1102 = vsel %vm1043, %v934, 0
        %v1105 = vsel %vm1043, %v935, 0
        %v1108 = vsel %vm1043, %v936, 0
        %v1111 = vsel %vm1043, %v937, 0
        %v1114 = vsel %vm1043, %v938, 0
        %v1117 = vsel %vm1043, %v939, 0
        %v1120 = vsel %vm1043, %v940, 0
        %v1123 = vsel %vm1043, %v941, 0
        %v1126 = vsel %vm1043, %v942, 0
        %v1129 = vsel %vm1043, %v943, 0
        %v1132 = vsel %vm1043, %v944, 0
        %v1135 = vsel %vm1043, %v945, 0
        %v1138 = vsel %vm1043, %v946, 0
        %v1141 = vsel %vm1043, %v947, 0
        %v1144 = vsel %vm1043, %v948, 0
        %v1147 = vsel %vm1043, %v949, 0
        %v1150 = vsel %vm1043, %v950, 0
        %v1153 = vsel %vm1043, %v951, 0
        %v1156 = vsel %vm1043, %v952, 0
        %v1159 = vsel %vm1043, %v953, 0
        %v1162 = vsel %vm1043, %v954, 0
        %v1165 = vsel %vm1043, %v955, 0
        %v1168 = vsel %vm1043, %v956, 0
        %v1171 = vsel %vm1043, %v957, 0
        %v1174 = vsel %vm1043, %v958, 0
        %v1177 = vsel %vm1043, %v959, 0
        %v1180 = vsel %vm1043, %v960, 0
        %v1183 = vsel %vm1043, %v961, 0
        %v1186 = vsel %vm1043, %v962, 0
        %v1189 = vsel %vm1043, %v963, 0
        %v1192 = vsel %vm1043, %v964, 0
        %v1195 = vsel %vm1043, %v965, 0
        %v1198 = vsel %vm1043, %v966, 0
        %v1201 = vsel %vm1043, %v967, 0
        %v1204 = vsel %vm1043, %v968, 0
        %v1207 = vsel %vm1043, %v969, 0
        %v1210 = vsel %vm1043, %v970, 0
        %v1213 = vsel %vm1043, %v971, 0
        %v1216 = vsel %vm1043, %v972, 0
        %v1219 = vsel %vm1043, %v973, 0
        %v1222 = vsel %vm1043, %v974, 0
        %v1225 = vsel %vm1043, %v975, 0
        %v1228 = vsel %vm1043, %v976, 0
        %v1231 = vsel %vm1043, %v977, 0
        %v1234 = vsel %vm1043, %v978, 0
        %v1237 = vsel %vm1043, %v979, 0
        %v1240 = vsel %vm1043, %v980, 0
        %v1243 = vsel %vm1043, %v981, 0
        %v1246 = vsel %vm1043, %v982, 0
        %v1249 = vsel %vm1043, %v983, 0
        %v1252 = vsel %vm1043, %v984, 0
        %v1255 = vsel %vm1043, %v985, 0
        %v1258 = vsel %vm1043, %v986, 0
        %v1261 = vsel %vm1043, %v987, 0
        %v1264 = vsel %vm1043, %v988, 0
        %v1267 = vsel %vm1043, %v989, 0
        %v1270 = vsel %vm1043, %v990, 0
        %v1273 = vsel %vm1043, %v991, 0
        %v1276 = vsel %vm1043, %v992, 0
        %v1279 = vsel %vm1043, %v993, 0
        %v1282 = vsel %vm1043, %v994, 0
        %v1285 = vsel %vm1043, %v995, 0
        %v1288 = vsel %vm1043, %v996, 0
        %v1291 = vsel %vm1043, %v997, 0
        %v1294 = vsel %vm1043, %v998, 0
        %v1297 = vsel %vm1043, %v999, 0
        %v1300 = vsel %vm1043, %v1000, 0
        %v1303 = vsel %vm1043, %v1001, 0
        %v1306 = vsel %vm1043, %v1002, 0
        %v1309 = vsel %vm1043, %v1003, 0
        %v1312 = vsel %vm1043, %v1004, 0
        %v1315 = vsel %vm1043, %v1005, 0
        %v1318 = vsel %vm1043, %v1006, 0
        %v1321 = vsel %vm1043, %v1007, 0
        %v1324 = vsel %vm1043, %v1008, 0
        %v1327 = vsel %vm1043, %v1009, 0
        %v1330 = vsel %vm1043, %v1010, 0
        %v1333 = vsel %vm1043, %v1011, 0
        %v1336 = vsel %vm1043, %v1012, 0
        %v1339 = vsel %vm1043, %v1013, 0
        %v1342 = vsel %vm1043, %v1014, 0
        %v1345 = vsel %vm1043, %v1015, 0
        %v1348 = vsel %vm1043, %v1016, 0
        %v1351 = vsel %vm1043, %v1017, 0
        %v1354 = vsel %vm1043, %v1018, 0
        %v1357 = vsel %vm1043, %v1019, 0
        %v1360 = vsel %vm1043, %v1020, 0
        %v1363 = vsel %vm1043, %v1021, 0
        %v1366 = vsel %vm1043, %v1022, 0
        %v1369 = vsel %vm1043, %v1023, 0
        %v1372 = vsel %vm1043, %v1024, 0
        %v1375 = vsel %vm1043, %v1025, 0
        %v1378 = vsel %vm1043, %v1026, 0
        %v1381 = vsel %vm1043, %v1027, 0
        %v1384 = vsel %vm1043, %v1028, 0
        %v1387 = vsel %vm1043, %v1029, 0
        %v1390 = vsel %vm1043, %v1030, 0
        %v1393 = vsel %vm1043, %v1031, 0
        %v1396 = vsel %vm1043, %v1032, 0
        %v1399 = vsel %vm1043, %v1033, 0
        %v1402 = vsel %vm1043, %v1034, 0
        %v1405 = vsel %vm1043, %v1035, 0
        %v1408 = vsel %vm1043, %v1036, 0
        %v1411 = vsel %vm1043, %v1037, 0
        %v1414 = vsel %vm1043, %v1038, 0
        %v1417 = vsel %vm1043, %v1039, 0
        %v1420 = vsel %vm1043, %v1040, 0
        %v1423 = vsel %vm1043, %v1041, 0
        %v1426 = vsel %vm1043, %v1042, 0
        %vm1428 = vcmask 1043456
        %v1430 = vsel %vm1428, %v402, 0
        %1432 = vmatprep.subr.bf16.mxu0 0
        %1433 = vmatpush1.bf16.msra.mxu0 %v1430
        %1434 = vmatprep.subr.bf16.mxu0 0
        %1435 = vmatpush1.bf16.msra.mxu0 0
        %1436 = vmatprep.subr.bf16.mxu0 0
        %1437 = vmatpush1.bf16.msra.mxu0 0
        %1438 = vmatprep.subr.bf16.mxu0 0
        %1439 = vmatpush1.bf16.msra.mxu0 0
        %1440 = vmatprep.subr.bf16.mxu0 0
        %1441 = vmatpush1.bf16.msra.mxu0 0
        %1442 = vmatprep.subr.bf16.mxu0 0
        %1443 = vmatpush1.bf16.msra.mxu0 0
        %1444 = vmatprep.subr.bf16.mxu0 0
        %1445 = vmatpush1.bf16.msra.mxu0 0
        %1446 = vmatprep.subr.bf16.mxu0 0
        %1447 = vmatpush1.bf16.msra.mxu0 0
        %1448 = vmatprep.subr.bf16.mxu0 0
        %1449 = vmatpush1.bf16.msra.mxu0 0
        %1450 = vmatprep.subr.bf16.mxu0 0
        %1451 = vmatpush1.bf16.msra.mxu0 0
        %1452 = vmatprep.subr.bf16.mxu0 0
        %1453 = vmatpush1.bf16.msra.mxu0 0
        %1454 = vmatprep.subr.bf16.mxu0 0
        %1455 = vmatpush1.bf16.msra.mxu0 0
        %1456 = vmatprep.subr.bf16.mxu0 0
        %1457 = vmatpush1.bf16.msra.mxu0 0
        %1458 = vmatprep.subr.bf16.mxu0 0
        %1459 = vmatpush1.bf16.msra.mxu0 0
        %1460 = vmatprep.subr.bf16.mxu0 0
        %1461 = vmatpush1.bf16.msra.mxu0 0
        %1462 = vmatprep.subr.bf16.mxu0 0
        %1463 = vmatpush1.bf16.msra.mxu0 0
        %1464 = vmatprep.mubr.bf16.mxu0 0
        %1465 = vmatmul.mubr.bf16.gmra.mrb[0].mxu0 %v1045
        %v1466 = vpop.f32.mrb[0].mxu0
        %v1467 = vadd.f32 0.0, %v1466
        %v1468 = vpop.f32.mrb[0].mxu0
        %v1469 = vpop.f32.mrb[0].mxu0
        %v1470 = vadd.f32 0.0, %v1469
        %v1471 = vpop.f32.mrb[0].mxu0
        %1472 = vmatprep.mubr.bf16.mxu0 0
        %1473 = vmatmul.mubr.bf16.gmra.mrb[0].mxu0 %v1048
        %v1474 = vpop.f32.mrb[0].mxu0
        %v1475 = vadd.f32 0.0, %v1474
        %v1476 = vpop.f32.mrb[0].mxu0
        %v1477 = vpop.f32.mrb[0].mxu0
        %v1478 = vadd.f32 0.0, %v1477
        %v1479 = vpop.f32.mrb[0].mxu0
        %1480 = vmatprep.mubr.bf16.mxu0 0
        %1481 = vmatmul.mubr.bf16.gmra.mrb[0].mxu0 %v1051
        %v1482 = vpop.f32.mrb[0].mxu0
        %v1483 = vadd.f32 0.0, %v1482
        %v1484 = vpop.f32.mrb[0].mxu0
        %v1485 = vpop.f32.mrb[0].mxu0
        %v1486 = vadd.f32 0.0, %v1485
        %v1487 = vpop.f32.mrb[0].mxu0
        %1488 = vmatprep.mubr.bf16.mxu0 0
        %1489 = vmatmul.mubr.bf16.gmra.mrb[0].mxu0 %v1054
        %v1490 = vpop.f32.mrb[0].mxu0
        %v1491 = vadd.f32 0.0, %v1490
        %v1492 = vpop.f32.mrb[0].mxu0
        %v1493 = vpop.f32.mrb[0].mxu0
        %v1494 = vadd.f32 0.0, %v1493
        %v1495 = vpop.f32.mrb[0].mxu0
        %1496 = vmatprep.mubr.bf16.mxu0 0
        %1497 = vmatmul.mubr.bf16.gmra.mrb[0].mxu0 %v1057
        %v1498 = vpop.f32.mrb[0].mxu0
        %v1499 = vadd.f32 0.0, %v1498
        %v1500 = vpop.f32.mrb[0].mxu0
        %v1501 = vpop.f32.mrb[0].mxu0
        %v1502 = vadd.f32 0.0, %v1501
        %v1503 = vpop.f32.mrb[0].mxu0
        %1504 = vmatprep.mubr.bf16.mxu0 0
        %1505 = vmatmul.mubr.bf16.gmra.mrb[0].mxu0 %v1060
        %v1506 = vpop.f32.mrb[0].mxu0
        %v1507 = vadd.f32 0.0, %v1506
        %v1508 = vpop.f32.mrb[0].mxu0
        %v1509 = vpop.f32.mrb[0].mxu0
        %v1510 = vadd.f32 0.0, %v1509
        %v1511 = vpop.f32.mrb[0].mxu0
        %1512 = vmatprep.mubr.bf16.mxu0 0
        %1513 = vmatmul.mubr.bf16.gmra.mrb[0].mxu0 %v1063
        %v1514 = vpop.f32.mrb[0].mxu0
        %v1515 = vadd.f32 0.0, %v1514
        %v1516 = vpop.f32.mrb[0].mxu0
        %v1517 = vpop.f32.mrb[0].mxu0
        %v1518 = vadd.f32 0.0, %v1517
        %v1519 = vpop.f32.mrb[0].mxu0
        %1520 = vmatprep.mubr.bf16.mxu0 0
        %1521 = vmatmul.mubr.bf16.gmra.mrb[0].mxu0 %v1066
        %v1522 = vpop.f32.mrb[0].mxu0
        %v1523 = vadd.f32 0.0, %v1522
        %v1524 = vpop.f32.mrb[0].mxu0
        %v1525 = vpop.f32.mrb[0].mxu0
        %v1526 = vadd.f32 0.0, %v1525
        %v1527 = vpop.f32.mrb[0].mxu0
        %1528 = vmatprep.mubr.bf16.mxu0 0
        %1529 = vmatmul.mubr.bf16.gmra.mrb[0].mxu0 %v1069
        %v1530 = vpop.f32.mrb[0].mxu0
        %v1531 = vadd.f32 0.0, %v1530
        %v1532 = vpop.f32.mrb[0].mxu0
        %v1533 = vpop.f32.mrb[0].mxu0
        %v1534 = vadd.f32 0.0, %v1533
        %v1535 = vpop.f32.mrb[0].mxu0
        %1536 = vmatprep.mubr.bf16.mxu0 0
        %1537 = vmatmul.mubr.bf16.gmra.mrb[0].mxu0 %v1072
        %v1538 = vpop.f32.mrb[0].mxu0
        %v1539 = vadd.f32 0.0, %v1538
        %v1540 = vpop.f32.mrb[0].mxu0
        %v1541 = vpop.f32.mrb[0].mxu0
        %v1542 = vadd.f32 0.0, %v1541
        %v1543 = vpop.f32.mrb[0].mxu0
        %1544 = vmatprep.mubr.bf16.mxu0 0
        %1545 = vmatmul.mubr.bf16.gmra.mrb[0].mxu0 %v1075
        %v1546 = vpop.f32.mrb[0].mxu0
        %v1547 = vadd.f32 0.0, %v1546
        %v1548 = vpop.f32.mrb[0].mxu0
        %v1549 = vpop.f32.mrb[0].mxu0
        %v1550 = vadd.f32 0.0, %v1549
        %v1551 = vpop.f32.mrb[0].mxu0
        %1552 = vmatprep.mubr.bf16.mxu0 0
        %1553 = vmatmul.mubr.bf16.gmra.mrb[0].mxu0 %v1078
        %v1554 = vpop.f32.mrb[0].mxu0
        %v1555 = vadd.f32 0.0, %v1554
        %v1556 = vpop.f32.mrb[0].mxu0
        %v1557 = vpop.f32.mrb[0].mxu0
        %v1558 = vadd.f32 0.0, %v1557
        %v1559 = vpop.f32.mrb[0].mxu0
        %1560 = vmatprep.mubr.bf16.mxu0 0
        %1561 = vmatmul.mubr.bf16.gmra.mrb[0].mxu0 %v1081
        %v1562 = vpop.f32.mrb[0].mxu0
        %v1563 = vadd.f32 0.0, %v1562
        %v1564 = vpop.f32.mrb[0].mxu0
        %v1565 = vpop.f32.mrb[0].mxu0
        %v1566 = vadd.f32 0.0, %v1565
        %v1567 = vpop.f32.mrb[0].mxu0
        %1568 = vmatprep.mubr.bf16.mxu0 0
        %1569 = vmatmul.mubr.bf16.gmra.mrb[0].mxu0 %v1084
        %v1570 = vpop.f32.mrb[0].mxu0
        %v1571 = vadd.f32 0.0, %v1570
        %v1572 = vpop.f32.mrb[0].mxu0
        %v1573 = vpop.f32.mrb[0].mxu0
        %v1574 = vadd.f32 0.0, %v1573
        %v1575 = vpop.f32.mrb[0].mxu0
        %1576 = vmatprep.mubr.bf16.mxu0 0
        %1577 = vmatmul.mubr.bf16.gmra.mrb[0].mxu0 %v1087
        %v1578 = vpop.f32.mrb[0].mxu0
        %v1579 = vadd.f32 0.0, %v1578
        %v1580 = vpop.f32.mrb[0].mxu0
        %v1581 = vpop.f32.mrb[0].mxu0
        %v1582 = vadd.f32 0.0, %v1581
        %v1583 = vpop.f32.mrb[0].mxu0
        %1584 = vmatprep.mubr.bf16.mxu0 0
        %1585 = vmatmul.mubr.bf16.gmra.mrb[0].mxu0 %v1090
        %v1586 = vpop.f32.mrb[0].mxu0
        %v1587 = vadd.f32 0.0, %v1586
        %v1588 = vpop.f32.mrb[0].mxu0
        %v1589 = vpop.f32.mrb[0].mxu0
        %v1590 = vadd.f32 0.0, %v1589
        %v1591 = vpop.f32.mrb[0].mxu0
        %1592 = vmatprep.mubr.bf16.mxu0 0
        %1593 = vmatmul.mubr.bf16.gmra.mrb[0].mxu0 %v1093
        %v1594 = vpop.f32.mrb[0].mxu0
        %v1595 = vadd.f32 0.0, %v1594
        %v1596 = vpop.f32.mrb[0].mxu0
        %v1597 = vpop.f32.mrb[0].mxu0
        %v1598 = vadd.f32 0.0, %v1597
        %v1599 = vpop.f32.mrb[0].mxu0
        %1600 = vmatprep.mubr.bf16.mxu0 0
        %1601 = vmatmul.mubr.bf16.gmra.mrb[0].mxu0 %v1096
        %v1602 = vpop.f32.mrb[0].mxu0
        %v1603 = vadd.f32 0.0, %v1602
        %v1604 = vpop.f32.mrb[0].mxu0
        %v1605 = vpop.f32.mrb[0].mxu0
        %v1606 = vadd.f32 0.0, %v1605
        %v1607 = vpop.f32.mrb[0].mxu0
        %1608 = vmatprep.mubr.bf16.mxu0 0
        %1609 = vmatmul.mubr.bf16.gmra.mrb[0].mxu0 %v1099
        %v1610 = vpop.f32.mrb[0].mxu0
        %v1611 = vadd.f32 0.0, %v1610
        %v1612 = vpop.f32.mrb[0].mxu0
        %v1613 = vpop.f32.mrb[0].mxu0
        %v1614 = vadd.f32 0.0, %v1613
        %v1615 = vpop.f32.mrb[0].mxu0
        %1616 = vmatprep.mubr.bf16.mxu0 0
        %1617 = vmatmul.mubr.bf16.gmra.mrb[0].mxu0 %v1102
        %v1618 = vpop.f32.mrb[0].mxu0
        %v1619 = vadd.f32 0.0, %v1618
        %v1620 = vpop.f32.mrb[0].mxu0
        %v1621 = vpop.f32.mrb[0].mxu0
        %v1622 = vadd.f32 0.0, %v1621
        %v1623 = vpop.f32.mrb[0].mxu0
        %1624 = vmatprep.mubr.bf16.mxu0 0
        %1625 = vmatmul.mubr.bf16.gmra.mrb[0].mxu0 %v1105
        %v1626 = vpop.f32.mrb[0].mxu0
        %v1627 = vadd.f32 0.0, %v1626
        %v1628 = vpop.f32.mrb[0].mxu0
        %v1629 = vpop.f32.mrb[0].mxu0
        %v1630 = vadd.f32 0.0, %v1629
        %v1631 = vpop.f32.mrb[0].mxu0
        %1632 = vmatprep.mubr.bf16.mxu0 0
        %1633 = vmatmul.mubr.bf16.gmra.mrb[0].mxu0 %v1108
        %v1634 = vpop.f32.mrb[0].mxu0
        %v1635 = vadd.f32 0.0, %v1634
        %v1636 = vpop.f32.mrb[0].mxu0
        %v1637 = vpop.f32.mrb[0].mxu0
        %v1638 = vadd.f32 0.0, %v1637
        %v1639 = vpop.f32.mrb[0].mxu0
        %1640 = vmatprep.mubr.bf16.mxu0 0
        %1641 = vmatmul.mubr.bf16.gmra.mrb[0].mxu0 %v1111
        %v1642 = vpop.f32.mrb[0].mxu0
        %v1643 = vadd.f32 0.0, %v1642
        %v1644 = vpop.f32.mrb[0].mxu0
        %v1645 = vpop.f32.mrb[0].mxu0
        %v1646 = vadd.f32 0.0, %v1645
        %v1647 = vpop.f32.mrb[0].mxu0
        %1648 = vmatprep.mubr.bf16.mxu0 0
        %1649 = vmatmul.mubr.bf16.gmra.mrb[0].mxu0 %v1114
        %v1650 = vpop.f32.mrb[0].mxu0
        %v1651 = vadd.f32 0.0, %v1650
        %v1652 = vpop.f32.mrb[0].mxu0
        %v1653 = vpop.f32.mrb[0].mxu0
        %v1654 = vadd.f32 0.0, %v1653
        %v1655 = vpop.f32.mrb[0].mxu0
        %1656 = vmatprep.mubr.bf16.mxu0 0
        %1657 = vmatmul.mubr.bf16.gmra.mrb[0].mxu0 %v1117
        %v1658 = vpop.f32.mrb[0].mxu0
        %v1659 = vadd.f32 0.0, %v1658
        %v1660 = vpop.f32.mrb[0].mxu0
        %v1661 = vpop.f32.mrb[0].mxu0
        %v1662 = vadd.f32 0.0, %v1661
        %v1663 = vpop.f32.mrb[0].mxu0
        %1664 = vmatprep.mubr.bf16.mxu0 0
        %1665 = vmatmul.mubr.bf16.gmra.mrb[0].mxu0 %v1120
        %v1666 = vpop.f32.mrb[0].mxu0
        %v1667 = vadd.f32 0.0, %v1666
        %v1668 = vpop.f32.mrb[0].mxu0
        %v1669 = vpop.f32.mrb[0].mxu0
        %v1670 = vadd.f32 0.0, %v1669
        %v1671 = vpop.f32.mrb[0].mxu0
        %1672 = vmatprep.mubr.bf16.mxu0 0
        %1673 = vmatmul.mubr.bf16.gmra.mrb[0].mxu0 %v1123
        %v1674 = vpop.f32.mrb[0].mxu0
        %v1675 = vadd.f32 0.0, %v1674
        %v1676 = vpop.f32.mrb[0].mxu0
        %v1677 = vpop.f32.mrb[0].mxu0
        %v1678 = vadd.f32 0.0, %v1677
        %v1679 = vpop.f32.mrb[0].mxu0
        %1680 = vmatprep.mubr.bf16.mxu0 0
        %1681 = vmatmul.mubr.bf16.gmra.mrb[0].mxu0 %v1126
        %v1682 = vpop.f32.mrb[0].mxu0
        %v1683 = vadd.f32 0.0, %v1682
        %v1684 = vpop.f32.mrb[0].mxu0
        %v1685 = vpop.f32.mrb[0].mxu0
        %v1686 = vadd.f32 0.0, %v1685
        %v1687 = vpop.f32.mrb[0].mxu0
        %1688 = vmatprep.mubr.bf16.mxu0 0
        %1689 = vmatmul.mubr.bf16.gmra.mrb[0].mxu0 %v1129
        %v1690 = vpop.f32.mrb[0].mxu0
        %v1691 = vadd.f32 0.0, %v1690
        %v1692 = vpop.f32.mrb[0].mxu0
        %v1693 = vpop.f32.mrb[0].mxu0
        %v1694 = vadd.f32 0.0, %v1693
        %v1695 = vpop.f32.mrb[0].mxu0
        %1696 = vmatprep.mubr.bf16.mxu0 0
        %1697 = vmatmul.mubr.bf16.gmra.mrb[0].mxu0 %v1132
        %v1698 = vpop.f32.mrb[0].mxu0
        %v1699 = vadd.f32 0.0, %v1698
        %v1700 = vpop.f32.mrb[0].mxu0
        %v1701 = vpop.f32.mrb[0].mxu0
        %v1702 = vadd.f32 0.0, %v1701
        %v1703 = vpop.f32.mrb[0].mxu0
        %1704 = vmatprep.mubr.bf16.mxu0 0
        %1705 = vmatmul.mubr.bf16.gmra.mrb[0].mxu0 %v1135
        %v1706 = vpop.f32.mrb[0].mxu0
        %v1707 = vadd.f32 0.0, %v1706
        %v1708 = vpop.f32.mrb[0].mxu0
        %v1709 = vpop.f32.mrb[0].mxu0
        %v1710 = vadd.f32 0.0, %v1709
        %v1711 = vpop.f32.mrb[0].mxu0
        %1712 = vmatprep.mubr.bf16.mxu0 0
        %1713 = vmatmul.mubr.bf16.gmra.mrb[0].mxu0 %v1138
        %v1714 = vpop.f32.mrb[0].mxu0
        %v1715 = vadd.f32 0.0, %v1714
        %v1716 = vpop.f32.mrb[0].mxu0
        %v1717 = vpop.f32.mrb[0].mxu0
        %v1718 = vadd.f32 0.0, %v1717
        %v1719 = vpop.f32.mrb[0].mxu0
        %1720 = vmatprep.mubr.bf16.mxu0 0
        %1721 = vmatmul.mubr.bf16.gmra.mrb[0].mxu0 %v1141
        %v1722 = vpop.f32.mrb[0].mxu0
        %v1723 = vadd.f32 0.0, %v1722
        %v1724 = vpop.f32.mrb[0].mxu0
        %v1725 = vpop.f32.mrb[0].mxu0
        %v1726 = vadd.f32 0.0, %v1725
        %v1727 = vpop.f32.mrb[0].mxu0
        %1728 = vmatprep.mubr.bf16.mxu0 0
        %1729 = vmatmul.mubr.bf16.gmra.mrb[0].mxu0 %v1144
        %v1730 = vpop.f32.mrb[0].mxu0
        %v1731 = vadd.f32 0.0, %v1730
        %v1732 = vpop.f32.mrb[0].mxu0
        %v1733 = vpop.f32.mrb[0].mxu0
        %v1734 = vadd.f32 0.0, %v1733
        %v1735 = vpop.f32.mrb[0].mxu0
        %1736 = vmatprep.mubr.bf16.mxu0 0
        %1737 = vmatmul.mubr.bf16.gmra.mrb[0].mxu0 %v1147
        %v1738 = vpop.f32.mrb[0].mxu0
        %v1739 = vadd.f32 0.0, %v1738
        %v1740 = vpop.f32.mrb[0].mxu0
        %v1741 = vpop.f32.mrb[0].mxu0
        %v1742 = vadd.f32 0.0, %v1741
        %v1743 = vpop.f32.mrb[0].mxu0
        %1744 = vmatprep.mubr.bf16.mxu0 0
        %1745 = vmatmul.mubr.bf16.gmra.mrb[0].mxu0 %v1150
        %v1746 = vpop.f32.mrb[0].mxu0
        %v1747 = vadd.f32 0.0, %v1746
        %v1748 = vpop.f32.mrb[0].mxu0
        %v1749 = vpop.f32.mrb[0].mxu0
        %v1750 = vadd.f32 0.0, %v1749
        %v1751 = vpop.f32.mrb[0].mxu0
        %1752 = vmatprep.mubr.bf16.mxu0 0
        %1753 = vmatmul.mubr.bf16.gmra.mrb[0].mxu0 %v1153
        %v1754 = vpop.f32.mrb[0].mxu0
        %v1755 = vadd.f32 0.0, %v1754
        %v1756 = vpop.f32.mrb[0].mxu0
        %v1757 = vpop.f32.mrb[0].mxu0
        %v1758 = vadd.f32 0.0, %v1757
        %v1759 = vpop.f32.mrb[0].mxu0
        %1760 = vmatprep.mubr.bf16.mxu0 0
        %1761 = vmatmul.mubr.bf16.gmra.mrb[0].mxu0 %v1156
        %v1762 = vpop.f32.mrb[0].mxu0
        %v1763 = vadd.f32 0.0, %v1762
        %v1764 = vpop.f32.mrb[0].mxu0
        %v1765 = vpop.f32.mrb[0].mxu0
        %v1766 = vadd.f32 0.0, %v1765
        %v1767 = vpop.f32.mrb[0].mxu0
        %1768 = vmatprep.mubr.bf16.mxu0 0
        %1769 = vmatmul.mubr.bf16.gmra.mrb[0].mxu0 %v1159
        %v1770 = vpop.f32.mrb[0].mxu0
        %v1771 = vadd.f32 0.0, %v1770
        %v1772 = vpop.f32.mrb[0].mxu0
        %v1773 = vpop.f32.mrb[0].mxu0
        %v1774 = vadd.f32 0.0, %v1773
        %v1775 = vpop.f32.mrb[0].mxu0
        %1776 = vmatprep.mubr.bf16.mxu0 0
        %1777 = vmatmul.mubr.bf16.gmra.mrb[0].mxu0 %v1162
        %v1778 = vpop.f32.mrb[0].mxu0
        %v1779 = vadd.f32 0.0, %v1778
        %v1780 = vpop.f32.mrb[0].mxu0
        %v1781 = vpop.f32.mrb[0].mxu0
        %v1782 = vadd.f32 0.0, %v1781
        %v1783 = vpop.f32.mrb[0].mxu0
        %1784 = vmatprep.mubr.bf16.mxu0 0
        %1785 = vmatmul.mubr.bf16.gmra.mrb[0].mxu0 %v1165
        %v1786 = vpop.f32.mrb[0].mxu0
        %v1787 = vadd.f32 0.0, %v1786
        %v1788 = vpop.f32.mrb[0].mxu0
        %v1789 = vpop.f32.mrb[0].mxu0
        %v1790 = vadd.f32 0.0, %v1789
        %v1791 = vpop.f32.mrb[0].mxu0
        %1792 = vmatprep.mubr.bf16.mxu0 0
        %1793 = vmatmul.mubr.bf16.gmra.mrb[0].mxu0 %v1168
        %v1794 = vpop.f32.mrb[0].mxu0
        %v1795 = vadd.f32 0.0, %v1794
        %v1796 = vpop.f32.mrb[0].mxu0
        %v1797 = vpop.f32.mrb[0].mxu0
        %v1798 = vadd.f32 0.0, %v1797
        %v1799 = vpop.f32.mrb[0].mxu0
        %1800 = vmatprep.mubr.bf16.mxu0 0
        %1801 = vmatmul.mubr.bf16.gmra.mrb[0].mxu0 %v1171
        %v1802 = vpop.f32.mrb[0].mxu0
        %v1803 = vadd.f32 0.0, %v1802
        %v1804 = vpop.f32.mrb[0].mxu0
        %v1805 = vpop.f32.mrb[0].mxu0
        %v1806 = vadd.f32 0.0, %v1805
        %v1807 = vpop.f32.mrb[0].mxu0
        %1808 = vmatprep.mubr.bf16.mxu0 0
        %1809 = vmatmul.mubr.bf16.gmra.mrb[0].mxu0 %v1174
        %v1810 = vpop.f32.mrb[0].mxu0
        %v1811 = vadd.f32 0.0, %v1810
        %v1812 = vpop.f32.mrb[0].mxu0
        %v1813 = vpop.f32.mrb[0].mxu0
        %v1814 = vadd.f32 0.0, %v1813
        %v1815 = vpop.f32.mrb[0].mxu0
        %1816 = vmatprep.mubr.bf16.mxu0 0
        %1817 = vmatmul.mubr.bf16.gmra.mrb[0].mxu0 %v1177
        %v1818 = vpop.f32.mrb[0].mxu0
        %v1819 = vadd.f32 0.0, %v1818
        %v1820 = vpop.f32.mrb[0].mxu0
        %v1821 = vpop.f32.mrb[0].mxu0
        %v1822 = vadd.f32 0.0, %v1821
        %v1823 = vpop.f32.mrb[0].mxu0
        %1824 = vmatprep.mubr.bf16.mxu0 0
        %1825 = vmatmul.mubr.bf16.gmra.mrb[0].mxu0 %v1180
        %v1826 = vpop.f32.mrb[0].mxu0
        %v1827 = vadd.f32 0.0, %v1826
        %v1828 = vpop.f32.mrb[0].mxu0
        %v1829 = vpop.f32.mrb[0].mxu0
        %v1830 = vadd.f32 0.0, %v1829
        %v1831 = vpop.f32.mrb[0].mxu0
        %1832 = vmatprep.mubr.bf16.mxu0 0
        %1833 = vmatmul.mubr.bf16.gmra.mrb[0].mxu0 %v1183
        %v1834 = vpop.f32.mrb[0].mxu0
        %v1835 = vadd.f32 0.0, %v1834
        %v1836 = vpop.f32.mrb[0].mxu0
        %v1837 = vpop.f32.mrb[0].mxu0
        %v1838 = vadd.f32 0.0, %v1837
        %v1839 = vpop.f32.mrb[0].mxu0
        %1840 = vmatprep.mubr.bf16.mxu0 0
        %1841 = vmatmul.mubr.bf16.gmra.mrb[0].mxu0 %v1186
        %v1842 = vpop.f32.mrb[0].mxu0
        %v1843 = vadd.f32 0.0, %v1842
        %v1844 = vpop.f32.mrb[0].mxu0
        %v1845 = vpop.f32.mrb[0].mxu0
        %v1846 = vadd.f32 0.0, %v1845
        %v1847 = vpop.f32.mrb[0].mxu0
        %1848 = vmatprep.mubr.bf16.mxu0 0
        %1849 = vmatmul.mubr.bf16.gmra.mrb[0].mxu0 %v1189
        %v1850 = vpop.f32.mrb[0].mxu0
        %v1851 = vadd.f32 0.0, %v1850
        %v1852 = vpop.f32.mrb[0].mxu0
        %v1853 = vpop.f32.mrb[0].mxu0
        %v1854 = vadd.f32 0.0, %v1853
        %v1855 = vpop.f32.mrb[0].mxu0
        %1856 = vmatprep.mubr.bf16.mxu0 0
        %1857 = vmatmul.mubr.bf16.gmra.mrb[0].mxu0 %v1192
        %v1858 = vpop.f32.mrb[0].mxu0
        %v1859 = vadd.f32 0.0, %v1858
        %v1860 = vpop.f32.mrb[0].mxu0
        %v1861 = vpop.f32.mrb[0].mxu0
        %v1862 = vadd.f32 0.0, %v1861
        %v1863 = vpop.f32.mrb[0].mxu0
        %1864 = vmatprep.mubr.bf16.mxu0 0
        %1865 = vmatmul.mubr.bf16.gmra.mrb[0].mxu0 %v1195
        %v1866 = vpop.f32.mrb[0].mxu0
        %v1867 = vadd.f32 0.0, %v1866
        %v1868 = vpop.f32.mrb[0].mxu0
        %v1869 = vpop.f32.mrb[0].mxu0
        %v1870 = vadd.f32 0.0, %v1869
        %v1871 = vpop.f32.mrb[0].mxu0
        %1872 = vmatprep.mubr.bf16.mxu0 0
        %1873 = vmatmul.mubr.bf16.gmra.mrb[0].mxu0 %v1198
        %v1874 = vpop.f32.mrb[0].mxu0
        %v1875 = vadd.f32 0.0, %v1874
        %v1876 = vpop.f32.mrb[0].mxu0
        %v1877 = vpop.f32.mrb[0].mxu0
        %v1878 = vadd.f32 0.0, %v1877
        %v1879 = vpop.f32.mrb[0].mxu0
        %1880 = vmatprep.mubr.bf16.mxu0 0
        %1881 = vmatmul.mubr.bf16.gmra.mrb[0].mxu0 %v1201
        %v1882 = vpop.f32.mrb[0].mxu0
        %v1883 = vadd.f32 0.0, %v1882
        %v1884 = vpop.f32.mrb[0].mxu0
        %v1885 = vpop.f32.mrb[0].mxu0
        %v1886 = vadd.f32 0.0, %v1885
        %v1887 = vpop.f32.mrb[0].mxu0
        %1888 = vmatprep.mubr.bf16.mxu0 0
        %1889 = vmatmul.mubr.bf16.gmra.mrb[0].mxu0 %v1204
        %v1890 = vpop.f32.mrb[0].mxu0
        %v1891 = vadd.f32 0.0, %v1890
        %v1892 = vpop.f32.mrb[0].mxu0
        %v1893 = vpop.f32.mrb[0].mxu0
        %v1894 = vadd.f32 0.0, %v1893
        %v1895 = vpop.f32.mrb[0].mxu0
        %1896 = vmatprep.mubr.bf16.mxu0 0
        %1897 = vmatmul.mubr.bf16.gmra.mrb[0].mxu0 %v1207
        %v1898 = vpop.f32.mrb[0].mxu0
        %v1899 = vadd.f32 0.0, %v1898
        %v1900 = vpop.f32.mrb[0].mxu0
        %v1901 = vpop.f32.mrb[0].mxu0
        %v1902 = vadd.f32 0.0, %v1901
        %v1903 = vpop.f32.mrb[0].mxu0
        %1904 = vmatprep.mubr.bf16.mxu0 0
        %1905 = vmatmul.mubr.bf16.gmra.mrb[0].mxu0 %v1210
        %v1906 = vpop.f32.mrb[0].mxu0
        %v1907 = vadd.f32 0.0, %v1906
        %v1908 = vpop.f32.mrb[0].mxu0
        %v1909 = vpop.f32.mrb[0].mxu0
        %v1910 = vadd.f32 0.0, %v1909
        %v1911 = vpop.f32.mrb[0].mxu0
        %1912 = vmatprep.mubr.bf16.mxu0 0
        %1913 = vmatmul.mubr.bf16.gmra.mrb[0].mxu0 %v1213
        %v1914 = vpop.f32.mrb[0].mxu0
        %v1915 = vadd.f32 0.0, %v1914
        %v1916 = vpop.f32.mrb[0].mxu0
        %v1917 = vpop.f32.mrb[0].mxu0
        %v1918 = vadd.f32 0.0, %v1917
        %v1919 = vpop.f32.mrb[0].mxu0
        %1920 = vmatprep.mubr.bf16.mxu0 0
        %1921 = vmatmul.mubr.bf16.gmra.mrb[0].mxu0 %v1216
        %v1922 = vpop.f32.mrb[0].mxu0
        %v1923 = vadd.f32 0.0, %v1922
        %v1924 = vpop.f32.mrb[0].mxu0
        %v1925 = vpop.f32.mrb[0].mxu0
        %v1926 = vadd.f32 0.0, %v1925
        %v1927 = vpop.f32.mrb[0].mxu0
        %1928 = vmatprep.mubr.bf16.mxu0 0
        %1929 = vmatmul.mubr.bf16.gmra.mrb[0].mxu0 %v1219
        %v1930 = vpop.f32.mrb[0].mxu0
        %v1931 = vadd.f32 0.0, %v1930
        %v1932 = vpop.f32.mrb[0].mxu0
        %v1933 = vpop.f32.mrb[0].mxu0
        %v1934 = vadd.f32 0.0, %v1933
        %v1935 = vpop.f32.mrb[0].mxu0
        %1936 = vmatprep.mubr.bf16.mxu0 0
        %1937 = vmatmul.mubr.bf16.gmra.mrb[0].mxu0 %v1222
        %v1938 = vpop.f32.mrb[0].mxu0
        %v1939 = vadd.f32 0.0, %v1938
        %v1940 = vpop.f32.mrb[0].mxu0
        %v1941 = vpop.f32.mrb[0].mxu0
        %v1942 = vadd.f32 0.0, %v1941
        %v1943 = vpop.f32.mrb[0].mxu0
        %1944 = vmatprep.mubr.bf16.mxu0 0
        %1945 = vmatmul.mubr.bf16.gmra.mrb[0].mxu0 %v1225
        %v1946 = vpop.f32.mrb[0].mxu0
        %v1947 = vadd.f32 0.0, %v1946
        %v1948 = vpop.f32.mrb[0].mxu0
        %v1949 = vpop.f32.mrb[0].mxu0
        %v1950 = vadd.f32 0.0, %v1949
        %v1951 = vpop.f32.mrb[0].mxu0
        %1952 = vmatprep.mubr.bf16.mxu0 0
        %1953 = vmatmul.mubr.bf16.gmra.mrb[0].mxu0 %v1228
        %v1954 = vpop.f32.mrb[0].mxu0
        %v1955 = vadd.f32 0.0, %v1954
        %v1956 = vpop.f32.mrb[0].mxu0
        %v1957 = vpop.f32.mrb[0].mxu0
        %v1958 = vadd.f32 0.0, %v1957
        %v1959 = vpop.f32.mrb[0].mxu0
        %1960 = vmatprep.mubr.bf16.mxu0 0
        %1961 = vmatmul.mubr.bf16.gmra.mrb[0].mxu0 %v1231
        %v1962 = vpop.f32.mrb[0].mxu0
        %v1963 = vadd.f32 0.0, %v1962
        %v1964 = vpop.f32.mrb[0].mxu0
        %v1965 = vpop.f32.mrb[0].mxu0
        %v1966 = vadd.f32 0.0, %v1965
        %v1967 = vpop.f32.mrb[0].mxu0
        %1968 = vmatprep.mubr.bf16.mxu0 0
        %1969 = vmatmul.mubr.bf16.gmra.mrb[0].mxu0 %v1234
        %v1970 = vpop.f32.mrb[0].mxu0
        %v1971 = vadd.f32 0.0, %v1970
        %v1972 = vpop.f32.mrb[0].mxu0
        %v1973 = vpop.f32.mrb[0].mxu0
        %v1974 = vadd.f32 0.0, %v1973
        %v1975 = vpop.f32.mrb[0].mxu0
        %1976 = vmatprep.mubr.bf16.mxu0 0
        %1977 = vmatmul.mubr.bf16.gmra.mrb[0].mxu0 %v1237
        %v1978 = vpop.f32.mrb[0].mxu0
        %v1979 = vadd.f32 0.0, %v1978
        %v1980 = vpop.f32.mrb[0].mxu0
        %v1981 = vpop.f32.mrb[0].mxu0
        %v1982 = vadd.f32 0.0, %v1981
        %v1983 = vpop.f32.mrb[0].mxu0
        %1984 = vmatprep.mubr.bf16.mxu0 0
        %1985 = vmatmul.mubr.bf16.gmra.mrb[0].mxu0 %v1240
        %v1986 = vpop.f32.mrb[0].mxu0
        %v1987 = vadd.f32 0.0, %v1986
        %v1988 = vpop.f32.mrb[0].mxu0
        %v1989 = vpop.f32.mrb[0].mxu0
        %v1990 = vadd.f32 0.0, %v1989
        %v1991 = vpop.f32.mrb[0].mxu0
        %1992 = vmatprep.mubr.bf16.mxu0 0
        %1993 = vmatmul.mubr.bf16.gmra.mrb[0].mxu0 %v1243
        %v1994 = vpop.f32.mrb[0].mxu0
        %v1995 = vadd.f32 0.0, %v1994
        %v1996 = vpop.f32.mrb[0].mxu0
        %v1997 = vpop.f32.mrb[0].mxu0
        %v1998 = vadd.f32 0.0, %v1997
        %v1999 = vpop.f32.mrb[0].mxu0
        %2000 = vmatprep.mubr.bf16.mxu0 0
        %2001 = vmatmul.mubr.bf16.gmra.mrb[0].mxu0 %v1246
        %v2002 = vpop.f32.mrb[0].mxu0
        %v2003 = vadd.f32 0.0, %v2002
        %v2004 = vpop.f32.mrb[0].mxu0
        %v2005 = vpop.f32.mrb[0].mxu0
        %v2006 = vadd.f32 0.0, %v2005
        %v2007 = vpop.f32.mrb[0].mxu0
        %2008 = vmatprep.mubr.bf16.mxu0 0
        %2009 = vmatmul.mubr.bf16.gmra.mrb[0].mxu0 %v1249
        %v2010 = vpop.f32.mrb[0].mxu0
        %v2011 = vadd.f32 0.0, %v2010
        %v2012 = vpop.f32.mrb[0].mxu0
        %v2013 = vpop.f32.mrb[0].mxu0
        %v2014 = vadd.f32 0.0, %v2013
        %v2015 = vpop.f32.mrb[0].mxu0
        %2016 = vmatprep.mubr.bf16.mxu0 0
        %2017 = vmatmul.mubr.bf16.gmra.mrb[0].mxu0 %v1252
        %v2018 = vpop.f32.mrb[0].mxu0
        %v2019 = vadd.f32 0.0, %v2018
        %v2020 = vpop.f32.mrb[0].mxu0
        %v2021 = vpop.f32.mrb[0].mxu0
        %v2022 = vadd.f32 0.0, %v2021
        %v2023 = vpop.f32.mrb[0].mxu0
        %2024 = vmatprep.mubr.bf16.mxu0 0
        %2025 = vmatmul.mubr.bf16.gmra.mrb[0].mxu0 %v1255
        %v2026 = vpop.f32.mrb[0].mxu0
        %v2027 = vadd.f32 0.0, %v2026
        %v2028 = vpop.f32.mrb[0].mxu0
        %v2029 = vpop.f32.mrb[0].mxu0
        %v2030 = vadd.f32 0.0, %v2029
        %v2031 = vpop.f32.mrb[0].mxu0
        %2032 = vmatprep.mubr.bf16.mxu0 0
        %2033 = vmatmul.mubr.bf16.gmra.mrb[0].mxu0 %v1258
        %v2034 = vpop.f32.mrb[0].mxu0
        %v2035 = vadd.f32 0.0, %v2034
        %v2036 = vpop.f32.mrb[0].mxu0
        %v2037 = vpop.f32.mrb[0].mxu0
        %v2038 = vadd.f32 0.0, %v2037
        %v2039 = vpop.f32.mrb[0].mxu0
        %2040 = vmatprep.mubr.bf16.mxu0 0
        %2041 = vmatmul.mubr.bf16.gmra.mrb[0].mxu0 %v1261
        %v2042 = vpop.f32.mrb[0].mxu0
        %v2043 = vadd.f32 0.0, %v2042
        %v2044 = vpop.f32.mrb[0].mxu0
        %v2045 = vpop.f32.mrb[0].mxu0
        %v2046 = vadd.f32 0.0, %v2045
        %v2047 = vpop.f32.mrb[0].mxu0
        %2048 = vmatprep.mubr.bf16.mxu0 0
        %2049 = vmatmul.mubr.bf16.gmra.mrb[0].mxu0 %v1264
        %v2050 = vpop.f32.mrb[0].mxu0
        %v2051 = vadd.f32 0.0, %v2050
        %v2052 = vpop.f32.mrb[0].mxu0
        %v2053 = vpop.f32.mrb[0].mxu0
        %v2054 = vadd.f32 0.0, %v2053
        %v2055 = vpop.f32.mrb[0].mxu0
        %2056 = vmatprep.mubr.bf16.mxu0 0
        %2057 = vmatmul.mubr.bf16.gmra.mrb[0].mxu0 %v1267
        %v2058 = vpop.f32.mrb[0].mxu0
        %v2059 = vadd.f32 0.0, %v2058
        %v2060 = vpop.f32.mrb[0].mxu0
        %v2061 = vpop.f32.mrb[0].mxu0
        %v2062 = vadd.f32 0.0, %v2061
        %v2063 = vpop.f32.mrb[0].mxu0
        %2064 = vmatprep.mubr.bf16.mxu0 0
        %2065 = vmatmul.mubr.bf16.gmra.mrb[0].mxu0 %v1270
        %v2066 = vpop.f32.mrb[0].mxu0
        %v2067 = vadd.f32 0.0, %v2066
        %v2068 = vpop.f32.mrb[0].mxu0
        %v2069 = vpop.f32.mrb[0].mxu0
        %v2070 = vadd.f32 0.0, %v2069
        %v2071 = vpop.f32.mrb[0].mxu0
        %2072 = vmatprep.mubr.bf16.mxu0 0
        %2073 = vmatmul.mubr.bf16.gmra.mrb[0].mxu0 %v1273
        %v2074 = vpop.f32.mrb[0].mxu0
        %v2075 = vadd.f32 0.0, %v2074
        %v2076 = vpop.f32.mrb[0].mxu0
        %v2077 = vpop.f32.mrb[0].mxu0
        %v2078 = vadd.f32 0.0, %v2077
        %v2079 = vpop.f32.mrb[0].mxu0
        %2080 = vmatprep.mubr.bf16.mxu0 0
        %2081 = vmatmul.mubr.bf16.gmra.mrb[0].mxu0 %v1276
        %v2082 = vpop.f32.mrb[0].mxu0
        %v2083 = vadd.f32 0.0, %v2082
        %v2084 = vpop.f32.mrb[0].mxu0
        %v2085 = vpop.f32.mrb[0].mxu0
        %v2086 = vadd.f32 0.0, %v2085
        %v2087 = vpop.f32.mrb[0].mxu0
        %2088 = vmatprep.mubr.bf16.mxu0 0
        %2089 = vmatmul.mubr.bf16.gmra.mrb[0].mxu0 %v1279
        %v2090 = vpop.f32.mrb[0].mxu0
        %v2091 = vadd.f32 0.0, %v2090
        %v2092 = vpop.f32.mrb[0].mxu0
        %v2093 = vpop.f32.mrb[0].mxu0
        %v2094 = vadd.f32 0.0, %v2093
        %v2095 = vpop.f32.mrb[0].mxu0
        %2096 = vmatprep.mubr.bf16.mxu0 0
        %2097 = vmatmul.mubr.bf16.gmra.mrb[0].mxu0 %v1282
        %v2098 = vpop.f32.mrb[0].mxu0
        %v2099 = vadd.f32 0.0, %v2098
        %v2100 = vpop.f32.mrb[0].mxu0
        %v2101 = vpop.f32.mrb[0].mxu0
        %v2102 = vadd.f32 0.0, %v2101
        %v2103 = vpop.f32.mrb[0].mxu0
        %2104 = vmatprep.mubr.bf16.mxu0 0
        %2105 = vmatmul.mubr.bf16.gmra.mrb[0].mxu0 %v1285
        %v2106 = vpop.f32.mrb[0].mxu0
        %v2107 = vadd.f32 0.0, %v2106
        %v2108 = vpop.f32.mrb[0].mxu0
        %v2109 = vpop.f32.mrb[0].mxu0
        %v2110 = vadd.f32 0.0, %v2109
        %v2111 = vpop.f32.mrb[0].mxu0
        %2112 = vmatprep.mubr.bf16.mxu0 0
        %2113 = vmatmul.mubr.bf16.gmra.mrb[0].mxu0 %v1288
        %v2114 = vpop.f32.mrb[0].mxu0
        %v2115 = vadd.f32 0.0, %v2114
        %v2116 = vpop.f32.mrb[0].mxu0
        %v2117 = vpop.f32.mrb[0].mxu0
        %v2118 = vadd.f32 0.0, %v2117
        %v2119 = vpop.f32.mrb[0].mxu0
        %2120 = vmatprep.mubr.bf16.mxu0 0
        %2121 = vmatmul.mubr.bf16.gmra.mrb[0].mxu0 %v1291
        %v2122 = vpop.f32.mrb[0].mxu0
        %v2123 = vadd.f32 0.0, %v2122
        %v2124 = vpop.f32.mrb[0].mxu0
        %v2125 = vpop.f32.mrb[0].mxu0
        %v2126 = vadd.f32 0.0, %v2125
        %v2127 = vpop.f32.mrb[0].mxu0
        %2128 = vmatprep.mubr.bf16.mxu0 0
        %2129 = vmatmul.mubr.bf16.gmra.mrb[0].mxu0 %v1294
        %v2130 = vpop.f32.mrb[0].mxu0
        %v2131 = vadd.f32 0.0, %v2130
        %v2132 = vpop.f32.mrb[0].mxu0
        %v2133 = vpop.f32.mrb[0].mxu0
        %v2134 = vadd.f32 0.0, %v2133
        %v2135 = vpop.f32.mrb[0].mxu0
        %2136 = vmatprep.mubr.bf16.mxu0 0
        %2137 = vmatmul.mubr.bf16.gmra.mrb[0].mxu0 %v1297
        %v2138 = vpop.f32.mrb[0].mxu0
        %v2139 = vadd.f32 0.0, %v2138
        %v2140 = vpop.f32.mrb[0].mxu0
        %v2141 = vpop.f32.mrb[0].mxu0
        %v2142 = vadd.f32 0.0, %v2141
        %v2143 = vpop.f32.mrb[0].mxu0
        %2144 = vmatprep.mubr.bf16.mxu0 0
        %2145 = vmatmul.mubr.bf16.gmra.mrb[0].mxu0 %v1300
        %v2146 = vpop.f32.mrb[0].mxu0
        %v2147 = vadd.f32 0.0, %v2146
        %v2148 = vpop.f32.mrb[0].mxu0
        %v2149 = vpop.f32.mrb[0].mxu0
        %v2150 = vadd.f32 0.0, %v2149
        %v2151 = vpop.f32.mrb[0].mxu0
        %2152 = vmatprep.mubr.bf16.mxu0 0
        %2153 = vmatmul.mubr.bf16.gmra.mrb[0].mxu0 %v1303
        %v2154 = vpop.f32.mrb[0].mxu0
        %v2155 = vadd.f32 0.0, %v2154
        %v2156 = vpop.f32.mrb[0].mxu0
        %v2157 = vpop.f32.mrb[0].mxu0
        %v2158 = vadd.f32 0.0, %v2157
        %v2159 = vpop.f32.mrb[0].mxu0
        %2160 = vmatprep.mubr.bf16.mxu0 0
        %2161 = vmatmul.mubr.bf16.gmra.mrb[0].mxu0 %v1306
        %v2162 = vpop.f32.mrb[0].mxu0
        %v2163 = vadd.f32 0.0, %v2162
        %v2164 = vpop.f32.mrb[0].mxu0
        %v2165 = vpop.f32.mrb[0].mxu0
        %v2166 = vadd.f32 0.0, %v2165
        %v2167 = vpop.f32.mrb[0].mxu0
        %2168 = vmatprep.mubr.bf16.mxu0 0
        %2169 = vmatmul.mubr.bf16.gmra.mrb[0].mxu0 %v1309
        %v2170 = vpop.f32.mrb[0].mxu0
        %v2171 = vadd.f32 0.0, %v2170
        %v2172 = vpop.f32.mrb[0].mxu0
        %v2173 = vpop.f32.mrb[0].mxu0
        %v2174 = vadd.f32 0.0, %v2173
        %v2175 = vpop.f32.mrb[0].mxu0
        %2176 = vmatprep.mubr.bf16.mxu0 0
        %2177 = vmatmul.mubr.bf16.gmra.mrb[0].mxu0 %v1312
        %v2178 = vpop.f32.mrb[0].mxu0
        %v2179 = vadd.f32 0.0, %v2178
        %v2180 = vpop.f32.mrb[0].mxu0
        %v2181 = vpop.f32.mrb[0].mxu0
        %v2182 = vadd.f32 0.0, %v2181
        %v2183 = vpop.f32.mrb[0].mxu0
        %2184 = vmatprep.mubr.bf16.mxu0 0
        %2185 = vmatmul.mubr.bf16.gmra.mrb[0].mxu0 %v1315
        %v2186 = vpop.f32.mrb[0].mxu0
        %v2187 = vadd.f32 0.0, %v2186
        %v2188 = vpop.f32.mrb[0].mxu0
        %v2189 = vpop.f32.mrb[0].mxu0
        %v2190 = vadd.f32 0.0, %v2189
        %v2191 = vpop.f32.mrb[0].mxu0
        %2192 = vmatprep.mubr.bf16.mxu0 0
        %2193 = vmatmul.mubr.bf16.gmra.mrb[0].mxu0 %v1318
        %v2194 = vpop.f32.mrb[0].mxu0
        %v2195 = vadd.f32 0.0, %v2194
        %v2196 = vpop.f32.mrb[0].mxu0
        %v2197 = vpop.f32.mrb[0].mxu0
        %v2198 = vadd.f32 0.0, %v2197
        %v2199 = vpop.f32.mrb[0].mxu0
        %2200 = vmatprep.mubr.bf16.mxu0 0
        %2201 = vmatmul.mubr.bf16.gmra.mrb[0].mxu0 %v1321
        %v2202 = vpop.f32.mrb[0].mxu0
        %v2203 = vadd.f32 0.0, %v2202
        %v2204 = vpop.f32.mrb[0].mxu0
        %v2205 = vpop.f32.mrb[0].mxu0
        %v2206 = vadd.f32 0.0, %v2205
        %v2207 = vpop.f32.mrb[0].mxu0
        %2208 = vmatprep.mubr.bf16.mxu0 0
        %2209 = vmatmul.mubr.bf16.gmra.mrb[0].mxu0 %v1324
        %v2210 = vpop.f32.mrb[0].mxu0
        %v2211 = vadd.f32 0.0, %v2210
        %v2212 = vpop.f32.mrb[0].mxu0
        %v2213 = vpop.f32.mrb[0].mxu0
        %v2214 = vadd.f32 0.0, %v2213
        %v2215 = vpop.f32.mrb[0].mxu0
        %2216 = vmatprep.mubr.bf16.mxu0 0
        %2217 = vmatmul.mubr.bf16.gmra.mrb[0].mxu0 %v1327
        %v2218 = vpop.f32.mrb[0].mxu0
        %v2219 = vadd.f32 0.0, %v2218
        %v2220 = vpop.f32.mrb[0].mxu0
        %v2221 = vpop.f32.mrb[0].mxu0
        %v2222 = vadd.f32 0.0, %v2221
        %v2223 = vpop.f32.mrb[0].mxu0
        %2224 = vmatprep.mubr.bf16.mxu0 0
        %2225 = vmatmul.mubr.bf16.gmra.mrb[0].mxu0 %v1330
        %v2226 = vpop.f32.mrb[0].mxu0
        %v2227 = vadd.f32 0.0, %v2226
        %v2228 = vpop.f32.mrb[0].mxu0
        %v2229 = vpop.f32.mrb[0].mxu0
        %v2230 = vadd.f32 0.0, %v2229
        %v2231 = vpop.f32.mrb[0].mxu0
        %2232 = vmatprep.mubr.bf16.mxu0 0
        %2233 = vmatmul.mubr.bf16.gmra.mrb[0].mxu0 %v1333
        %v2234 = vpop.f32.mrb[0].mxu0
        %v2235 = vadd.f32 0.0, %v2234
        %v2236 = vpop.f32.mrb[0].mxu0
        %v2237 = vpop.f32.mrb[0].mxu0
        %v2238 = vadd.f32 0.0, %v2237
        %v2239 = vpop.f32.mrb[0].mxu0
        %2240 = vmatprep.mubr.bf16.mxu0 0
        %2241 = vmatmul.mubr.bf16.gmra.mrb[0].mxu0 %v1336
        %v2242 = vpop.f32.mrb[0].mxu0
        %v2243 = vadd.f32 0.0, %v2242
        %v2244 = vpop.f32.mrb[0].mxu0
        %v2245 = vpop.f32.mrb[0].mxu0
        %v2246 = vadd.f32 0.0, %v2245
        %v2247 = vpop.f32.mrb[0].mxu0
        %2248 = vmatprep.mubr.bf16.mxu0 0
        %2249 = vmatmul.mubr.bf16.gmra.mrb[0].mxu0 %v1339
        %v2250 = vpop.f32.mrb[0].mxu0
        %v2251 = vadd.f32 0.0, %v2250
        %v2252 = vpop.f32.mrb[0].mxu0
        %v2253 = vpop.f32.mrb[0].mxu0
        %v2254 = vadd.f32 0.0, %v2253
        %v2255 = vpop.f32.mrb[0].mxu0
        %2256 = vmatprep.mubr.bf16.mxu0 0
        %2257 = vmatmul.mubr.bf16.gmra.mrb[0].mxu0 %v1342
        %v2258 = vpop.f32.mrb[0].mxu0
        %v2259 = vadd.f32 0.0, %v2258
        %v2260 = vpop.f32.mrb[0].mxu0
        %v2261 = vpop.f32.mrb[0].mxu0
        %v2262 = vadd.f32 0.0, %v2261
        %v2263 = vpop.f32.mrb[0].mxu0
        %2264 = vmatprep.mubr.bf16.mxu0 0
        %2265 = vmatmul.mubr.bf16.gmra.mrb[0].mxu0 %v1345
        %v2266 = vpop.f32.mrb[0].mxu0
        %v2267 = vadd.f32 0.0, %v2266
        %v2268 = vpop.f32.mrb[0].mxu0
        %v2269 = vpop.f32.mrb[0].mxu0
        %v2270 = vadd.f32 0.0, %v2269
        %v2271 = vpop.f32.mrb[0].mxu0
        %2272 = vmatprep.mubr.bf16.mxu0 0
        %2273 = vmatmul.mubr.bf16.gmra.mrb[0].mxu0 %v1348
        %v2274 = vpop.f32.mrb[0].mxu0
        %v2275 = vadd.f32 0.0, %v2274
        %v2276 = vpop.f32.mrb[0].mxu0
        %v2277 = vpop.f32.mrb[0].mxu0
        %v2278 = vadd.f32 0.0, %v2277
        %v2279 = vpop.f32.mrb[0].mxu0
        %2280 = vmatprep.mubr.bf16.mxu0 0
        %2281 = vmatmul.mubr.bf16.gmra.mrb[0].mxu0 %v1351
        %v2282 = vpop.f32.mrb[0].mxu0
        %v2283 = vadd.f32 0.0, %v2282
        %v2284 = vpop.f32.mrb[0].mxu0
        %v2285 = vpop.f32.mrb[0].mxu0
        %v2286 = vadd.f32 0.0, %v2285
        %v2287 = vpop.f32.mrb[0].mxu0
        %2288 = vmatprep.mubr.bf16.mxu0 0
        %2289 = vmatmul.mubr.bf16.gmra.mrb[0].mxu0 %v1354
        %v2290 = vpop.f32.mrb[0].mxu0
        %v2291 = vadd.f32 0.0, %v2290
        %v2292 = vpop.f32.mrb[0].mxu0
        %v2293 = vpop.f32.mrb[0].mxu0
        %v2294 = vadd.f32 0.0, %v2293
        %v2295 = vpop.f32.mrb[0].mxu0
        %2296 = vmatprep.mubr.bf16.mxu0 0
        %2297 = vmatmul.mubr.bf16.gmra.mrb[0].mxu0 %v1357
        %v2298 = vpop.f32.mrb[0].mxu0
        %v2299 = vadd.f32 0.0, %v2298
        %v2300 = vpop.f32.mrb[0].mxu0
        %v2301 = vpop.f32.mrb[0].mxu0
        %v2302 = vadd.f32 0.0, %v2301
        %v2303 = vpop.f32.mrb[0].mxu0
        %2304 = vmatprep.mubr.bf16.mxu0 0
        %2305 = vmatmul.mubr.bf16.gmra.mrb[0].mxu0 %v1360
        %v2306 = vpop.f32.mrb[0].mxu0
        %v2307 = vadd.f32 0.0, %v2306
        %v2308 = vpop.f32.mrb[0].mxu0
        %v2309 = vpop.f32.mrb[0].mxu0
        %v2310 = vadd.f32 0.0, %v2309
        %v2311 = vpop.f32.mrb[0].mxu0
        %2312 = vmatprep.mubr.bf16.mxu0 0
        %2313 = vmatmul.mubr.bf16.gmra.mrb[0].mxu0 %v1363
        %v2314 = vpop.f32.mrb[0].mxu0
        %v2315 = vadd.f32 0.0, %v2314
        %v2316 = vpop.f32.mrb[0].mxu0
        %v2317 = vpop.f32.mrb[0].mxu0
        %v2318 = vadd.f32 0.0, %v2317
        %v2319 = vpop.f32.mrb[0].mxu0
        %2320 = vmatprep.mubr.bf16.mxu0 0
        %2321 = vmatmul.mubr.bf16.gmra.mrb[0].mxu0 %v1366
        %v2322 = vpop.f32.mrb[0].mxu0
        %v2323 = vadd.f32 0.0, %v2322
        %v2324 = vpop.f32.mrb[0].mxu0
        %v2325 = vpop.f32.mrb[0].mxu0
        %v2326 = vadd.f32 0.0, %v2325
        %v2327 = vpop.f32.mrb[0].mxu0
        %2328 = vmatprep.mubr.bf16.mxu0 0
        %2329 = vmatmul.mubr.bf16.gmra.mrb[0].mxu0 %v1369
        %v2330 = vpop.f32.mrb[0].mxu0
        %v2331 = vadd.f32 0.0, %v2330
        %v2332 = vpop.f32.mrb[0].mxu0
        %v2333 = vpop.f32.mrb[0].mxu0
        %v2334 = vadd.f32 0.0, %v2333
        %v2335 = vpop.f32.mrb[0].mxu0
        %2336 = vmatprep.mubr.bf16.mxu0 0
        %2337 = vmatmul.mubr.bf16.gmra.mrb[0].mxu0 %v1372
        %v2338 = vpop.f32.mrb[0].mxu0
        %v2339 = vadd.f32 0.0, %v2338
        %v2340 = vpop.f32.mrb[0].mxu0
        %v2341 = vpop.f32.mrb[0].mxu0
        %v2342 = vadd.f32 0.0, %v2341
        %v2343 = vpop.f32.mrb[0].mxu0
        %2344 = vmatprep.mubr.bf16.mxu0 0
        %2345 = vmatmul.mubr.bf16.gmra.mrb[0].mxu0 %v1375
        %v2346 = vpop.f32.mrb[0].mxu0
        %v2347 = vadd.f32 0.0, %v2346
        %v2348 = vpop.f32.mrb[0].mxu0
        %v2349 = vpop.f32.mrb[0].mxu0
        %v2350 = vadd.f32 0.0, %v2349
        %v2351 = vpop.f32.mrb[0].mxu0
        %2352 = vmatprep.mubr.bf16.mxu0 0
        %2353 = vmatmul.mubr.bf16.gmra.mrb[0].mxu0 %v1378
        %v2354 = vpop.f32.mrb[0].mxu0
        %v2355 = vadd.f32 0.0, %v2354
        %v2356 = vpop.f32.mrb[0].mxu0
        %v2357 = vpop.f32.mrb[0].mxu0
        %v2358 = vadd.f32 0.0, %v2357
        %v2359 = vpop.f32.mrb[0].mxu0
        %2360 = vmatprep.mubr.bf16.mxu0 0
        %2361 = vmatmul.mubr.bf16.gmra.mrb[0].mxu0 %v1381
        %v2362 = vpop.f32.mrb[0].mxu0
        %v2363 = vadd.f32 0.0, %v2362
        %v2364 = vpop.f32.mrb[0].mxu0
        %v2365 = vpop.f32.mrb[0].mxu0
        %v2366 = vadd.f32 0.0, %v2365
        %v2367 = vpop.f32.mrb[0].mxu0
        %2368 = vmatprep.mubr.bf16.mxu0 0
        %2369 = vmatmul.mubr.bf16.gmra.mrb[0].mxu0 %v1384
        %v2370 = vpop.f32.mrb[0].mxu0
        %v2371 = vadd.f32 0.0, %v2370
        %v2372 = vpop.f32.mrb[0].mxu0
        %v2373 = vpop.f32.mrb[0].mxu0
        %v2374 = vadd.f32 0.0, %v2373
        %v2375 = vpop.f32.mrb[0].mxu0
        %2376 = vmatprep.mubr.bf16.mxu0 0
        %2377 = vmatmul.mubr.bf16.gmra.mrb[0].mxu0 %v1387
        %v2378 = vpop.f32.mrb[0].mxu0
        %v2379 = vadd.f32 0.0, %v2378
        %v2380 = vpop.f32.mrb[0].mxu0
        %v2381 = vpop.f32.mrb[0].mxu0
        %v2382 = vadd.f32 0.0, %v2381
        %v2383 = vpop.f32.mrb[0].mxu0
        %2384 = vmatprep.mubr.bf16.mxu0 0
        %2385 = vmatmul.mubr.bf16.gmra.mrb[0].mxu0 %v1390
        %v2386 = vpop.f32.mrb[0].mxu0
        %v2387 = vadd.f32 0.0, %v2386
        %v2388 = vpop.f32.mrb[0].mxu0
        %v2389 = vpop.f32.mrb[0].mxu0
        %v2390 = vadd.f32 0.0, %v2389
        %v2391 = vpop.f32.mrb[0].mxu0
        %2392 = vmatprep.mubr.bf16.mxu0 0
        %2393 = vmatmul.mubr.bf16.gmra.mrb[0].mxu0 %v1393
        %v2394 = vpop.f32.mrb[0].mxu0
        %v2395 = vadd.f32 0.0, %v2394
        %v2396 = vpop.f32.mrb[0].mxu0
        %v2397 = vpop.f32.mrb[0].mxu0
        %v2398 = vadd.f32 0.0, %v2397
        %v2399 = vpop.f32.mrb[0].mxu0
        %2400 = vmatprep.mubr.bf16.mxu0 0
        %2401 = vmatmul.mubr.bf16.gmra.mrb[0].mxu0 %v1396
        %v2402 = vpop.f32.mrb[0].mxu0
        %v2403 = vadd.f32 0.0, %v2402
        %v2404 = vpop.f32.mrb[0].mxu0
        %v2405 = vpop.f32.mrb[0].mxu0
        %v2406 = vadd.f32 0.0, %v2405
        %v2407 = vpop.f32.mrb[0].mxu0
        %2408 = vmatprep.mubr.bf16.mxu0 0
        %2409 = vmatmul.mubr.bf16.gmra.mrb[0].mxu0 %v1399
        %v2410 = vpop.f32.mrb[0].mxu0
        %v2411 = vadd.f32 0.0, %v2410
        %v2412 = vpop.f32.mrb[0].mxu0
        %v2413 = vpop.f32.mrb[0].mxu0
        %v2414 = vadd.f32 0.0, %v2413
        %v2415 = vpop.f32.mrb[0].mxu0
        %2416 = vmatprep.mubr.bf16.mxu0 0
        %2417 = vmatmul.mubr.bf16.gmra.mrb[0].mxu0 %v1402
        %v2418 = vpop.f32.mrb[0].mxu0
        %v2419 = vadd.f32 0.0, %v2418
        %v2420 = vpop.f32.mrb[0].mxu0
        %v2421 = vpop.f32.mrb[0].mxu0
        %v2422 = vadd.f32 0.0, %v2421
        %v2423 = vpop.f32.mrb[0].mxu0
        %2424 = vmatprep.mubr.bf16.mxu0 0
        %2425 = vmatmul.mubr.bf16.gmra.mrb[0].mxu0 %v1405
        %v2426 = vpop.f32.mrb[0].mxu0
        %v2427 = vadd.f32 0.0, %v2426
        %v2428 = vpop.f32.mrb[0].mxu0
        %v2429 = vpop.f32.mrb[0].mxu0
        %v2430 = vadd.f32 0.0, %v2429
        %v2431 = vpop.f32.mrb[0].mxu0
        %2432 = vmatprep.mubr.bf16.mxu0 0
        %2433 = vmatmul.mubr.bf16.gmra.mrb[0].mxu0 %v1408
        %v2434 = vpop.f32.mrb[0].mxu0
        %v2435 = vadd.f32 0.0, %v2434
        %v2436 = vpop.f32.mrb[0].mxu0
        %v2437 = vpop.f32.mrb[0].mxu0
        %v2438 = vadd.f32 0.0, %v2437
        %v2439 = vpop.f32.mrb[0].mxu0
        %2440 = vmatprep.mubr.bf16.mxu0 0
        %2441 = vmatmul.mubr.bf16.gmra.mrb[0].mxu0 %v1411
        %v2442 = vpop.f32.mrb[0].mxu0
        %v2443 = vadd.f32 0.0, %v2442
        %v2444 = vpop.f32.mrb[0].mxu0
        %v2445 = vpop.f32.mrb[0].mxu0
        %v2446 = vadd.f32 0.0, %v2445
        %v2447 = vpop.f32.mrb[0].mxu0
        %2448 = vmatprep.mubr.bf16.mxu0 0
        %2449 = vmatmul.mubr.bf16.gmra.mrb[0].mxu0 %v1414
        %v2450 = vpop.f32.mrb[0].mxu0
        %v2451 = vadd.f32 0.0, %v2450
        %v2452 = vpop.f32.mrb[0].mxu0
        %v2453 = vpop.f32.mrb[0].mxu0
        %v2454 = vadd.f32 0.0, %v2453
        %v2455 = vpop.f32.mrb[0].mxu0
        %2456 = vmatprep.mubr.bf16.mxu0 0
        %2457 = vmatmul.mubr.bf16.gmra.mrb[0].mxu0 %v1417
        %v2458 = vpop.f32.mrb[0].mxu0
        %v2459 = vadd.f32 0.0, %v2458
        %v2460 = vpop.f32.mrb[0].mxu0
        %v2461 = vpop.f32.mrb[0].mxu0
        %v2462 = vadd.f32 0.0, %v2461
        %v2463 = vpop.f32.mrb[0].mxu0
        %2464 = vmatprep.mubr.bf16.mxu0 0
        %2465 = vmatmul.mubr.bf16.gmra.mrb[0].mxu0 %v1420
        %v2466 = vpop.f32.mrb[0].mxu0
        %v2467 = vadd.f32 0.0, %v2466
        %v2468 = vpop.f32.mrb[0].mxu0
        %v2469 = vpop.f32.mrb[0].mxu0
        %v2470 = vadd.f32 0.0, %v2469
        %v2471 = vpop.f32.mrb[0].mxu0
        %2472 = vmatprep.mubr.bf16.mxu0 0
        %2473 = vmatmul.mubr.bf16.gmra.mrb[0].mxu0 %v1423
        %v2474 = vpop.f32.mrb[0].mxu0
        %v2475 = vadd.f32 0.0, %v2474
        %v2476 = vpop.f32.mrb[0].mxu0
        %v2477 = vpop.f32.mrb[0].mxu0
        %v2478 = vadd.f32 0.0, %v2477
        %v2479 = vpop.f32.mrb[0].mxu0
        %2480 = vmatprep.mubr.bf16.mxu0 0
        %2481 = vmatmul.mubr.bf16.gmra.mrb[0].mxu0 %v1426
        %v2482 = vpop.f32.mrb[0].mxu0
        %v2483 = vadd.f32 0.0, %v2482
        %v2484 = vpop.f32.mrb[0].mxu0
        %v2485 = vpop.f32.mrb[0].mxu0
        %v2486 = vadd.f32 0.0, %v2485
        %v2487 = vpop.f32.mrb[0].mxu0
        %2488 = vdwg.mxu0
        %v2489 = vpack.c.bf16 %v1470, %v1467
        %v2490 = vpack.c.bf16 %v1478, %v1475
        %v2491 = vpack.c.bf16 %v1486, %v1483
        %v2492 = vpack.c.bf16 %v1494, %v1491
        %v2493 = vpack.c.bf16 %v1502, %v1499
        %v2494 = vpack.c.bf16 %v1510, %v1507
        %v2495 = vpack.c.bf16 %v1518, %v1515
        %v2496 = vpack.c.bf16 %v1526, %v1523
        %v2497 = vpack.c.bf16 %v1534, %v1531
        %v2498 = vpack.c.bf16 %v1542, %v1539
        %v2499 = vpack.c.bf16 %v1550, %v1547
        %v2500 = vpack.c.bf16 %v1558, %v1555
        %v2501 = vpack.c.bf16 %v1566, %v1563
        %v2502 = vpack.c.bf16 %v1574, %v1571
        %v2503 = vpack.c.bf16 %v1582, %v1579
        %v2504 = vpack.c.bf16 %v1590, %v1587
        %v2505 = vpack.c.bf16 %v1598, %v1595
        %v2506 = vpack.c.bf16 %v1606, %v1603
        %v2507 = vpack.c.bf16 %v1614, %v1611
        %v2508 = vpack.c.bf16 %v1622, %v1619
        %v2509 = vpack.c.bf16 %v1630, %v1627
        %v2510 = vpack.c.bf16 %v1638, %v1635
        %v2511 = vpack.c.bf16 %v1646, %v1643
        %v2512 = vpack.c.bf16 %v1654, %v1651
        %v2513 = vpack.c.bf16 %v1662, %v1659
        %v2514 = vpack.c.bf16 %v1670, %v1667
        %v2515 = vpack.c.bf16 %v1678, %v1675
        %v2516 = vpack.c.bf16 %v1686, %v1683
        %v2517 = vpack.c.bf16 %v1694, %v1691
        %v2518 = vpack.c.bf16 %v1702, %v1699
        %v2519 = vpack.c.bf16 %v1710, %v1707
        %v2520 = vpack.c.bf16 %v1718, %v1715
        %v2521 = vpack.c.bf16 %v1726, %v1723
        %v2522 = vpack.c.bf16 %v1734, %v1731
        %v2523 = vpack.c.bf16 %v1742, %v1739
        %v2524 = vpack.c.bf16 %v1750, %v1747
        %v2525 = vpack.c.bf16 %v1758, %v1755
        %v2526 = vpack.c.bf16 %v1766, %v1763
        %v2527 = vpack.c.bf16 %v1774, %v1771
        %v2528 = vpack.c.bf16 %v1782, %v1779
        %v2529 = vpack.c.bf16 %v1790, %v1787
        %v2530 = vpack.c.bf16 %v1798, %v1795
        %v2531 = vpack.c.bf16 %v1806, %v1803
        %v2532 = vpack.c.bf16 %v1814, %v1811
        %v2533 = vpack.c.bf16 %v1822, %v1819
        %v2534 = vpack.c.bf16 %v1830, %v1827
        %v2535 = vpack.c.bf16 %v1838, %v1835
        %v2536 = vpack.c.bf16 %v1846, %v1843
        %v2537 = vpack.c.bf16 %v1854, %v1851
        %v2538 = vpack.c.bf16 %v1862, %v1859
        %v2539 = vpack.c.bf16 %v1870, %v1867
        %v2540 = vpack.c.bf16 %v1878, %v1875
        %v2541 = vpack.c.bf16 %v1886, %v1883
        %v2542 = vpack.c.bf16 %v1894, %v1891
        %v2543 = vpack.c.bf16 %v1902, %v1899
        %v2544 = vpack.c.bf16 %v1910, %v1907
        %v2545 = vpack.c.bf16 %v1918, %v1915
        %v2546 = vpack.c.bf16 %v1926, %v1923
        %v2547 = vpack.c.bf16 %v1934, %v1931
        %v2548 = vpack.c.bf16 %v1942, %v1939
        %v2549 = vpack.c.bf16 %v1950, %v1947
        %v2550 = vpack.c.bf16 %v1958, %v1955
        %v2551 = vpack.c.bf16 %v1966, %v1963
        %v2552 = vpack.c.bf16 %v1974, %v1971
        %v2553 = vpack.c.bf16 %v1982, %v1979
        %v2554 = vpack.c.bf16 %v1990, %v1987
        %v2555 = vpack.c.bf16 %v1998, %v1995
        %v2556 = vpack.c.bf16 %v2006, %v2003
        %v2557 = vpack.c.bf16 %v2014, %v2011
        %v2558 = vpack.c.bf16 %v2022, %v2019
        %v2559 = vpack.c.bf16 %v2030, %v2027
        %v2560 = vpack.c.bf16 %v2038, %v2035
        %v2561 = vpack.c.bf16 %v2046, %v2043
        %v2562 = vpack.c.bf16 %v2054, %v2051
        %v2563 = vpack.c.bf16 %v2062, %v2059
        %v2564 = vpack.c.bf16 %v2070, %v2067
        %v2565 = vpack.c.bf16 %v2078, %v2075
        %v2566 = vpack.c.bf16 %v2086, %v2083
        %v2567 = vpack.c.bf16 %v2094, %v2091
        %v2568 = vpack.c.bf16 %v2102, %v2099
        %v2569 = vpack.c.bf16 %v2110, %v2107
        %v2570 = vpack.c.bf16 %v2118, %v2115
        %v2571 = vpack.c.bf16 %v2126, %v2123
        %v2572 = vpack.c.bf16 %v2134, %v2131
        %v2573 = vpack.c.bf16 %v2142, %v2139
        %v2574 = vpack.c.bf16 %v2150, %v2147
        %v2575 = vpack.c.bf16 %v2158, %v2155
        %v2576 = vpack.c.bf16 %v2166, %v2163
        %v2577 = vpack.c.bf16 %v2174, %v2171
        %v2578 = vpack.c.bf16 %v2182, %v2179
        %v2579 = vpack.c.bf16 %v2190, %v2187
        %v2580 = vpack.c.bf16 %v2198, %v2195
        %v2581 = vpack.c.bf16 %v2206, %v2203
        %v2582 = vpack.c.bf16 %v2214, %v2211
        %v2583 = vpack.c.bf16 %v2222, %v2219
        %v2584 = vpack.c.bf16 %v2230, %v2227
        %v2585 = vpack.c.bf16 %v2238, %v2235
        %v2586 = vpack.c.bf16 %v2246, %v2243
        %v2587 = vpack.c.bf16 %v2254, %v2251
        %v2588 = vpack.c.bf16 %v2262, %v2259
        %v2589 = vpack.c.bf16 %v2270, %v2267
        %v2590 = vpack.c.bf16 %v2278, %v2275
        %v2591 = vpack.c.bf16 %v2286, %v2283
        %v2592 = vpack.c.bf16 %v2294, %v2291
        %v2593 = vpack.c.bf16 %v2302, %v2299
        %v2594 = vpack.c.bf16 %v2310, %v2307
        %v2595 = vpack.c.bf16 %v2318, %v2315
        %v2596 = vpack.c.bf16 %v2326, %v2323
        %v2597 = vpack.c.bf16 %v2334, %v2331
        %v2598 = vpack.c.bf16 %v2342, %v2339
        %v2599 = vpack.c.bf16 %v2350, %v2347
        %v2600 = vpack.c.bf16 %v2358, %v2355
        %v2601 = vpack.c.bf16 %v2366, %v2363
        %v2602 = vpack.c.bf16 %v2374, %v2371
        %v2603 = vpack.c.bf16 %v2382, %v2379
        %v2604 = vpack.c.bf16 %v2390, %v2387
        %v2605 = vpack.c.bf16 %v2398, %v2395
        %v2606 = vpack.c.bf16 %v2406, %v2403
        %v2607 = vpack.c.bf16 %v2414, %v2411
        %v2608 = vpack.c.bf16 %v2422, %v2419
        %v2609 = vpack.c.bf16 %v2430, %v2427
        %v2610 = vpack.c.bf16 %v2438, %v2435
        %v2611 = vpack.c.bf16 %v2446, %v2443
        %v2612 = vpack.c.bf16 %v2454, %v2451
        %v2613 = vpack.c.bf16 %v2462, %v2459
        %v2614 = vpack.c.bf16 %v2470, %v2467
        %v2615 = vpack.c.bf16 %v2478, %v2475
        %v2616 = vpack.c.bf16 %v2486, %v2483
        %v2745 = vunpack.c.l.b16 %v2489
        %v2746 = vunpack.c.h.b16 %v2489
        %v2747 = vunpack.c.l.b16 %v2490
        %v2748 = vunpack.c.h.b16 %v2490
        %v2749 = vunpack.c.l.b16 %v2491
        %v2750 = vunpack.c.h.b16 %v2491
        %v2751 = vunpack.c.l.b16 %v2492
        %v2752 = vunpack.c.h.b16 %v2492
        %v2753 = vunpack.c.l.b16 %v2493
        %v2754 = vunpack.c.h.b16 %v2493
        %v2755 = vunpack.c.l.b16 %v2494
        %v2756 = vunpack.c.h.b16 %v2494
        %v2757 = vunpack.c.l.b16 %v2495
        %v2758 = vunpack.c.h.b16 %v2495
        %v2759 = vunpack.c.l.b16 %v2496
        %v2760 = vunpack.c.h.b16 %v2496
        %v2761 = vunpack.c.l.b16 %v2497
        %v2762 = vunpack.c.h.b16 %v2497
        %v2763 = vunpack.c.l.b16 %v2498
        %v2764 = vunpack.c.h.b16 %v2498
        %v2765 = vunpack.c.l.b16 %v2499
        %v2766 = vunpack.c.h.b16 %v2499
        %v2767 = vunpack.c.l.b16 %v2500
        %v2768 = vunpack.c.h.b16 %v2500
        %v2769 = vunpack.c.l.b16 %v2501
        %v2770 = vunpack.c.h.b16 %v2501
        %v2771 = vunpack.c.l.b16 %v2502
        %v2772 = vunpack.c.h.b16 %v2502
        %v2773 = vunpack.c.l.b16 %v2503
        %v2774 = vunpack.c.h.b16 %v2503
        %v2775 = vunpack.c.l.b16 %v2504
        %v2776 = vunpack.c.h.b16 %v2504
        %v2777 = vunpack.c.l.b16 %v2505
        %v2778 = vunpack.c.h.b16 %v2505
        %v2779 = vunpack.c.l.b16 %v2506
        %v2780 = vunpack.c.h.b16 %v2506
        %v2781 = vunpack.c.l.b16 %v2507
        %v2782 = vunpack.c.h.b16 %v2507
        %v2783 = vunpack.c.l.b16 %v2508
        %v2784 = vunpack.c.h.b16 %v2508
        %v2785 = vunpack.c.l.b16 %v2509
        %v2786 = vunpack.c.h.b16 %v2509
        %v2787 = vunpack.c.l.b16 %v2510
        %v2788 = vunpack.c.h.b16 %v2510
        %v2789 = vunpack.c.l.b16 %v2511
        %v2790 = vunpack.c.h.b16 %v2511
        %v2791 = vunpack.c.l.b16 %v2512
        %v2792 = vunpack.c.h.b16 %v2512
        %v2793 = vunpack.c.l.b16 %v2513
        %v2794 = vunpack.c.h.b16 %v2513
        %v2795 = vunpack.c.l.b16 %v2514
        %v2796 = vunpack.c.h.b16 %v2514
        %v2797 = vunpack.c.l.b16 %v2515
        %v2798 = vunpack.c.h.b16 %v2515
        %v2799 = vunpack.c.l.b16 %v2516
        %v2800 = vunpack.c.h.b16 %v2516
        %v2801 = vunpack.c.l.b16 %v2517
        %v2802 = vunpack.c.h.b16 %v2517
        %v2803 = vunpack.c.l.b16 %v2518
        %v2804 = vunpack.c.h.b16 %v2518
        %v2805 = vunpack.c.l.b16 %v2519
        %v2806 = vunpack.c.h.b16 %v2519
        %v2807 = vunpack.c.l.b16 %v2520
        %v2808 = vunpack.c.h.b16 %v2520
        %v2809 = vunpack.c.l.b16 %v2521
        %v2810 = vunpack.c.h.b16 %v2521
        %v2811 = vunpack.c.l.b16 %v2522
        %v2812 = vunpack.c.h.b16 %v2522
        %v2813 = vunpack.c.l.b16 %v2523
        %v2814 = vunpack.c.h.b16 %v2523
        %v2815 = vunpack.c.l.b16 %v2524
        %v2816 = vunpack.c.h.b16 %v2524
        %v2817 = vunpack.c.l.b16 %v2525
        %v2818 = vunpack.c.h.b16 %v2525
        %v2819 = vunpack.c.l.b16 %v2526
        %v2820 = vunpack.c.h.b16 %v2526
        %v2821 = vunpack.c.l.b16 %v2527
        %v2822 = vunpack.c.h.b16 %v2527
        %v2823 = vunpack.c.l.b16 %v2528
        %v2824 = vunpack.c.h.b16 %v2528
        %v2825 = vunpack.c.l.b16 %v2529
        %v2826 = vunpack.c.h.b16 %v2529
        %v2827 = vunpack.c.l.b16 %v2530
        %v2828 = vunpack.c.h.b16 %v2530
        %v2829 = vunpack.c.l.b16 %v2531
        %v2830 = vunpack.c.h.b16 %v2531
        %v2831 = vunpack.c.l.b16 %v2532
        %v2832 = vunpack.c.h.b16 %v2532
        %v2833 = vunpack.c.l.b16 %v2533
        %v2834 = vunpack.c.h.b16 %v2533
        %v2835 = vunpack.c.l.b16 %v2534
        %v2836 = vunpack.c.h.b16 %v2534
        %v2837 = vunpack.c.l.b16 %v2535
        %v2838 = vunpack.c.h.b16 %v2535
        %v2839 = vunpack.c.l.b16 %v2536
        %v2840 = vunpack.c.h.b16 %v2536
        %v2841 = vunpack.c.l.b16 %v2537
        %v2842 = vunpack.c.h.b16 %v2537
        %v2843 = vunpack.c.l.b16 %v2538
        %v2844 = vunpack.c.h.b16 %v2538
        %v2845 = vunpack.c.l.b16 %v2539
        %v2846 = vunpack.c.h.b16 %v2539
        %v2847 = vunpack.c.l.b16 %v2540
        %v2848 = vunpack.c.h.b16 %v2540
        %v2849 = vunpack.c.l.b16 %v2541
        %v2850 = vunpack.c.h.b16 %v2541
        %v2851 = vunpack.c.l.b16 %v2542
        %v2852 = vunpack.c.h.b16 %v2542
        %v2853 = vunpack.c.l.b16 %v2543
        %v2854 = vunpack.c.h.b16 %v2543
        %v2855 = vunpack.c.l.b16 %v2544
        %v2856 = vunpack.c.h.b16 %v2544
        %v2857 = vunpack.c.l.b16 %v2545
        %v2858 = vunpack.c.h.b16 %v2545
        %v2859 = vunpack.c.l.b16 %v2546
        %v2860 = vunpack.c.h.b16 %v2546
        %v2861 = vunpack.c.l.b16 %v2547
        %v2862 = vunpack.c.h.b16 %v2547
        %v2863 = vunpack.c.l.b16 %v2548
        %v2864 = vunpack.c.h.b16 %v2548
        %v2865 = vunpack.c.l.b16 %v2549
        %v2866 = vunpack.c.h.b16 %v2549
        %v2867 = vunpack.c.l.b16 %v2550
        %v2868 = vunpack.c.h.b16 %v2550
        %v2869 = vunpack.c.l.b16 %v2551
        %v2870 = vunpack.c.h.b16 %v2551
        %v2871 = vunpack.c.l.b16 %v2552
        %v2872 = vunpack.c.h.b16 %v2552
        %v2873 = vunpack.c.l.b16 %v2553
        %v2874 = vunpack.c.h.b16 %v2553
        %v2875 = vunpack.c.l.b16 %v2554
        %v2876 = vunpack.c.h.b16 %v2554
        %v2877 = vunpack.c.l.b16 %v2555
        %v2878 = vunpack.c.h.b16 %v2555
        %v2879 = vunpack.c.l.b16 %v2556
        %v2880 = vunpack.c.h.b16 %v2556
        %v2881 = vunpack.c.l.b16 %v2557
        %v2882 = vunpack.c.h.b16 %v2557
        %v2883 = vunpack.c.l.b16 %v2558
        %v2884 = vunpack.c.h.b16 %v2558
        %v2885 = vunpack.c.l.b16 %v2559
        %v2886 = vunpack.c.h.b16 %v2559
        %v2887 = vunpack.c.l.b16 %v2560
        %v2888 = vunpack.c.h.b16 %v2560
        %v2889 = vunpack.c.l.b16 %v2561
        %v2890 = vunpack.c.h.b16 %v2561
        %v2891 = vunpack.c.l.b16 %v2562
        %v2892 = vunpack.c.h.b16 %v2562
        %v2893 = vunpack.c.l.b16 %v2563
        %v2894 = vunpack.c.h.b16 %v2563
        %v2895 = vunpack.c.l.b16 %v2564
        %v2896 = vunpack.c.h.b16 %v2564
        %v2897 = vunpack.c.l.b16 %v2565
        %v2898 = vunpack.c.h.b16 %v2565
        %v2899 = vunpack.c.l.b16 %v2566
        %v2900 = vunpack.c.h.b16 %v2566
        %v2901 = vunpack.c.l.b16 %v2567
        %v2902 = vunpack.c.h.b16 %v2567
        %v2903 = vunpack.c.l.b16 %v2568
        %v2904 = vunpack.c.h.b16 %v2568
        %v2905 = vunpack.c.l.b16 %v2569
        %v2906 = vunpack.c.h.b16 %v2569
        %v2907 = vunpack.c.l.b16 %v2570
        %v2908 = vunpack.c.h.b16 %v2570
        %v2909 = vunpack.c.l.b16 %v2571
        %v2910 = vunpack.c.h.b16 %v2571
        %v2911 = vunpack.c.l.b16 %v2572
        %v2912 = vunpack.c.h.b16 %v2572
        %v2913 = vunpack.c.l.b16 %v2573
        %v2914 = vunpack.c.h.b16 %v2573
        %v2915 = vunpack.c.l.b16 %v2574
        %v2916 = vunpack.c.h.b16 %v2574
        %v2917 = vunpack.c.l.b16 %v2575
        %v2918 = vunpack.c.h.b16 %v2575
        %v2919 = vunpack.c.l.b16 %v2576
        %v2920 = vunpack.c.h.b16 %v2576
        %v2921 = vunpack.c.l.b16 %v2577
        %v2922 = vunpack.c.h.b16 %v2577
        %v2923 = vunpack.c.l.b16 %v2578
        %v2924 = vunpack.c.h.b16 %v2578
        %v2925 = vunpack.c.l.b16 %v2579
        %v2926 = vunpack.c.h.b16 %v2579
        %v2927 = vunpack.c.l.b16 %v2580
        %v2928 = vunpack.c.h.b16 %v2580
        %v2929 = vunpack.c.l.b16 %v2581
        %v2930 = vunpack.c.h.b16 %v2581
        %v2931 = vunpack.c.l.b16 %v2582
        %v2932 = vunpack.c.h.b16 %v2582
        %v2933 = vunpack.c.l.b16 %v2583
        %v2934 = vunpack.c.h.b16 %v2583
        %v2935 = vunpack.c.l.b16 %v2584
        %v2936 = vunpack.c.h.b16 %v2584
        %v2937 = vunpack.c.l.b16 %v2585
        %v2938 = vunpack.c.h.b16 %v2585
        %v2939 = vunpack.c.l.b16 %v2586
        %v2940 = vunpack.c.h.b16 %v2586
        %v2941 = vunpack.c.l.b16 %v2587
        %v2942 = vunpack.c.h.b16 %v2587
        %v2943 = vunpack.c.l.b16 %v2588
        %v2944 = vunpack.c.h.b16 %v2588
        %v2945 = vunpack.c.l.b16 %v2589
        %v2946 = vunpack.c.h.b16 %v2589
        %v2947 = vunpack.c.l.b16 %v2590
        %v2948 = vunpack.c.h.b16 %v2590
        %v2949 = vunpack.c.l.b16 %v2591
        %v2950 = vunpack.c.h.b16 %v2591
        %v2951 = vunpack.c.l.b16 %v2592
        %v2952 = vunpack.c.h.b16 %v2592
        %v2953 = vunpack.c.l.b16 %v2593
        %v2954 = vunpack.c.h.b16 %v2593
        %v2955 = vunpack.c.l.b16 %v2594
        %v2956 = vunpack.c.h.b16 %v2594
        %v2957 = vunpack.c.l.b16 %v2595
        %v2958 = vunpack.c.h.b16 %v2595
        %v2959 = vunpack.c.l.b16 %v2596
        %v2960 = vunpack.c.h.b16 %v2596
        %v2961 = vunpack.c.l.b16 %v2597
        %v2962 = vunpack.c.h.b16 %v2597
        %v2963 = vunpack.c.l.b16 %v2598
        %v2964 = vunpack.c.h.b16 %v2598
        %v2965 = vunpack.c.l.b16 %v2599
        %v2966 = vunpack.c.h.b16 %v2599
        %v2967 = vunpack.c.l.b16 %v2600
        %v2968 = vunpack.c.h.b16 %v2600
        %v2969 = vunpack.c.l.b16 %v2601
        %v2970 = vunpack.c.h.b16 %v2601
        %v2971 = vunpack.c.l.b16 %v2602
        %v2972 = vunpack.c.h.b16 %v2602
        %v2973 = vunpack.c.l.b16 %v2603
        %v2974 = vunpack.c.h.b16 %v2603
        %v2975 = vunpack.c.l.b16 %v2604
        %v2976 = vunpack.c.h.b16 %v2604
        %v2977 = vunpack.c.l.b16 %v2605
        %v2978 = vunpack.c.h.b16 %v2605
        %v2979 = vunpack.c.l.b16 %v2606
        %v2980 = vunpack.c.h.b16 %v2606
        %v2981 = vunpack.c.l.b16 %v2607
        %v2982 = vunpack.c.h.b16 %v2607
        %v2983 = vunpack.c.l.b16 %v2608
        %v2984 = vunpack.c.h.b16 %v2608
        %v2985 = vunpack.c.l.b16 %v2609
        %v2986 = vunpack.c.h.b16 %v2609
        %v2987 = vunpack.c.l.b16 %v2610
        %v2988 = vunpack.c.h.b16 %v2610
        %v2989 = vunpack.c.l.b16 %v2611
        %v2990 = vunpack.c.h.b16 %v2611
        %v2991 = vunpack.c.l.b16 %v2612
        %v2992 = vunpack.c.h.b16 %v2612
        %v2993 = vunpack.c.l.b16 %v2613
        %v2994 = vunpack.c.h.b16 %v2613
        %v2995 = vunpack.c.l.b16 %v2614
        %v2996 = vunpack.c.h.b16 %v2614
        %v2997 = vunpack.c.l.b16 %v2615
        %v2998 = vunpack.c.h.b16 %v2615
        %v2999 = vunpack.c.l.b16 %v2616
        %v3000 = vunpack.c.h.b16 %v2616
        %v3001 = vpack.c.b16 %v2745, %v2745
        %v3002 = vpack.c.b16 %v2746, %v2746
        %v3003 = vpack.c.b16 %v2747, %v2747
        %v3004 = vpack.c.b16 %v2748, %v2748
        %v3005 = vpack.c.b16 %v2749, %v2749
        %v3006 = vpack.c.b16 %v2750, %v2750
        %v3007 = vpack.c.b16 %v2751, %v2751
        %v3008 = vpack.c.b16 %v2752, %v2752
        %v3009 = vpack.c.b16 %v2753, %v2753
        %v3010 = vpack.c.b16 %v2754, %v2754
        %v3011 = vpack.c.b16 %v2755, %v2755
        %v3012 = vpack.c.b16 %v2756, %v2756
        %v3013 = vpack.c.b16 %v2757, %v2757
        %v3014 = vpack.c.b16 %v2758, %v2758
        %v3015 = vpack.c.b16 %v2759, %v2759
        %v3016 = vpack.c.b16 %v2760, %v2760
        %v3017 = vpack.c.b16 %v2761, %v2761
        %v3018 = vpack.c.b16 %v2762, %v2762
        %v3019 = vpack.c.b16 %v2763, %v2763
        %v3020 = vpack.c.b16 %v2764, %v2764
        %v3021 = vpack.c.b16 %v2765, %v2765
        %v3022 = vpack.c.b16 %v2766, %v2766
        %v3023 = vpack.c.b16 %v2767, %v2767
        %v3024 = vpack.c.b16 %v2768, %v2768
        %v3025 = vpack.c.b16 %v2769, %v2769
        %v3026 = vpack.c.b16 %v2770, %v2770
        %v3027 = vpack.c.b16 %v2771, %v2771
        %v3028 = vpack.c.b16 %v2772, %v2772
        %v3029 = vpack.c.b16 %v2773, %v2773
        %v3030 = vpack.c.b16 %v2774, %v2774
        %v3031 = vpack.c.b16 %v2775, %v2775
        %v3032 = vpack.c.b16 %v2776, %v2776
        %v3033 = vpack.c.b16 %v2777, %v2777
        %v3034 = vpack.c.b16 %v2778, %v2778
        %v3035 = vpack.c.b16 %v2779, %v2779
        %v3036 = vpack.c.b16 %v2780, %v2780
        %v3037 = vpack.c.b16 %v2781, %v2781
        %v3038 = vpack.c.b16 %v2782, %v2782
        %v3039 = vpack.c.b16 %v2783, %v2783
        %v3040 = vpack.c.b16 %v2784, %v2784
        %v3041 = vpack.c.b16 %v2785, %v2785
        %v3042 = vpack.c.b16 %v2786, %v2786
        %v3043 = vpack.c.b16 %v2787, %v2787
        %v3044 = vpack.c.b16 %v2788, %v2788
        %v3045 = vpack.c.b16 %v2789, %v2789
        %v3046 = vpack.c.b16 %v2790, %v2790
        %v3047 = vpack.c.b16 %v2791, %v2791
        %v3048 = vpack.c.b16 %v2792, %v2792
        %v3049 = vpack.c.b16 %v2793, %v2793
        %v3050 = vpack.c.b16 %v2794, %v2794
        %v3051 = vpack.c.b16 %v2795, %v2795
        %v3052 = vpack.c.b16 %v2796, %v2796
        %v3053 = vpack.c.b16 %v2797, %v2797
        %v3054 = vpack.c.b16 %v2798, %v2798
        %v3055 = vpack.c.b16 %v2799, %v2799
        %v3056 = vpack.c.b16 %v2800, %v2800
        %v3057 = vpack.c.b16 %v2801, %v2801
        %v3058 = vpack.c.b16 %v2802, %v2802
        %v3059 = vpack.c.b16 %v2803, %v2803
        %v3060 = vpack.c.b16 %v2804, %v2804
        %v3061 = vpack.c.b16 %v2805, %v2805
        %v3062 = vpack.c.b16 %v2806, %v2806
        %v3063 = vpack.c.b16 %v2807, %v2807
        %v3064 = vpack.c.b16 %v2808, %v2808
        %v3065 = vpack.c.b16 %v2809, %v2809
        %v3066 = vpack.c.b16 %v2810, %v2810
        %v3067 = vpack.c.b16 %v2811, %v2811
        %v3068 = vpack.c.b16 %v2812, %v2812
        %v3069 = vpack.c.b16 %v2813, %v2813
        %v3070 = vpack.c.b16 %v2814, %v2814
        %v3071 = vpack.c.b16 %v2815, %v2815
        %v3072 = vpack.c.b16 %v2816, %v2816
        %v3073 = vpack.c.b16 %v2817, %v2817
        %v3074 = vpack.c.b16 %v2818, %v2818
        %v3075 = vpack.c.b16 %v2819, %v2819
        %v3076 = vpack.c.b16 %v2820, %v2820
        %v3077 = vpack.c.b16 %v2821, %v2821
        %v3078 = vpack.c.b16 %v2822, %v2822
        %v3079 = vpack.c.b16 %v2823, %v2823
        %v3080 = vpack.c.b16 %v2824, %v2824
        %v3081 = vpack.c.b16 %v2825, %v2825
        %v3082 = vpack.c.b16 %v2826, %v2826
        %v3083 = vpack.c.b16 %v2827, %v2827
        %v3084 = vpack.c.b16 %v2828, %v2828
        %v3085 = vpack.c.b16 %v2829, %v2829
        %v3086 = vpack.c.b16 %v2830, %v2830
        %v3087 = vpack.c.b16 %v2831, %v2831
        %v3088 = vpack.c.b16 %v2832, %v2832
        %v3089 = vpack.c.b16 %v2833, %v2833
        %v3090 = vpack.c.b16 %v2834, %v2834
        %v3091 = vpack.c.b16 %v2835, %v2835
        %v3092 = vpack.c.b16 %v2836, %v2836
        %v3093 = vpack.c.b16 %v2837, %v2837
        %v3094 = vpack.c.b16 %v2838, %v2838
        %v3095 = vpack.c.b16 %v2839, %v2839
        %v3096 = vpack.c.b16 %v2840, %v2840
        %v3097 = vpack.c.b16 %v2841, %v2841
        %v3098 = vpack.c.b16 %v2842, %v2842
        %v3099 = vpack.c.b16 %v2843, %v2843
        %v3100 = vpack.c.b16 %v2844, %v2844
        %v3101 = vpack.c.b16 %v2845, %v2845
        %v3102 = vpack.c.b16 %v2846, %v2846
        %v3103 = vpack.c.b16 %v2847, %v2847
        %v3104 = vpack.c.b16 %v2848, %v2848
        %v3105 = vpack.c.b16 %v2849, %v2849
        %v3106 = vpack.c.b16 %v2850, %v2850
        %v3107 = vpack.c.b16 %v2851, %v2851
        %v3108 = vpack.c.b16 %v2852, %v2852
        %v3109 = vpack.c.b16 %v2853, %v2853
        %v3110 = vpack.c.b16 %v2854, %v2854
        %v3111 = vpack.c.b16 %v2855, %v2855
        %v3112 = vpack.c.b16 %v2856, %v2856
        %v3113 = vpack.c.b16 %v2857, %v2857
        %v3114 = vpack.c.b16 %v2858, %v2858
        %v3115 = vpack.c.b16 %v2859, %v2859
        %v3116 = vpack.c.b16 %v2860, %v2860
        %v3117 = vpack.c.b16 %v2861, %v2861
        %v3118 = vpack.c.b16 %v2862, %v2862
        %v3119 = vpack.c.b16 %v2863, %v2863
        %v3120 = vpack.c.b16 %v2864, %v2864
        %v3121 = vpack.c.b16 %v2865, %v2865
        %v3122 = vpack.c.b16 %v2866, %v2866
        %v3123 = vpack.c.b16 %v2867, %v2867
        %v3124 = vpack.c.b16 %v2868, %v2868
        %v3125 = vpack.c.b16 %v2869, %v2869
        %v3126 = vpack.c.b16 %v2870, %v2870
        %v3127 = vpack.c.b16 %v2871, %v2871
        %v3128 = vpack.c.b16 %v2872, %v2872
        %v3129 = vpack.c.b16 %v2873, %v2873
        %v3130 = vpack.c.b16 %v2874, %v2874
        %v3131 = vpack.c.b16 %v2875, %v2875
        %v3132 = vpack.c.b16 %v2876, %v2876
        %v3133 = vpack.c.b16 %v2877, %v2877
        %v3134 = vpack.c.b16 %v2878, %v2878
        %v3135 = vpack.c.b16 %v2879, %v2879
        %v3136 = vpack.c.b16 %v2880, %v2880
        %v3137 = vpack.c.b16 %v2881, %v2881
        %v3138 = vpack.c.b16 %v2882, %v2882
        %v3139 = vpack.c.b16 %v2883, %v2883
        %v3140 = vpack.c.b16 %v2884, %v2884
        %v3141 = vpack.c.b16 %v2885, %v2885
        %v3142 = vpack.c.b16 %v2886, %v2886
        %v3143 = vpack.c.b16 %v2887, %v2887
        %v3144 = vpack.c.b16 %v2888, %v2888
        %v3145 = vpack.c.b16 %v2889, %v2889
        %v3146 = vpack.c.b16 %v2890, %v2890
        %v3147 = vpack.c.b16 %v2891, %v2891
        %v3148 = vpack.c.b16 %v2892, %v2892
        %v3149 = vpack.c.b16 %v2893, %v2893
        %v3150 = vpack.c.b16 %v2894, %v2894
        %v3151 = vpack.c.b16 %v2895, %v2895
        %v3152 = vpack.c.b16 %v2896, %v2896
        %v3153 = vpack.c.b16 %v2897, %v2897
        %v3154 = vpack.c.b16 %v2898, %v2898
        %v3155 = vpack.c.b16 %v2899, %v2899
        %v3156 = vpack.c.b16 %v2900, %v2900
        %v3157 = vpack.c.b16 %v2901, %v2901
        %v3158 = vpack.c.b16 %v2902, %v2902
        %v3159 = vpack.c.b16 %v2903, %v2903
        %v3160 = vpack.c.b16 %v2904, %v2904
        %v3161 = vpack.c.b16 %v2905, %v2905
        %v3162 = vpack.c.b16 %v2906, %v2906
        %v3163 = vpack.c.b16 %v2907, %v2907
        %v3164 = vpack.c.b16 %v2908, %v2908
        %v3165 = vpack.c.b16 %v2909, %v2909
        %v3166 = vpack.c.b16 %v2910, %v2910
        %v3167 = vpack.c.b16 %v2911, %v2911
        %v3168 = vpack.c.b16 %v2912, %v2912
        %v3169 = vpack.c.b16 %v2913, %v2913
        %v3170 = vpack.c.b16 %v2914, %v2914
        %v3171 = vpack.c.b16 %v2915, %v2915
        %v3172 = vpack.c.b16 %v2916, %v2916
        %v3173 = vpack.c.b16 %v2917, %v2917
        %v3174 = vpack.c.b16 %v2918, %v2918
        %v3175 = vpack.c.b16 %v2919, %v2919
        %v3176 = vpack.c.b16 %v2920, %v2920
        %v3177 = vpack.c.b16 %v2921, %v2921
        %v3178 = vpack.c.b16 %v2922, %v2922
        %v3179 = vpack.c.b16 %v2923, %v2923
        %v3180 = vpack.c.b16 %v2924, %v2924
        %v3181 = vpack.c.b16 %v2925, %v2925
        %v3182 = vpack.c.b16 %v2926, %v2926
        %v3183 = vpack.c.b16 %v2927, %v2927
        %v3184 = vpack.c.b16 %v2928, %v2928
        %v3185 = vpack.c.b16 %v2929, %v2929
        %v3186 = vpack.c.b16 %v2930, %v2930
        %v3187 = vpack.c.b16 %v2931, %v2931
        %v3188 = vpack.c.b16 %v2932, %v2932
        %v3189 = vpack.c.b16 %v2933, %v2933
        %v3190 = vpack.c.b16 %v2934, %v2934
        %v3191 = vpack.c.b16 %v2935, %v2935
        %v3192 = vpack.c.b16 %v2936, %v2936
        %v3193 = vpack.c.b16 %v2937, %v2937
        %v3194 = vpack.c.b16 %v2938, %v2938
        %v3195 = vpack.c.b16 %v2939, %v2939
        %v3196 = vpack.c.b16 %v2940, %v2940
        %v3197 = vpack.c.b16 %v2941, %v2941
        %v3198 = vpack.c.b16 %v2942, %v2942
        %v3199 = vpack.c.b16 %v2943, %v2943
        %v3200 = vpack.c.b16 %v2944, %v2944
        %v3201 = vpack.c.b16 %v2945, %v2945
        %v3202 = vpack.c.b16 %v2946, %v2946
        %v3203 = vpack.c.b16 %v2947, %v2947
        %v3204 = vpack.c.b16 %v2948, %v2948
        %v3205 = vpack.c.b16 %v2949, %v2949
        %v3206 = vpack.c.b16 %v2950, %v2950
        %v3207 = vpack.c.b16 %v2951, %v2951
        %v3208 = vpack.c.b16 %v2952, %v2952
        %v3209 = vpack.c.b16 %v2953, %v2953
        %v3210 = vpack.c.b16 %v2954, %v2954
        %v3211 = vpack.c.b16 %v2955, %v2955
        %v3212 = vpack.c.b16 %v2956, %v2956
        %v3213 = vpack.c.b16 %v2957, %v2957
        %v3214 = vpack.c.b16 %v2958, %v2958
        %v3215 = vpack.c.b16 %v2959, %v2959
        %v3216 = vpack.c.b16 %v2960, %v2960
        %v3217 = vpack.c.b16 %v2961, %v2961
        %v3218 = vpack.c.b16 %v2962, %v2962
        %v3219 = vpack.c.b16 %v2963, %v2963
        %v3220 = vpack.c.b16 %v2964, %v2964
        %v3221 = vpack.c.b16 %v2965, %v2965
        %v3222 = vpack.c.b16 %v2966, %v2966
        %v3223 = vpack.c.b16 %v2967, %v2967
        %v3224 = vpack.c.b16 %v2968, %v2968
        %v3225 = vpack.c.b16 %v2969, %v2969
        %v3226 = vpack.c.b16 %v2970, %v2970
        %v3227 = vpack.c.b16 %v2971, %v2971
        %v3228 = vpack.c.b16 %v2972, %v2972
        %v3229 = vpack.c.b16 %v2973, %v2973
        %v3230 = vpack.c.b16 %v2974, %v2974
        %v3231 = vpack.c.b16 %v2975, %v2975
        %v3232 = vpack.c.b16 %v2976, %v2976
        %v3233 = vpack.c.b16 %v2977, %v2977
        %v3234 = vpack.c.b16 %v2978, %v2978
        %v3235 = vpack.c.b16 %v2979, %v2979
        %v3236 = vpack.c.b16 %v2980, %v2980
        %v3237 = vpack.c.b16 %v2981, %v2981
        %v3238 = vpack.c.b16 %v2982, %v2982
        %v3239 = vpack.c.b16 %v2983, %v2983
        %v3240 = vpack.c.b16 %v2984, %v2984
        %v3241 = vpack.c.b16 %v2985, %v2985
        %v3242 = vpack.c.b16 %v2986, %v2986
        %v3243 = vpack.c.b16 %v2987, %v2987
        %v3244 = vpack.c.b16 %v2988, %v2988
        %v3245 = vpack.c.b16 %v2989, %v2989
        %v3246 = vpack.c.b16 %v2990, %v2990
        %v3247 = vpack.c.b16 %v2991, %v2991
        %v3248 = vpack.c.b16 %v2992, %v2992
        %v3249 = vpack.c.b16 %v2993, %v2993
        %v3250 = vpack.c.b16 %v2994, %v2994
        %v3251 = vpack.c.b16 %v2995, %v2995
        %v3252 = vpack.c.b16 %v2996, %v2996
        %v3253 = vpack.c.b16 %v2997, %v2997
        %v3254 = vpack.c.b16 %v2998, %v2998
        %v3255 = vpack.c.b16 %v2999, %v2999
        %v3256 = vpack.c.b16 %v3000, %v3000
        %3513 = vst [vmem:[%s137] sm:$0xf] %v3001
        %3514 = vst [vmem:[%s137 + $0x4] sm:$0xf] %v3002
        %3515 = vst [vmem:[%s137 + $0x8] sm:$0xf] %v3003
        %3516 = vst [vmem:[%s137 + $0xc] sm:$0xf] %v3004
        %3517 = vst [vmem:[%s137 + $0x10] sm:$0xf] %v3005
        %3518 = vst [vmem:[%s137 + $0x14] sm:$0xf] %v3006
        %3519 = vst [vmem:[%s137 + $0x18] sm:$0xf] %v3007
        %3520 = vst [vmem:[%s137 + $0x1c] sm:$0xf] %v3008
        %3521 = vst [vmem:[%s137 + $0x20] sm:$0xf] %v3009
        %3522 = vst [vmem:[%s137 + $0x24] sm:$0xf] %v3010
        %3523 = vst [vmem:[%s137 + $0x28] sm:$0xf] %v3011
        %3524 = vst [vmem:[%s137 + $0x2c] sm:$0xf] %v3012
        %3525 = vst [vmem:[%s137 + $0x30] sm:$0xf] %v3013
        %3526 = vst [vmem:[%s137 + $0x34] sm:$0xf] %v3014
        %3527 = vst [vmem:[%s137 + $0x38] sm:$0xf] %v3015
        %3528 = vst [vmem:[%s137 + $0x3c] sm:$0xf] %v3016
        %3529 = vst [vmem:[%s137 + $0x40] sm:$0xf] %v3017
        %3530 = vst [vmem:[%s137 + $0x44] sm:$0xf] %v3018
        %3531 = vst [vmem:[%s137 + $0x48] sm:$0xf] %v3019
        %3532 = vst [vmem:[%s137 + $0x4c] sm:$0xf] %v3020
        %3533 = vst [vmem:[%s137 + $0x50] sm:$0xf] %v3021
        %3534 = vst [vmem:[%s137 + $0x54] sm:$0xf] %v3022
        %3535 = vst [vmem:[%s137 + $0x58] sm:$0xf] %v3023
        %3536 = vst [vmem:[%s137 + $0x5c] sm:$0xf] %v3024
        %3537 = vst [vmem:[%s137 + $0x60] sm:$0xf] %v3025
        %3538 = vst [vmem:[%s137 + $0x64] sm:$0xf] %v3026
        %3539 = vst [vmem:[%s137 + $0x68] sm:$0xf] %v3027
        %3540 = vst [vmem:[%s137 + $0x6c] sm:$0xf] %v3028
        %3541 = vst [vmem:[%s137 + $0x70] sm:$0xf] %v3029
        %3542 = vst [vmem:[%s137 + $0x74] sm:$0xf] %v3030
        %3543 = vst [vmem:[%s137 + $0x78] sm:$0xf] %v3031
        %3544 = vst [vmem:[%s137 + $0x7c] sm:$0xf] %v3032
        %3545 = vst [vmem:[%s137 + $0x80] sm:$0xf] %v3033
        %3546 = vst [vmem:[%s137 + $0x84] sm:$0xf] %v3034
        %3547 = vst [vmem:[%s137 + $0x88] sm:$0xf] %v3035
        %3548 = vst [vmem:[%s137 + $0x8c] sm:$0xf] %v3036
        %3549 = vst [vmem:[%s137 + $0x90] sm:$0xf] %v3037
        %3550 = vst [vmem:[%s137 + $0x94] sm:$0xf] %v3038
        %3551 = vst [vmem:[%s137 + $0x98] sm:$0xf] %v3039
        %3552 = vst [vmem:[%s137 + $0x9c] sm:$0xf] %v3040
        %3553 = vst [vmem:[%s137 + $0xa0] sm:$0xf] %v3041
        %3554 = vst [vmem:[%s137 + $0xa4] sm:$0xf] %v3042
        %3555 = vst [vmem:[%s137 + $0xa8] sm:$0xf] %v3043
        %3556 = vst [vmem:[%s137 + $0xac] sm:$0xf] %v3044
        %3557 = vst [vmem:[%s137 + $0xb0] sm:$0xf] %v3045
        %3558 = vst [vmem:[%s137 + $0xb4] sm:$0xf] %v3046
        %3559 = vst [vmem:[%s137 + $0xb8] sm:$0xf] %v3047
        %3560 = vst [vmem:[%s137 + $0xbc] sm:$0xf] %v3048
        %3561 = vst [vmem:[%s137 + $0xc0] sm:$0xf] %v3049
        %3562 = vst [vmem:[%s137 + $0xc4] sm:$0xf] %v3050
        %3563 = vst [vmem:[%s137 + $0xc8] sm:$0xf] %v3051
        %3564 = vst [vmem:[%s137 + $0xcc] sm:$0xf] %v3052
        %3565 = vst [vmem:[%s137 + $0xd0] sm:$0xf] %v3053
        %3566 = vst [vmem:[%s137 + $0xd4] sm:$0xf] %v3054
        %3567 = vst [vmem:[%s137 + $0xd8] sm:$0xf] %v3055
        %3568 = vst [vmem:[%s137 + $0xdc] sm:$0xf] %v3056
        %3569 = vst [vmem:[%s137 + $0xe0] sm:$0xf] %v3057
        %3570 = vst [vmem:[%s137 + $0xe4] sm:$0xf] %v3058
        %3571 = vst [vmem:[%s137 + $0xe8] sm:$0xf] %v3059
        %3572 = vst [vmem:[%s137 + $0xec] sm:$0xf] %v3060
        %3573 = vst [vmem:[%s137 + $0xf0] sm:$0xf] %v3061
        %3574 = vst [vmem:[%s137 + $0xf4] sm:$0xf] %v3062
        %3575 = vst [vmem:[%s137 + $0xf8] sm:$0xf] %v3063
        %3576 = vst [vmem:[%s137 + $0xfc] sm:$0xf] %v3064
        %3577 = vst [vmem:[%s137 + $0x100] sm:$0xf] %v3065
        %3578 = vst [vmem:[%s137 + $0x104] sm:$0xf] %v3066
        %3579 = vst [vmem:[%s137 + $0x108] sm:$0xf] %v3067
        %3580 = vst [vmem:[%s137 + $0x10c] sm:$0xf] %v3068
        %3581 = vst [vmem:[%s137 + $0x110] sm:$0xf] %v3069
        %3582 = vst [vmem:[%s137 + $0x114] sm:$0xf] %v3070
        %3583 = vst [vmem:[%s137 + $0x118] sm:$0xf] %v3071
        %3584 = vst [vmem:[%s137 + $0x11c] sm:$0xf] %v3072
        %3585 = vst [vmem:[%s137 + $0x120] sm:$0xf] %v3073
        %3586 = vst [vmem:[%s137 + $0x124] sm:$0xf] %v3074
        %3587 = vst [vmem:[%s137 + $0x128] sm:$0xf] %v3075
        %3588 = vst [vmem:[%s137 + $0x12c] sm:$0xf] %v3076
        %3589 = vst [vmem:[%s137 + $0x130] sm:$0xf] %v3077
        %3590 = vst [vmem:[%s137 + $0x134] sm:$0xf] %v3078
        %3591 = vst [vmem:[%s137 + $0x138] sm:$0xf] %v3079
        %3592 = vst [vmem:[%s137 + $0x13c] sm:$0xf] %v3080
        %3593 = vst [vmem:[%s137 + $0x140] sm:$0xf] %v3081
        %3594 = vst [vmem:[%s137 + $0x144] sm:$0xf] %v3082
        %3595 = vst [vmem:[%s137 + $0x148] sm:$0xf] %v3083
        %3596 = vst [vmem:[%s137 + $0x14c] sm:$0xf] %v3084
        %3597 = vst [vmem:[%s137 + $0x150] sm:$0xf] %v3085
        %3598 = vst [vmem:[%s137 + $0x154] sm:$0xf] %v3086
        %3599 = vst [vmem:[%s137 + $0x158] sm:$0xf] %v3087
        %3600 = vst [vmem:[%s137 + $0x15c] sm:$0xf] %v3088
        %3601 = vst [vmem:[%s137 + $0x160] sm:$0xf] %v3089
        %3602 = vst [vmem:[%s137 + $0x164] sm:$0xf] %v3090
        %3603 = vst [vmem:[%s137 + $0x168] sm:$0xf] %v3091
        %3604 = vst [vmem:[%s137 + $0x16c] sm:$0xf] %v3092
        %3605 = vst [vmem:[%s137 + $0x170] sm:$0xf] %v3093
        %3606 = vst [vmem:[%s137 + $0x174] sm:$0xf] %v3094
        %3607 = vst [vmem:[%s137 + $0x178] sm:$0xf] %v3095
        %3608 = vst [vmem:[%s137 + $0x17c] sm:$0xf] %v3096
        %3609 = vst [vmem:[%s137 + $0x180] sm:$0xf] %v3097
        %3610 = vst [vmem:[%s137 + $0x184] sm:$0xf] %v3098
        %3611 = vst [vmem:[%s137 + $0x188] sm:$0xf] %v3099
        %3612 = vst [vmem:[%s137 + $0x18c] sm:$0xf] %v3100
        %3613 = vst [vmem:[%s137 + $0x190] sm:$0xf] %v3101
        %3614 = vst [vmem:[%s137 + $0x194] sm:$0xf] %v3102
        %3615 = vst [vmem:[%s137 + $0x198] sm:$0xf] %v3103
        %3616 = vst [vmem:[%s137 + $0x19c] sm:$0xf] %v3104
        %3617 = vst [vmem:[%s137 + $0x1a0] sm:$0xf] %v3105
        %3618 = vst [vmem:[%s137 + $0x1a4] sm:$0xf] %v3106
        %3619 = vst [vmem:[%s137 + $0x1a8] sm:$0xf] %v3107
        %3620 = vst [vmem:[%s137 + $0x1ac] sm:$0xf] %v3108
        %3621 = vst [vmem:[%s137 + $0x1b0] sm:$0xf] %v3109
        %3622 = vst [vmem:[%s137 + $0x1b4] sm:$0xf] %v3110
        %3623 = vst [vmem:[%s137 + $0x1b8] sm:$0xf] %v3111
        %3624 = vst [vmem:[%s137 + $0x1bc] sm:$0xf] %v3112
        %3625 = vst [vmem:[%s137 + $0x1c0] sm:$0xf] %v3113
        %3626 = vst [vmem:[%s137 + $0x1c4] sm:$0xf] %v3114
        %3627 = vst [vmem:[%s137 + $0x1c8] sm:$0xf] %v3115
        %3628 = vst [vmem:[%s137 + $0x1cc] sm:$0xf] %v3116
        %3629 = vst [vmem:[%s137 + $0x1d0] sm:$0xf] %v3117
        %3630 = vst [vmem:[%s137 + $0x1d4] sm:$0xf] %v3118
        %3631 = vst [vmem:[%s137 + $0x1d8] sm:$0xf] %v3119
        %3632 = vst [vmem:[%s137 + $0x1dc] sm:$0xf] %v3120
        %3633 = vst [vmem:[%s137 + $0x1e0] sm:$0xf] %v3121
        %3634 = vst [vmem:[%s137 + $0x1e4] sm:$0xf] %v3122
        %3635 = vst [vmem:[%s137 + $0x1e8] sm:$0xf] %v3123
        %3636 = vst [vmem:[%s137 + $0x1ec] sm:$0xf] %v3124
        %3637 = vst [vmem:[%s137 + $0x1f0] sm:$0xf] %v3125
        %3638 = vst [vmem:[%s137 + $0x1f4] sm:$0xf] %v3126
        %3639 = vst [vmem:[%s137 + $0x1f8] sm:$0xf] %v3127
        %3640 = vst [vmem:[%s137 + $0x1fc] sm:$0xf] %v3128
        %3641 = vst [vmem:[%s137 + $0x200] sm:$0xf] %v3129
        %3642 = vst [vmem:[%s137 + $0x204] sm:$0xf] %v3130
        %3643 = vst [vmem:[%s137 + $0x208] sm:$0xf] %v3131
        %3644 = vst [vmem:[%s137 + $0x20c] sm:$0xf] %v3132
        %3645 = vst [vmem:[%s137 + $0x210] sm:$0xf] %v3133
        %3646 = vst [vmem:[%s137 + $0x214] sm:$0xf] %v3134
        %3647 = vst [vmem:[%s137 + $0x218] sm:$0xf] %v3135
        %3648 = vst [vmem:[%s137 + $0x21c] sm:$0xf] %v3136
        %3649 = vst [vmem:[%s137 + $0x220] sm:$0xf] %v3137
        %3650 = vst [vmem:[%s137 + $0x224] sm:$0xf] %v3138
        %3651 = vst [vmem:[%s137 + $0x228] sm:$0xf] %v3139
        %3652 = vst [vmem:[%s137 + $0x22c] sm:$0xf] %v3140
        %3653 = vst [vmem:[%s137 + $0x230] sm:$0xf] %v3141
        %3654 = vst [vmem:[%s137 + $0x234] sm:$0xf] %v3142
        %3655 = vst [vmem:[%s137 + $0x238] sm:$0xf] %v3143
        %3656 = vst [vmem:[%s137 + $0x23c] sm:$0xf] %v3144
        %3657 = vst [vmem:[%s137 + $0x240] sm:$0xf] %v3145
        %3658 = vst [vmem:[%s137 + $0x244] sm:$0xf] %v3146
        %3659 = vst [vmem:[%s137 + $0x248] sm:$0xf] %v3147
        %3660 = vst [vmem:[%s137 + $0x24c] sm:$0xf] %v3148
        %3661 = vst [vmem:[%s137 + $0x250] sm:$0xf] %v3149
        %3662 = vst [vmem:[%s137 + $0x254] sm:$0xf] %v3150
        %3663 = vst [vmem:[%s137 + $0x258] sm:$0xf] %v3151
        %3664 = vst [vmem:[%s137 + $0x25c] sm:$0xf] %v3152
        %3665 = vst [vmem:[%s137 + $0x260] sm:$0xf] %v3153
        %3666 = vst [vmem:[%s137 + $0x264] sm:$0xf] %v3154
        %3667 = vst [vmem:[%s137 + $0x268] sm:$0xf] %v3155
        %3668 = vst [vmem:[%s137 + $0x26c] sm:$0xf] %v3156
        %3669 = vst [vmem:[%s137 + $0x270] sm:$0xf] %v3157
        %3670 = vst [vmem:[%s137 + $0x274] sm:$0xf] %v3158
        %3671 = vst [vmem:[%s137 + $0x278] sm:$0xf] %v3159
        %3672 = vst [vmem:[%s137 + $0x27c] sm:$0xf] %v3160
        %3673 = vst [vmem:[%s137 + $0x280] sm:$0xf] %v3161
        %3674 = vst [vmem:[%s137 + $0x284] sm:$0xf] %v3162
        %3675 = vst [vmem:[%s137 + $0x288] sm:$0xf] %v3163
        %3676 = vst [vmem:[%s137 + $0x28c] sm:$0xf] %v3164
        %3677 = vst [vmem:[%s137 + $0x290] sm:$0xf] %v3165
        %3678 = vst [vmem:[%s137 + $0x294] sm:$0xf] %v3166
        %3679 = vst [vmem:[%s137 + $0x298] sm:$0xf] %v3167
        %3680 = vst [vmem:[%s137 + $0x29c] sm:$0xf] %v3168
        %3681 = vst [vmem:[%s137 + $0x2a0] sm:$0xf] %v3169
        %3682 = vst [vmem:[%s137 + $0x2a4] sm:$0xf] %v3170
        %3683 = vst [vmem:[%s137 + $0x2a8] sm:$0xf] %v3171
        %3684 = vst [vmem:[%s137 + $0x2ac] sm:$0xf] %v3172
        %3685 = vst [vmem:[%s137 + $0x2b0] sm:$0xf] %v3173
        %3686 = vst [vmem:[%s137 + $0x2b4] sm:$0xf] %v3174
        %3687 = vst [vmem:[%s137 + $0x2b8] sm:$0xf] %v3175
        %3688 = vst [vmem:[%s137 + $0x2bc] sm:$0xf] %v3176
        %3689 = vst [vmem:[%s137 + $0x2c0] sm:$0xf] %v3177
        %3690 = vst [vmem:[%s137 + $0x2c4] sm:$0xf] %v3178
        %3691 = vst [vmem:[%s137 + $0x2c8] sm:$0xf] %v3179
        %3692 = vst [vmem:[%s137 + $0x2cc] sm:$0xf] %v3180
        %3693 = vst [vmem:[%s137 + $0x2d0] sm:$0xf] %v3181
        %3694 = vst [vmem:[%s137 + $0x2d4] sm:$0xf] %v3182
        %3695 = vst [vmem:[%s137 + $0x2d8] sm:$0xf] %v3183
        %3696 = vst [vmem:[%s137 + $0x2dc] sm:$0xf] %v3184
        %3697 = vst [vmem:[%s137 + $0x2e0] sm:$0xf] %v3185
        %3698 = vst [vmem:[%s137 + $0x2e4] sm:$0xf] %v3186
        %3699 = vst [vmem:[%s137 + $0x2e8] sm:$0xf] %v3187
        %3700 = vst [vmem:[%s137 + $0x2ec] sm:$0xf] %v3188
        %3701 = vst [vmem:[%s137 + $0x2f0] sm:$0xf] %v3189
        %3702 = vst [vmem:[%s137 + $0x2f4] sm:$0xf] %v3190
        %3703 = vst [vmem:[%s137 + $0x2f8] sm:$0xf] %v3191
        %3704 = vst [vmem:[%s137 + $0x2fc] sm:$0xf] %v3192
        %3705 = vst [vmem:[%s137 + $0x300] sm:$0xf] %v3193
        %3706 = vst [vmem:[%s137 + $0x304] sm:$0xf] %v3194
        %3707 = vst [vmem:[%s137 + $0x308] sm:$0xf] %v3195
        %3708 = vst [vmem:[%s137 + $0x30c] sm:$0xf] %v3196
        %3709 = vst [vmem:[%s137 + $0x310] sm:$0xf] %v3197
        %3710 = vst [vmem:[%s137 + $0x314] sm:$0xf] %v3198
        %3711 = vst [vmem:[%s137 + $0x318] sm:$0xf] %v3199
        %3712 = vst [vmem:[%s137 + $0x31c] sm:$0xf] %v3200
        %3713 = vst [vmem:[%s137 + $0x320] sm:$0xf] %v3201
        %3714 = vst [vmem:[%s137 + $0x324] sm:$0xf] %v3202
        %3715 = vst [vmem:[%s137 + $0x328] sm:$0xf] %v3203
        %3716 = vst [vmem:[%s137 + $0x32c] sm:$0xf] %v3204
        %3717 = vst [vmem:[%s137 + $0x330] sm:$0xf] %v3205
        %3718 = vst [vmem:[%s137 + $0x334] sm:$0xf] %v3206
        %3719 = vst [vmem:[%s137 + $0x338] sm:$0xf] %v3207
        %3720 = vst [vmem:[%s137 + $0x33c] sm:$0xf] %v3208
        %3721 = vst [vmem:[%s137 + $0x340] sm:$0xf] %v3209
        %3722 = vst [vmem:[%s137 + $0x344] sm:$0xf] %v3210
        %3723 = vst [vmem:[%s137 + $0x348] sm:$0xf] %v3211
        %3724 = vst [vmem:[%s137 + $0x34c] sm:$0xf] %v3212
        %3725 = vst [vmem:[%s137 + $0x350] sm:$0xf] %v3213
        %3726 = vst [vmem:[%s137 + $0x354] sm:$0xf] %v3214
        %3727 = vst [vmem:[%s137 + $0x358] sm:$0xf] %v3215
        %3728 = vst [vmem:[%s137 + $0x35c] sm:$0xf] %v3216
        %3729 = vst [vmem:[%s137 + $0x360] sm:$0xf] %v3217
        %3730 = vst [vmem:[%s137 + $0x364] sm:$0xf] %v3218
        %3731 = vst [vmem:[%s137 + $0x368] sm:$0xf] %v3219
        %3732 = vst [vmem:[%s137 + $0x36c] sm:$0xf] %v3220
        %3733 = vst [vmem:[%s137 + $0x370] sm:$0xf] %v3221
        %3734 = vst [vmem:[%s137 + $0x374] sm:$0xf] %v3222
        %3735 = vst [vmem:[%s137 + $0x378] sm:$0xf] %v3223
        %3736 = vst [vmem:[%s137 + $0x37c] sm:$0xf] %v3224
        %3737 = vst [vmem:[%s137 + $0x380] sm:$0xf] %v3225
        %3738 = vst [vmem:[%s137 + $0x384] sm:$0xf] %v3226
        %3739 = vst [vmem:[%s137 + $0x388] sm:$0xf] %v3227
        %3740 = vst [vmem:[%s137 + $0x38c] sm:$0xf] %v3228
        %3741 = vst [vmem:[%s137 + $0x390] sm:$0xf] %v3229
        %3742 = vst [vmem:[%s137 + $0x394] sm:$0xf] %v3230
        %3743 = vst [vmem:[%s137 + $0x398] sm:$0xf] %v3231
        %3744 = vst [vmem:[%s137 + $0x39c] sm:$0xf] %v3232
        %3745 = vst [vmem:[%s137 + $0x3a0] sm:$0xf] %v3233
        %3746 = vst [vmem:[%s137 + $0x3a4] sm:$0xf] %v3234
        %3747 = vst [vmem:[%s137 + $0x3a8] sm:$0xf] %v3235
        %3748 = vst [vmem:[%s137 + $0x3ac] sm:$0xf] %v3236
        %3749 = vst [vmem:[%s137 + $0x3b0] sm:$0xf] %v3237
        %3750 = vst [vmem:[%s137 + $0x3b4] sm:$0xf] %v3238
        %3751 = vst [vmem:[%s137 + $0x3b8] sm:$0xf] %v3239
        %3752 = vst [vmem:[%s137 + $0x3bc] sm:$0xf] %v3240
        %3753 = vst [vmem:[%s137 + $0x3c0] sm:$0xf] %v3241
        %3754 = vst [vmem:[%s137 + $0x3c4] sm:$0xf] %v3242
        %3755 = vst [vmem:[%s137 + $0x3c8] sm:$0xf] %v3243
        %3756 = vst [vmem:[%s137 + $0x3cc] sm:$0xf] %v3244
        %3757 = vst [vmem:[%s137 + $0x3d0] sm:$0xf] %v3245
        %3758 = vst [vmem:[%s137 + $0x3d4] sm:$0xf] %v3246
        %3759 = vst [vmem:[%s137 + $0x3d8] sm:$0xf] %v3247
        %3760 = vst [vmem:[%s137 + $0x3dc] sm:$0xf] %v3248
        %3761 = vst [vmem:[%s137 + $0x3e0] sm:$0xf] %v3249
        %3762 = vst [vmem:[%s137 + $0x3e4] sm:$0xf] %v3250
        %3763 = vst [vmem:[%s137 + $0x3e8] sm:$0xf] %v3251
        %3764 = vst [vmem:[%s137 + $0x3ec] sm:$0xf] %v3252
        %3765 = vst [vmem:[%s137 + $0x3f0] sm:$0xf] %v3253
        %3766 = vst [vmem:[%s137 + $0x3f4] sm:$0xf] %v3254
        %3767 = vst [vmem:[%s137 + $0x3f8] sm:$0xf] %v3255
        %3768 = vst [vmem:[%s137 + $0x3fc] sm:$0xf] %v3256
        %s3769 = sand.u32 %s71, 1
        %s3770 = scalar_lea.sflag [#allocation3], %s3769
        %s3771 = sand.u32 %s71, 1
        %s3772 = smul.addr %s3771, 1024
        %s3773 = scalar_lea.vmem [#allocation2], %s3772
        // Predicated region
        $region29: #{generator_forward.3} parent=27 // pred_check
          %p3774 = pneg %p81
        $region30: #{generator_forward.3} parent=27 // pred_check_branch
          %3776 = sbr.rel (%p3774) target = $region32
        $region31: #{generator_forward.3} parent=27 // pred_region
          %s3777 = smul.u32 256, %s16
          %s3779 = ssub.s32 16384, 16384
          %3780 = vsyncadd %s3770, %s3779
          %s3781 = smul.addr %s3777, 64
          %s3782 = scalar_lea.hbm %s2, %s3781
          %s3783 = sshll.u32 %s3773, 4
          %s3784 = int_to_ptr.vmem [resolvable:$true] %s3783
          %3789 = dma.vmem_to_hbm [thread:$0]  %s3784, 16384, %s3782, %s3770, 64, 64, 4
        $region32: #{generator_forward.3} parent=27 // pred_fallthru
          _
      $region28: #{generator_forward.3} parent=5 // pred_fallthru
        _
      %p3790 = scmp.le.s32.totalorder 2, %s11
      // Predicated region
      $region33: #{generator_forward.3} parent=5 // pred_check
        %p3791 = pneg %p3790
      $region34: #{generator_forward.3} parent=5 // pred_check_branch
        %3793 = sbr.rel (%p3791) target = $region36
      $region35: #{generator_forward.3} parent=5 // pred_region
        %s3794 = ssub.s32 %s11, 2
        // Predicated region
        $region37: #{generator_forward.3} parent=35 // pred_check
          %p3795 = pneg %p87
        $region38: #{generator_forward.3} parent=35 // pred_check_branch
          %3797 = sbr.rel (%p3795) target = $region40
        $region39: #{generator_forward.3} parent=35 // pred_region
          %s3798 = sand.u32 %s72, 1
          %s3799 = scalar_lea.sflag [#allocation3], %s3798
          %s3800 = sand.u32 %s72, 1
          %s3801 = smul.addr %s3800, 1024
          %s3802 = scalar_lea.vmem [#allocation2], %s3801
          %3803 = dma.done %s3799, 16384
        $region40: #{generator_forward.3} parent=35 // pred_fallthru
          _
      $region36: #{generator_forward.3} parent=5 // pred_fallthru
        _
    $region6: #{generator_forward.3} parent=1 // loop_footer
      %s15 = sadd.s32 1, %s11
    $region7: #{generator_forward.3} parent=1 // loop_footer_branch
      %10 = sbr.rel target = $region3
    $region8: #{generator_forward.3} parent=1 // loop_exit
      _
    %3804 = vsyncpa [#allocation3], 1
    %s3805 = scalar_lea.sflag [#allocation3], 1
    %3806 = vsyncpa %s3805, 1

</llo_original>
